<compile_context>
chip_gen: v6e
topology: v6e:2x2x1
jax: 0.10.0
libtpu: 0.0.40
codegen_flags: <defaults>
</compile_context>

<pallas_src>
import functools
import math

import numpy as np

import jax
import jax.numpy as jnp
from jax.experimental import pallas as pl
from jax.experimental.pallas import tpu as pltpu

LATENT_DIM = 16
IN_DIM = 784
HID_DIM = 400                 # logical hidden width (nn.Linear(784, 400))
HID_PAD = 512                 # padded to 4x128 lanes for clean MXU tiles
TB_MAX = 256                  # batch-tile cap (keeps >= 2 tiles for B >= 512)
RECON_DTYPE = jnp.bfloat16    # bf16 output halves the dominant HBM stream


def _round_up(n, m):
    return (n + m - 1) // m * m


def _pick_batch_tile(batch):
    """Batch-tile rows: multiple of 16 (bf16 sublane tile of the recon output),
    capped at TB_MAX and at ~ceil(B/2) so batches >= 32 produce at least two
    grid steps ("parallel" axis -> both TensorCores on v7x, plus something for
    the double-buffered DMAs to overlap with)."""
    half = _round_up(max(-(-batch // 2), 16), 16)
    return min(TB_MAX, half)


def _vae_kernel(x_ref, eps_ref,
                w1_ref, b1_ref, w2_ref, b2_ref, w3_ref, b3_ref, w4_ref, b4_ref,
                recon_ref, mulv_ref, *, latent_dim):
    # ---- encoder: Linear(784, 512pad) -> ReLU  (bf16 MXU, f32 accumulation) ----
    x = x_ref[...].astype(jnp.bfloat16)              # in-kernel cast (VPU, hidden under MXU)
    h1 = jnp.dot(x, w1_ref[...], preferred_element_type=jnp.float32) + b1_ref[...]
    h1 = jnp.maximum(h1, 0.0)                        # (TB, 512) f32

    # ---- encoder head: single fused (512, 32) matmul -> [mu | logvar] ----
    h2 = jnp.dot(h1.astype(jnp.bfloat16), w2_ref[...],
                 preferred_element_type=jnp.float32) + b2_ref[...]   # (TB, 32) f32
    mulv_ref[...] = h2                               # written straight out, no concat

    # ---- reparameterize: z = mu + eps * exp(0.5 * logvar) ----
    mu = h2[:, :latent_dim]
    logvar = h2[:, latent_dim:]
    z = mu + eps_ref[...] * jnp.exp(0.5 * logvar)    # (TB, 16) f32

    # ---- decoder: Linear(16, 512pad) -> ReLU -> Linear(512pad, 784) -> Sigmoid ----
    d1 = jnp.dot(z.astype(jnp.bfloat16), w3_ref[...],
                 preferred_element_type=jnp.float32) + b3_ref[...]
    d1 = jnp.maximum(d1, 0.0)                        # (TB, 512) f32
    logits = jnp.dot(d1.astype(jnp.bfloat16), w4_ref[...],
                     preferred_element_type=jnp.float32) + b4_ref[...]
    recon_ref[...] = jax.nn.sigmoid(logits).astype(recon_ref.dtype)


@functools.partial(jax.jit, static_argnames=("latent_dim",))
def vae_forward(x, eps, kernel_params, latent_dim=LATENT_DIM):
    """Runs VAE.forward. x: (B, 1, 28, 28) or any shape with 784 trailing elems."""
    w1, b1, w2, b2, w3, b3, w4, b4 = kernel_params
    xf = x.reshape(-1, IN_DIM)                       # == x.view(-1, 784); free reshape
    if xf.dtype != jnp.float32:
        xf = xf.astype(jnp.float32)
    eps = eps.astype(jnp.float32)
    B = xf.shape[0]

    tb = _pick_batch_tile(B)
    grid = (pl.cdiv(B, tb),)                         # ragged last tile handled by Pallas

    weights = (w1, b1, w2, b2, w3, b3, w4, b4)

    def row_spec(cols):
        # Optional v6e knob: pipeline_mode=pl.Buffered(3) on x/recon specs.
        return pl.BlockSpec((tb, cols), lambda i: (i, 0))     # tiled over batch

    def resident_spec(a):
        return pl.BlockSpec(a.shape, lambda i: (0, 0))        # stays in VMEM

    in_specs = [row_spec(IN_DIM), row_spec(latent_dim)] + [resident_spec(a) for a in weights]
    out_specs = (row_spec(IN_DIM), row_spec(2 * latent_dim))
    out_shapes = (
        jax.ShapeDtypeStruct((B, IN_DIM), RECON_DTYPE),           # reconstruction
        jax.ShapeDtypeStruct((B, 2 * latent_dim), jnp.float32),   # [mu | logvar]
    )

    # VMEM budget: 2x (double buffering) of every block plus headroom for the
    # f32 intermediates (h1/d1/logits) and relayouts.  Stays well inside v7x's
    # 64 MiB physical VMEM (~14 MiB at tb=256).
    block_list = ([((tb, IN_DIM), jnp.float32), ((tb, latent_dim), jnp.float32),
                   ((tb, IN_DIM), RECON_DTYPE), ((tb, 2 * latent_dim), jnp.float32)]
                  + [(a.shape, a.dtype) for a in weights])
    block_bytes = sum(math.prod(s) * np.dtype(d).itemsize for s, d in block_list)
    vmem_limit = int(2 * block_bytes) + (8 << 20)

    weight_bytes = sum(a.size * a.dtype.itemsize for a in weights)
    cost = pl.CostEstimate(
        flops=2 * B * (IN_DIM * HID_PAD + HID_PAD * 2 * latent_dim
                       + latent_dim * HID_PAD + HID_PAD * IN_DIM),
        transcendentals=B * (latent_dim + IN_DIM),
        bytes_accessed=B * (IN_DIM * 4 + latent_dim * 4
                            + IN_DIM * np.dtype(RECON_DTYPE).itemsize
                            + 2 * latent_dim * 4) + weight_bytes,
    )

    recon, mulv = pl.pallas_call(
        functools.partial(_vae_kernel, latent_dim=latent_dim),
        out_shape=out_shapes,
        grid=grid,
        in_specs=in_specs,
        out_specs=out_specs,
        compiler_params=pltpu.CompilerParams(
            dimension_semantics=("parallel",),
            vmem_limit_bytes=vmem_limit,
        ),
        cost_estimate=cost,
    )(xf, eps, *weights)

    mu = mulv[:, :latent_dim]
    logvar = mulv[:, latent_dim:]
    return recon, mu, logvar


def init_params(key, latent_dim=LATENT_DIM):
    """Logical f32 params mirroring nn.Linear defaults (uniform +-1/sqrt(fan_in)).
    Weights stored as (in, out) == transposed PyTorch layout."""
    def linear(k, fan_in, fan_out):
        kw, kb = jax.random.split(k)
        bound = 1.0 / jnp.sqrt(fan_in)
        w = jax.random.uniform(kw, (fan_in, fan_out), jnp.float32, -bound, bound)
        b = jax.random.uniform(kb, (1, fan_out), jnp.float32, -bound, bound)
        return w, b

    k1, k2, k3, k4 = jax.random.split(key, 4)
    w1, b1 = linear(k1, IN_DIM, HID_DIM)                 # encoder[0]
    w2, b2 = linear(k2, HID_DIM, 2 * latent_dim)         # encoder[2]
    w3, b3 = linear(k3, latent_dim, HID_DIM)             # decoder[0]
    w4, b4 = linear(k4, HID_DIM, IN_DIM)                 # decoder[2]
    return (w1, b1, w2, b2, w3, b3, w4, b4)


def prepare_kernel_params(params, latent_dim=LATENT_DIM):
    """Zero-pad hidden 400->512 and cast all MXU-side weights to bf16.  Biases
    stay f32 (they ride the f32 accumulator).  Zero padding keeps the math
    exactly equivalent to the unpadded 400-wide network."""
    del latent_dim
    w1, b1, w2, b2, w3, b3, w4, b4 = params
    ph = HID_PAD - HID_DIM

    w1p = jnp.pad(w1, ((0, 0), (0, ph))).astype(jnp.bfloat16)   # (784, 512) bf16
    b1p = jnp.pad(b1, ((0, 0), (0, ph)))                        # (1, 512)  f32
    w2p = jnp.pad(w2, ((0, ph), (0, 0))).astype(jnp.bfloat16)   # (512, 2L) bf16 [mu|logvar]
    w3p = jnp.pad(w3, ((0, 0), (0, ph))).astype(jnp.bfloat16)   # (L, 512)  bf16
    b3p = jnp.pad(b3, ((0, 0), (0, ph)))                        # (1, 512)  f32
    w4p = jnp.pad(w4, ((0, ph), (0, 0))).astype(jnp.bfloat16)   # (512, 784) bf16
    return (w1p, b1p, w2p, b2, w3p, b3p, w4p, b4)


def vae_forward_ref(x, eps, params, latent_dim=LATENT_DIM):
    """Pure-JAX f32 reference (matches the PyTorch module's forward)."""
    w1, b1, w2, b2, w3, b3, w4, b4 = params
    xf = x.reshape(-1, IN_DIM).astype(jnp.float32)
    h1 = jnp.maximum(xf @ w1 + b1, 0.0)
    h = h1 @ w2 + b2
    mu, logvar = h[:, :latent_dim], h[:, latent_dim:]
    z = mu + eps * jnp.exp(0.5 * logvar)
    d1 = jnp.maximum(z @ w3 + b3, 0.0)
    recon = jax.nn.sigmoid(d1 @ w4 + b4)
    return recon, mu, logvar


if __name__ == "__main__":
    key = jax.random.PRNGKey(0)
    k_param, k_x, k_eps = jax.random.split(key, 3)

    params = init_params(k_param)
    kparams = prepare_kernel_params(params)

    # B=2: single ragged tile.  B=100: two "parallel" grid steps + ragged tail.
    for B in (2, 100):
        kx = jax.random.fold_in(k_x, B)
        ke = jax.random.fold_in(k_eps, B)
        x = jax.random.uniform(kx, (B, 1, 28, 28), jnp.float32)   # MNIST-like NCHW
        # torch.randn_like(std) is stochastic; pass a deterministic eps instead.
        eps = jax.random.normal(ke, (B, LATENT_DIM), jnp.float32)

        recon, mu, logvar = vae_forward(x, eps, kparams)
        jax.block_until_ready((recon, mu, logvar))

        # Sanity check against the pure-JAX f32 reference.  All matmuls run in
        # bf16 (f32 accumulation) and recon is stored in bf16, so tolerance 3e-2.
        r_ref, mu_ref, lv_ref = vae_forward_ref(x, eps, params)
        assert recon.shape == (B, IN_DIM)
        assert mu.shape == (B, LATENT_DIM) and logvar.shape == (B, LATENT_DIM)
        assert jnp.allclose(recon.astype(jnp.float32), r_ref, atol=3e-2)
        assert jnp.allclose(mu, mu_ref, atol=3e-2)
        assert jnp.allclose(logvar, lv_ref, atol=3e-2)

    print("KERNEL_OK")
</pallas_src>

<mosaic_0001>
module attributes {stable_mosaic.version = 11 : i64} {
  func.func @_vae_kernel(%arg0: i32, %arg1: memref<16x784xf32, #tpu.memory_space<vmem>>, %arg2: memref<16x16xf32, #tpu.memory_space<vmem>>, %arg3: memref<784x512xbf16, #tpu.memory_space<vmem>>, %arg4: memref<1x512xf32, #tpu.memory_space<vmem>>, %arg5: memref<512x32xbf16, #tpu.memory_space<vmem>>, %arg6: memref<1x32xf32, #tpu.memory_space<vmem>>, %arg7: memref<16x512xbf16, #tpu.memory_space<vmem>>, %arg8: memref<1x512xf32, #tpu.memory_space<vmem>>, %arg9: memref<512x784xbf16, #tpu.memory_space<vmem>>, %arg10: memref<1x784xf32, #tpu.memory_space<vmem>>, %arg11: memref<16x784xbf16, #tpu.memory_space<vmem>>, %arg12: memref<16x32xf32, #tpu.memory_space<vmem>>) attributes {dimension_semantics = [#tpu.dimension_semantics<parallel>], iteration_bounds = array<i64: 1>, scalar_prefetch = 0 : i64, scratch_operands = 0 : i64, tpu.core_type = #tpu.core_type<tc>, window_params = [{transform_indices = @transform_0, window_bounds = array<i64: 16, 784>}, {transform_indices = @transform_1, window_bounds = array<i64: 16, 16>}, {pipeline_mode = #tpu.pipeline_mode<synchronous>, transform_indices = @transform_2, window_bounds = array<i64: 784, 512>}, {pipeline_mode = #tpu.pipeline_mode<synchronous>, transform_indices = @transform_3, window_bounds = array<i64: 1, 512>}, {pipeline_mode = #tpu.pipeline_mode<synchronous>, transform_indices = @transform_4, window_bounds = array<i64: 512, 32>}, {pipeline_mode = #tpu.pipeline_mode<synchronous>, transform_indices = @transform_5, window_bounds = array<i64: 1, 32>}, {pipeline_mode = #tpu.pipeline_mode<synchronous>, transform_indices = @transform_6, window_bounds = array<i64: 16, 512>}, {pipeline_mode = #tpu.pipeline_mode<synchronous>, transform_indices = @transform_7, window_bounds = array<i64: 1, 512>}, {pipeline_mode = #tpu.pipeline_mode<synchronous>, transform_indices = @transform_8, window_bounds = array<i64: 512, 784>}, {pipeline_mode = #tpu.pipeline_mode<synchronous>, transform_indices = @transform_9, window_bounds = array<i64: 1, 784>}, {transform_indices = @transform_10, window_bounds = array<i64: 16, 784>}, {transform_indices = @transform_11, window_bounds = array<i64: 16, 32>}]} {
    %c0 = arith.constant 0 : index
    %c0_0 = arith.constant 0 : index
    %0 = vector.load %arg1[%c0, %c0_0] : memref<16x784xf32, #tpu.memory_space<vmem>>, vector<16x784xf32>
    %1 = arith.truncf %0 : vector<16x784xf32> to vector<16x784xbf16>
    %c0_1 = arith.constant 0 : index
    %c0_2 = arith.constant 0 : index
    %2 = vector.load %arg3[%c0_1, %c0_2] : memref<784x512xbf16, #tpu.memory_space<vmem>>, vector<784x512xbf16>
    %cst = arith.constant dense<0.000000e+00> : vector<16x512xf32>
    %3 = tpu.matmul %1, %2, %cst {dimension_numbers = #tpu.dot_dimension_numbers<[1], [0], [0], [1], [0, 0, 1, 1], [], []>} : vector<16x784xbf16>, vector<784x512xbf16>, vector<16x512xf32> -> vector<16x512xf32>
    %c0_3 = arith.constant 0 : index
    %c0_4 = arith.constant 0 : index
    %4 = vector.load %arg4[%c0_3, %c0_4] : memref<1x512xf32, #tpu.memory_space<vmem>>, vector<1x512xf32>
    %5 = vector.broadcast %4 : vector<1x512xf32> to vector<16x512xf32>
    %6 = arith.addf %3, %5 : vector<16x512xf32>
    %cst_5 = arith.constant 0.000000e+00 : f32
    %7 = vector.broadcast %cst_5 : f32 to vector<16x512xf32>
    %8 = arith.maximumf %6, %7 : vector<16x512xf32>
    %9 = arith.truncf %8 : vector<16x512xf32> to vector<16x512xbf16>
    %c0_6 = arith.constant 0 : index
    %c0_7 = arith.constant 0 : index
    %10 = vector.load %arg5[%c0_6, %c0_7] : memref<512x32xbf16, #tpu.memory_space<vmem>>, vector<512x32xbf16>
    %cst_8 = arith.constant dense<0.000000e+00> : vector<16x32xf32>
    %11 = tpu.matmul %9, %10, %cst_8 {dimension_numbers = #tpu.dot_dimension_numbers<[1], [0], [0], [1], [0, 0, 1, 1], [], []>} : vector<16x512xbf16>, vector<512x32xbf16>, vector<16x32xf32> -> vector<16x32xf32>
    %c0_9 = arith.constant 0 : index
    %c0_10 = arith.constant 0 : index
    %12 = vector.load %arg6[%c0_9, %c0_10] : memref<1x32xf32, #tpu.memory_space<vmem>>, vector<1x32xf32>
    %13 = vector.broadcast %12 : vector<1x32xf32> to vector<16x32xf32>
    %14 = arith.addf %11, %13 : vector<16x32xf32>
    %c0_11 = arith.constant 0 : index
    %c0_12 = arith.constant 0 : index
    %15 = vector.load %arg12[%c0_11, %c0_12] : memref<16x32xf32, #tpu.memory_space<vmem>>, vector<16x32xf32>
    tpu.vector_store %arg12[%c0_11, %c0_12], %14 {strides = array<i32>} : memref<16x32xf32, #tpu.memory_space<vmem>>, vector<16x32xf32>,
    %16 = vector.extract_strided_slice %14 {offsets = [0, 0], sizes = [16, 16], strides = [1, 1]} : vector<16x32xf32> to vector<16x16xf32>
    %17 = vector.extract_strided_slice %14 {offsets = [0, 16], sizes = [16, 16], strides = [1, 1]} : vector<16x32xf32> to vector<16x16xf32>
    %c0_13 = arith.constant 0 : index
    %c0_14 = arith.constant 0 : index
    %18 = vector.load %arg2[%c0_13, %c0_14] : memref<16x16xf32, #tpu.memory_space<vmem>>, vector<16x16xf32>
    %cst_15 = arith.constant 5.000000e-01 : f32
    %19 = vector.broadcast %cst_15 : f32 to vector<16x16xf32>
    %20 = arith.mulf %19, %17 : vector<16x16xf32>
    %21 = math.exp %20 : vector<16x16xf32>
    %22 = arith.mulf %18, %21 : vector<16x16xf32>
    %23 = arith.addf %16, %22 : vector<16x16xf32>
    %24 = arith.truncf %23 : vector<16x16xf32> to vector<16x16xbf16>
    %c0_16 = arith.constant 0 : index
    %c0_17 = arith.constant 0 : index
    %25 = vector.load %arg7[%c0_16, %c0_17] : memref<16x512xbf16, #tpu.memory_space<vmem>>, vector<16x512xbf16>
    %cst_18 = arith.constant dense<0.000000e+00> : vector<16x512xf32>
    %26 = tpu.matmul %24, %25, %cst_18 {dimension_numbers = #tpu.dot_dimension_numbers<[1], [0], [0], [1], [0, 0, 1, 1], [], []>} : vector<16x16xbf16>, vector<16x512xbf16>, vector<16x512xf32> -> vector<16x512xf32>
    %c0_19 = arith.constant 0 : index
    %c0_20 = arith.constant 0 : index
    %27 = vector.load %arg8[%c0_19, %c0_20] : memref<1x512xf32, #tpu.memory_space<vmem>>, vector<1x512xf32>
    %28 = vector.broadcast %27 : vector<1x512xf32> to vector<16x512xf32>
    %29 = arith.addf %26, %28 : vector<16x512xf32>
    %cst_21 = arith.constant 0.000000e+00 : f32
    %30 = vector.broadcast %cst_21 : f32 to vector<16x512xf32>
    %31 = arith.maximumf %29, %30 : vector<16x512xf32>
    %32 = arith.truncf %31 : vector<16x512xf32> to vector<16x512xbf16>
    %c0_22 = arith.constant 0 : index
    %c0_23 = arith.constant 0 : index
    %33 = vector.load %arg9[%c0_22, %c0_23] : memref<512x784xbf16, #tpu.memory_space<vmem>>, vector<512x784xbf16>
    %cst_24 = arith.constant dense<0.000000e+00> : vector<16x784xf32>
    %34 = tpu.matmul %32, %33, %cst_24 {dimension_numbers = #tpu.dot_dimension_numbers<[1], [0], [0], [1], [0, 0, 1, 1], [], []>} : vector<16x512xbf16>, vector<512x784xbf16>, vector<16x784xf32> -> vector<16x784xf32>
    %c0_25 = arith.constant 0 : index
    %c0_26 = arith.constant 0 : index
    %35 = vector.load %arg10[%c0_25, %c0_26] : memref<1x784xf32, #tpu.memory_space<vmem>>, vector<1x784xf32>
    %36 = vector.broadcast %35 : vector<1x784xf32> to vector<16x784xf32>
    %37 = arith.addf %34, %36 : vector<16x784xf32>
    %38 = arith.negf %37 : vector<16x784xf32>
    %39 = math.exp %38 : vector<16x784xf32>
    %cst_27 = arith.constant 1.000000e+00 : f32
    %40 = vector.broadcast %cst_27 : f32 to vector<16x784xf32>
    %41 = arith.addf %40, %39 : vector<16x784xf32>
    %42 = arith.divf %40, %41 : vector<16x784xf32>
    %43 = arith.truncf %42 : vector<16x784xf32> to vector<16x784xbf16>
    %c0_28 = arith.constant 0 : index
    %c0_29 = arith.constant 0 : index
    %44 = vector.load %arg11[%c0_28, %c0_29] : memref<16x784xbf16, #tpu.memory_space<vmem>>, vector<16x784xbf16>
    tpu.vector_store %arg11[%c0_28, %c0_29], %43 {strides = array<i32>} : memref<16x784xbf16, #tpu.memory_space<vmem>>, vector<16x784xbf16>,
    return
  }
  func.func @transform_0(%arg0: i32) -> (i32, i32) {
    %c0_i32 = arith.constant 0 : i32
    %c0_i32_0 = arith.constant 0 : i32
    return %arg0, %c0_i32 : i32, i32
  }
  func.func @transform_1(%arg0: i32) -> (i32, i32) {
    %c0_i32 = arith.constant 0 : i32
    %c0_i32_0 = arith.constant 0 : i32
    return %arg0, %c0_i32 : i32, i32
  }
  func.func @transform_2(%arg0: i32) -> (i32, i32) {
    %c0_i32 = arith.constant 0 : i32
    %c0_i32_0 = arith.constant 0 : i32
    %c0_i32_1 = arith.constant 0 : i32
    return %c0_i32, %c0_i32_0 : i32, i32
  }
  func.func @transform_3(%arg0: i32) -> (i32, i32) {
    %c0_i32 = arith.constant 0 : i32
    %c0_i32_0 = arith.constant 0 : i32
    %c0_i32_1 = arith.constant 0 : i32
    return %c0_i32, %c0_i32_0 : i32, i32
  }
  func.func @transform_4(%arg0: i32) -> (i32, i32) {
    %c0_i32 = arith.constant 0 : i32
    %c0_i32_0 = arith.constant 0 : i32
    %c0_i32_1 = arith.constant 0 : i32
    return %c0_i32, %c0_i32_0 : i32, i32
  }
  func.func @transform_5(%arg0: i32) -> (i32, i32) {
    %c0_i32 = arith.constant 0 : i32
    %c0_i32_0 = arith.constant 0 : i32
    %c0_i32_1 = arith.constant 0 : i32
    return %c0_i32, %c0_i32_0 : i32, i32
  }
  func.func @transform_6(%arg0: i32) -> (i32, i32) {
    %c0_i32 = arith.constant 0 : i32
    %c0_i32_0 = arith.constant 0 : i32
    %c0_i32_1 = arith.constant 0 : i32
    return %c0_i32, %c0_i32_0 : i32, i32
  }
  func.func @transform_7(%arg0: i32) -> (i32, i32) {
    %c0_i32 = arith.constant 0 : i32
    %c0_i32_0 = arith.constant 0 : i32
    %c0_i32_1 = arith.constant 0 : i32
    return %c0_i32, %c0_i32_0 : i32, i32
  }
  func.func @transform_8(%arg0: i32) -> (i32, i32) {
    %c0_i32 = arith.constant 0 : i32
    %c0_i32_0 = arith.constant 0 : i32
    %c0_i32_1 = arith.constant 0 : i32
    return %c0_i32, %c0_i32_0 : i32, i32
  }
  func.func @transform_9(%arg0: i32) -> (i32, i32) {
    %c0_i32 = arith.constant 0 : i32
    %c0_i32_0 = arith.constant 0 : i32
    %c0_i32_1 = arith.constant 0 : i32
    return %c0_i32, %c0_i32_0 : i32, i32
  }
  func.func @transform_10(%arg0: i32) -> (i32, i32) {
    %c0_i32 = arith.constant 0 : i32
    %c0_i32_0 = arith.constant 0 : i32
    return %arg0, %c0_i32 : i32, i32
  }
  func.func @transform_11(%arg0: i32) -> (i32, i32) {
    %c0_i32 = arith.constant 0 : i32
    %c0_i32_0 = arith.constant 0 : i32
    return %arg0, %c0_i32 : i32, i32
  }
}

</mosaic_0001>

<llo_original>
// kernel: vae_forward.1
$region0: #{vae_forward.1}
  #allocation0 [shape = 'u32[]', space=smem, size = 0x4, offset = 0x4, fixed_abs, tag = 'smem constant byte address 0x4 - core index']
  #allocation1 [shape = 'u32[144,128]{1,0:T(1,128)}', space=vmem, size = 0x12000, scoped, tag = 'internal scratch']
  %s0 = inlined_call_operand.vmem [shape: f32[2,784], index: 0, kind: input, shape index: {}]
  %s1 = inlined_call_operand.vmem [shape: f32[2,16], index: 1, kind: input, shape index: {}]
  %s2 = inlined_call_operand.vmem [shape: bf16[784,512], index: 2, kind: input, shape index: {}]
  %s3 = inlined_call_operand.vmem [shape: f32[1,512], index: 3, kind: input, shape index: {}]
  %s4 = inlined_call_operand.vmem [shape: bf16[512,32], index: 4, kind: input, shape index: {}]
  %s5 = inlined_call_operand.vmem [shape: f32[1,32], index: 5, kind: input, shape index: {}]
  %s6 = inlined_call_operand.vmem [shape: bf16[16,512], index: 6, kind: input, shape index: {}]
  %s7 = inlined_call_operand.vmem [shape: f32[1,512], index: 7, kind: input, shape index: {}]
  %s8 = inlined_call_operand.vmem [shape: bf16[512,784], index: 8, kind: input, shape index: {}]
  %s9 = inlined_call_operand.vmem [shape: f32[1,784], index: 9, kind: input, shape index: {}]
  %s10 = inlined_call_operand.hbm [shape: bf16[2,784], index: 10, kind: output, shape index: {0}]
  %s11 = inlined_call_operand.vmem [shape: f32[2,32], index: 11, kind: output, shape index: {1}]
  %12 = xla_tuple %s10, %s11
  %s13 = sld [smem:[#allocation0]]
  $region88: #{vae_forward.1} parent=0
    _
  %s15 = ssub.s32 1, %s13
  %s16 = scalar_select 0, %s15, %s13
  $region1: #{vae_forward.1} parent=0
    #allocation2 [shape = 'u8[28672]{0}', space=vmem, size = 0x7000, scoped, tag = 'output window, operand 0, single buffered']
    #allocation3 [shape = 's32[1]{0}', space=sflag, size = 0x4, scoped, tag = 'scoped memory for vae_forward.1']
    #allocation4 [shape = 'u8[8192]{0}', space=vmem, size = 0x2000, scoped, tag = 'output window, operand 1, single buffered']
    %17 = vsyncpa [#allocation3], 0
    // Predicated region
    $region2: #{vae_forward.1} parent=1 // pred_check
      _
    $region3: #{vae_forward.1} parent=1 // pred_check_branch
      %19 = sbr.rel (0) target = $region5
    $region4: #{vae_forward.1} parent=1 // pred_region
      _
    $region5: #{vae_forward.1} parent=1 // pred_fallthru
      _
    // Predicated region
    $region6: #{vae_forward.1} parent=1 // pred_check
      _
    $region7: #{vae_forward.1} parent=1 // pred_check_branch
      %21 = sbr.rel (0) target = $region9
    $region8: #{vae_forward.1} parent=1 // pred_region
      _
    $region9: #{vae_forward.1} parent=1 // pred_fallthru
      _
    // Predicated region
    $region10: #{vae_forward.1} parent=1 // pred_check
      _
    $region11: #{vae_forward.1} parent=1 // pred_check_branch
      %23 = sbr.rel (0) target = $region13
    $region12: #{vae_forward.1} parent=1 // pred_region
      _
    $region13: #{vae_forward.1} parent=1 // pred_fallthru
      _
    // Predicated region
    $region14: #{vae_forward.1} parent=1 // pred_check
      _
    $region15: #{vae_forward.1} parent=1 // pred_check_branch
      %25 = sbr.rel (0) target = $region17
    $region16: #{vae_forward.1} parent=1 // pred_region
      _
    $region17: #{vae_forward.1} parent=1 // pred_fallthru
      _
    // Predicated region
    $region18: #{vae_forward.1} parent=1 // pred_check
      _
    $region19: #{vae_forward.1} parent=1 // pred_check_branch
      %27 = sbr.rel (0) target = $region21
    $region20: #{vae_forward.1} parent=1 // pred_region
      _
    $region21: #{vae_forward.1} parent=1 // pred_fallthru
      _
    // Predicated region
    $region22: #{vae_forward.1} parent=1 // pred_check
      _
    $region23: #{vae_forward.1} parent=1 // pred_check_branch
      %29 = sbr.rel (0) target = $region25
    $region24: #{vae_forward.1} parent=1 // pred_region
      _
    $region25: #{vae_forward.1} parent=1 // pred_fallthru
      _
    // Predicated region
    $region26: #{vae_forward.1} parent=1 // pred_check
      _
    $region27: #{vae_forward.1} parent=1 // pred_check_branch
      %31 = sbr.rel (0) target = $region29
    $region28: #{vae_forward.1} parent=1 // pred_region
      _
    $region29: #{vae_forward.1} parent=1 // pred_fallthru
      _
    // Predicated region
    $region30: #{vae_forward.1} parent=1 // pred_check
      _
    $region31: #{vae_forward.1} parent=1 // pred_check_branch
      %33 = sbr.rel (0) target = $region33
    $region32: #{vae_forward.1} parent=1 // pred_region
      _
    $region33: #{vae_forward.1} parent=1 // pred_fallthru
      _
    // Predicated region
    $region34: #{vae_forward.1} parent=1 // pred_check
      _
    $region35: #{vae_forward.1} parent=1 // pred_check_branch
      %35 = sbr.rel (0) target = $region37
    $region36: #{vae_forward.1} parent=1 // pred_region
      _
    $region37: #{vae_forward.1} parent=1 // pred_fallthru
      _
    // Predicated region
    $region38: #{vae_forward.1} parent=1 // pred_check
      _
    $region39: #{vae_forward.1} parent=1 // pred_check_branch
      %37 = sbr.rel (0) target = $region41
    $region40: #{vae_forward.1} parent=1 // pred_region
      _
    $region41: #{vae_forward.1} parent=1 // pred_fallthru
      _
    %v39 = vld [vmem:[%s0] sm:$0xff]
    %v40 = vld [vmem:[%s0 + $0x8] sm:$0x3f]
    %v41 = vld [vmem:[%s0 + $0xe] sm:$0xff]
    %v42 = vld [vmem:[%s0 + $0x16] sm:$0x3f]
    %v43 = vld [vmem:[%s0 + $0x1c] sm:$0xff]
    %v44 = vld [vmem:[%s0 + $0x24] sm:$0x3f]
    %v45 = vld [vmem:[%s0 + $0x2a] sm:$0xff]
    %v46 = vld [vmem:[%s0 + $0x32] sm:$0x3f]
    %v47 = vld [vmem:[%s0 + $0x38] sm:$0xff]
    %v48 = vld [vmem:[%s0 + $0x40] sm:$0x3f]
    %v49 = vld [vmem:[%s0 + $0x46] sm:$0xff]
    %v50 = vld [vmem:[%s0 + $0x4e] sm:$0x3f]
    %v51 = vld [vmem:[%s0 + $0x54] sm:$0xff]
    %v52 = vld [vmem:[%s0 + $0x5c] sm:$0x3f]
    %v53 = vld [vmem:[%s0 + $0x62] sm:$0xff]
    %v54 = vld [vmem:[%s0 + $0x6a] sm:$0x3f]
    %v71 = vcombine.low %v39, %v41
    %v72 = vcombine.high %v39, %v41
    %v73 = vcombine.low %v43, %v45
    %v74 = vcombine.high %v43, %v45
    %v76 = vunpack.c.l.s4 1983009808
    %v77 = vunpack.c.0.s8 %v76
    %v78 = vlaneseq
    %v79 = vshrl.u32 %v78, 7
    %v80 = vsub.s32 %v77, %v79
    %v81 = vrot.slane %v71, %v80
    %v83 = vunpack.c.l.s4 1983009808
    %v84 = vunpack.c.0.s8 %v83
    %v85 = vlaneseq
    %v86 = vshrl.u32 %v85, 7
    %v87 = vsub.s32 %v84, %v86
    %v88 = vrot.slane %v72, %v87
    %v90 = vunpack.c.l.s4 1983009808
    %v91 = vunpack.c.0.s8 %v90
    %v92 = vlaneseq
    %v93 = vshrl.u32 %v92, 7
    %v94 = vsub.s32 %v91, %v93
    %v95 = vrot.slane %v73, %v94
    %v97 = vunpack.c.l.s4 1983009808
    %v98 = vunpack.c.0.s8 %v97
    %v99 = vlaneseq
    %v100 = vshrl.u32 %v99, 7
    %v101 = vsub.s32 %v98, %v100
    %v102 = vrot.slane %v74, %v101
    %v103 = vcombine.low %v81, %v95
    %v104 = vcombine.high %v81, %v95
    %v105 = vcombine.low %v88, %v102
    %v106 = vcombine.high %v88, %v102
    %v107 = vcombine.low %v40, %v42
    %v108 = vcombine.high %v40, %v42
    %v109 = vcombine.low %v44, %v46
    %v110 = vcombine.high %v44, %v46
    %v112 = vunpack.c.l.s4 1983009808
    %v113 = vunpack.c.0.s8 %v112
    %v114 = vlaneseq
    %v115 = vshrl.u32 %v114, 7
    %v116 = vsub.s32 %v113, %v115
    %v117 = vrot.slane %v107, %v116
    %v119 = vunpack.c.l.s4 1983009808
    %v120 = vunpack.c.0.s8 %v119
    %v121 = vlaneseq
    %v122 = vshrl.u32 %v121, 7
    %v123 = vsub.s32 %v120, %v122
    %v124 = vrot.slane %v108, %v123
    %v126 = vunpack.c.l.s4 1983009808
    %v127 = vunpack.c.0.s8 %v126
    %v128 = vlaneseq
    %v129 = vshrl.u32 %v128, 7
    %v130 = vsub.s32 %v127, %v129
    %v131 = vrot.slane %v109, %v130
    %v133 = vunpack.c.l.s4 1983009808
    %v134 = vunpack.c.0.s8 %v133
    %v135 = vlaneseq
    %v136 = vshrl.u32 %v135, 7
    %v137 = vsub.s32 %v134, %v136
    %v138 = vrot.slane %v110, %v137
    %v139 = vcombine.low %v117, %v131
    %v140 = vcombine.high %v117, %v131
    %v141 = vcombine.low %v124, %v138
    %v142 = vcombine.low %v47, %v49
    %v143 = vcombine.high %v47, %v49
    %v144 = vcombine.low %v51, %v53
    %v145 = vcombine.high %v51, %v53
    %v147 = vunpack.c.l.s4 1983009808
    %v148 = vunpack.c.0.s8 %v147
    %v149 = vlaneseq
    %v150 = vshrl.u32 %v149, 7
    %v151 = vsub.s32 %v148, %v150
    %v152 = vrot.slane %v142, %v151
    %v154 = vunpack.c.l.s4 1983009808
    %v155 = vunpack.c.0.s8 %v154
    %v156 = vlaneseq
    %v157 = vshrl.u32 %v156, 7
    %v158 = vsub.s32 %v155, %v157
    %v159 = vrot.slane %v143, %v158
    %v161 = vunpack.c.l.s4 1983009808
    %v162 = vunpack.c.0.s8 %v161
    %v163 = vlaneseq
    %v164 = vshrl.u32 %v163, 7
    %v165 = vsub.s32 %v162, %v164
    %v166 = vrot.slane %v144, %v165
    %v168 = vunpack.c.l.s4 1983009808
    %v169 = vunpack.c.0.s8 %v168
    %v170 = vlaneseq
    %v171 = vshrl.u32 %v170, 7
    %v172 = vsub.s32 %v169, %v171
    %v173 = vrot.slane %v145, %v172
    %v174 = vcombine.low %v152, %v166
    %v175 = vcombine.high %v152, %v166
    %v176 = vcombine.low %v159, %v173
    %v177 = vcombine.high %v159, %v173
    %v178 = vcombine.low %v48, %v50
    %v179 = vcombine.high %v48, %v50
    %v180 = vcombine.low %v52, %v54
    %v181 = vcombine.high %v52, %v54
    %v183 = vunpack.c.l.s4 1983009808
    %v184 = vunpack.c.0.s8 %v183
    %v185 = vlaneseq
    %v186 = vshrl.u32 %v185, 7
    %v187 = vsub.s32 %v184, %v186
    %v188 = vrot.slane %v178, %v187
    %v190 = vunpack.c.l.s4 1983009808
    %v191 = vunpack.c.0.s8 %v190
    %v192 = vlaneseq
    %v193 = vshrl.u32 %v192, 7
    %v194 = vsub.s32 %v191, %v193
    %v195 = vrot.slane %v179, %v194
    %v197 = vunpack.c.l.s4 1983009808
    %v198 = vunpack.c.0.s8 %v197
    %v199 = vlaneseq
    %v200 = vshrl.u32 %v199, 7
    %v201 = vsub.s32 %v198, %v200
    %v202 = vrot.slane %v180, %v201
    %v204 = vunpack.c.l.s4 1983009808
    %v205 = vunpack.c.0.s8 %v204
    %v206 = vlaneseq
    %v207 = vshrl.u32 %v206, 7
    %v208 = vsub.s32 %v205, %v207
    %v209 = vrot.slane %v181, %v208
    %v210 = vcombine.low %v188, %v202
    %v211 = vcombine.high %v188, %v202
    %v212 = vcombine.low %v195, %v209
    %v227 = vpack.c.bf16 %v174, %v103
    %v228 = vpack.c.bf16 %v175, %v104
    %v229 = vpack.c.bf16 %v176, %v105
    %v230 = vpack.c.bf16 %v177, %v106
    %v231 = vpack.c.bf16 %v210, %v139
    %v232 = vpack.c.bf16 %v211, %v140
    %v233 = vpack.c.bf16 %v212, %v141
    %v234 = vld [vmem:[%s2] sm:$0xff]
    %v235 = vld [vmem:[%s2 + $0x8] sm:$0xff]
    %v236 = vld [vmem:[%s2 + $0x10] sm:$0xff]
    %v237 = vld [vmem:[%s2 + $0x18] sm:$0xff]
    %v238 = vld [vmem:[%s2 + $0x20] sm:$0xff]
    %v239 = vld [vmem:[%s2 + $0x28] sm:$0xff]
    %v240 = vld [vmem:[%s2 + $0x30] sm:$0xff]
    %v241 = vld [vmem:[%s2 + $0x38] sm:$0xff]
    %v242 = vld [vmem:[%s2 + $0x40] sm:$0xff]
    %v243 = vld [vmem:[%s2 + $0x48] sm:$0xff]
    %v244 = vld [vmem:[%s2 + $0x50] sm:$0xff]
    %v245 = vld [vmem:[%s2 + $0x58] sm:$0xff]
    %v246 = vld [vmem:[%s2 + $0x60] sm:$0xff]
    %v247 = vld [vmem:[%s2 + $0x68] sm:$0xff]
    %v248 = vld [vmem:[%s2 + $0x70] sm:$0xff]
    %v249 = vld [vmem:[%s2 + $0x78] sm:$0xff]
    %v250 = vld [vmem:[%s2 + $0x80] sm:$0xff]
    %v251 = vld [vmem:[%s2 + $0x88] sm:$0xff]
    %v252 = vld [vmem:[%s2 + $0x90] sm:$0xff]
    %v253 = vld [vmem:[%s2 + $0x98] sm:$0xff]
    %v254 = vld [vmem:[%s2 + $0xa0] sm:$0xff]
    %v255 = vld [vmem:[%s2 + $0xa8] sm:$0xff]
    %v256 = vld [vmem:[%s2 + $0xb0] sm:$0xff]
    %v257 = vld [vmem:[%s2 + $0xb8] sm:$0xff]
    %v258 = vld [vmem:[%s2 + $0xc0] sm:$0xff]
    %v259 = vld [vmem:[%s2 + $0xc8] sm:$0xff]
    %v260 = vld [vmem:[%s2 + $0xd0] sm:$0xff]
    %v261 = vld [vmem:[%s2 + $0xd8] sm:$0xff]
    %v262 = vld [vmem:[%s2 + $0xe0] sm:$0xff]
    %v263 = vld [vmem:[%s2 + $0xe8] sm:$0xff]
    %v264 = vld [vmem:[%s2 + $0xf0] sm:$0xff]
    %v265 = vld [vmem:[%s2 + $0xf8] sm:$0xff]
    %v266 = vld [vmem:[%s2 + $0x100] sm:$0xff]
    %v267 = vld [vmem:[%s2 + $0x108] sm:$0xff]
    %v268 = vld [vmem:[%s2 + $0x110] sm:$0xff]
    %v269 = vld [vmem:[%s2 + $0x118] sm:$0xff]
    %v270 = vld [vmem:[%s2 + $0x120] sm:$0xff]
    %v271 = vld [vmem:[%s2 + $0x128] sm:$0xff]
    %v272 = vld [vmem:[%s2 + $0x130] sm:$0xff]
    %v273 = vld [vmem:[%s2 + $0x138] sm:$0xff]
    %v274 = vld [vmem:[%s2 + $0x140] sm:$0xff]
    %v275 = vld [vmem:[%s2 + $0x148] sm:$0xff]
    %v276 = vld [vmem:[%s2 + $0x150] sm:$0xff]
    %v277 = vld [vmem:[%s2 + $0x158] sm:$0xff]
    %v278 = vld [vmem:[%s2 + $0x160] sm:$0xff]
    %v279 = vld [vmem:[%s2 + $0x168] sm:$0xff]
    %v280 = vld [vmem:[%s2 + $0x170] sm:$0xff]
    %v281 = vld [vmem:[%s2 + $0x178] sm:$0xff]
    %v282 = vld [vmem:[%s2 + $0x180] sm:$0xff]
    %v283 = vld [vmem:[%s2 + $0x188] sm:$0xff]
    %v284 = vld [vmem:[%s2 + $0x190] sm:$0xff]
    %v285 = vld [vmem:[%s2 + $0x198] sm:$0xff]
    %v286 = vld [vmem:[%s2 + $0x1a0] sm:$0xff]
    %v287 = vld [vmem:[%s2 + $0x1a8] sm:$0xff]
    %v288 = vld [vmem:[%s2 + $0x1b0] sm:$0xff]
    %v289 = vld [vmem:[%s2 + $0x1b8] sm:$0xff]
    %v290 = vld [vmem:[%s2 + $0x1c0] sm:$0xff]
    %v291 = vld [vmem:[%s2 + $0x1c8] sm:$0xff]
    %v292 = vld [vmem:[%s2 + $0x1d0] sm:$0xff]
    %v293 = vld [vmem:[%s2 + $0x1d8] sm:$0xff]
    %v294 = vld [vmem:[%s2 + $0x1e0] sm:$0xff]
    %v295 = vld [vmem:[%s2 + $0x1e8] sm:$0xff]
    %v296 = vld [vmem:[%s2 + $0x1f0] sm:$0xff]
    %v297 = vld [vmem:[%s2 + $0x1f8] sm:$0xff]
    %v298 = vld [vmem:[%s2 + $0x200] sm:$0xff]
    %v299 = vld [vmem:[%s2 + $0x208] sm:$0xff]
    %v300 = vld [vmem:[%s2 + $0x210] sm:$0xff]
    %v301 = vld [vmem:[%s2 + $0x218] sm:$0xff]
    %v302 = vld [vmem:[%s2 + $0x220] sm:$0xff]
    %v303 = vld [vmem:[%s2 + $0x228] sm:$0xff]
    %v304 = vld [vmem:[%s2 + $0x230] sm:$0xff]
    %v305 = vld [vmem:[%s2 + $0x238] sm:$0xff]
    %v306 = vld [vmem:[%s2 + $0x240] sm:$0xff]
    %v307 = vld [vmem:[%s2 + $0x248] sm:$0xff]
    %v308 = vld [vmem:[%s2 + $0x250] sm:$0xff]
    %v309 = vld [vmem:[%s2 + $0x258] sm:$0xff]
    %v310 = vld [vmem:[%s2 + $0x260] sm:$0xff]
    %v311 = vld [vmem:[%s2 + $0x268] sm:$0xff]
    %v312 = vld [vmem:[%s2 + $0x270] sm:$0xff]
    %v313 = vld [vmem:[%s2 + $0x278] sm:$0xff]
    %v314 = vld [vmem:[%s2 + $0x280] sm:$0xff]
    %v315 = vld [vmem:[%s2 + $0x288] sm:$0xff]
    %v316 = vld [vmem:[%s2 + $0x290] sm:$0xff]
    %v317 = vld [vmem:[%s2 + $0x298] sm:$0xff]
    %v318 = vld [vmem:[%s2 + $0x2a0] sm:$0xff]
    %v319 = vld [vmem:[%s2 + $0x2a8] sm:$0xff]
    %v320 = vld [vmem:[%s2 + $0x2b0] sm:$0xff]
    %v321 = vld [vmem:[%s2 + $0x2b8] sm:$0xff]
    %v322 = vld [vmem:[%s2 + $0x2c0] sm:$0xff]
    %v323 = vld [vmem:[%s2 + $0x2c8] sm:$0xff]
    %v324 = vld [vmem:[%s2 + $0x2d0] sm:$0xff]
    %v325 = vld [vmem:[%s2 + $0x2d8] sm:$0xff]
    %v326 = vld [vmem:[%s2 + $0x2e0] sm:$0xff]
    %v327 = vld [vmem:[%s2 + $0x2e8] sm:$0xff]
    %v328 = vld [vmem:[%s2 + $0x2f0] sm:$0xff]
    %v329 = vld [vmem:[%s2 + $0x2f8] sm:$0xff]
    %v330 = vld [vmem:[%s2 + $0x300] sm:$0xff]
    %v331 = vld [vmem:[%s2 + $0x308] sm:$0xff]
    %v332 = vld [vmem:[%s2 + $0x310] sm:$0xff]
    %v333 = vld [vmem:[%s2 + $0x318] sm:$0xff]
    %v334 = vld [vmem:[%s2 + $0x320] sm:$0xff]
    %v335 = vld [vmem:[%s2 + $0x328] sm:$0xff]
    %v336 = vld [vmem:[%s2 + $0x330] sm:$0xff]
    %v337 = vld [vmem:[%s2 + $0x338] sm:$0xff]
    %v338 = vld [vmem:[%s2 + $0x340] sm:$0xff]
    %v339 = vld [vmem:[%s2 + $0x348] sm:$0xff]
    %v340 = vld [vmem:[%s2 + $0x350] sm:$0xff]
    %v341 = vld [vmem:[%s2 + $0x358] sm:$0xff]
    %v342 = vld [vmem:[%s2 + $0x360] sm:$0xff]
    %v343 = vld [vmem:[%s2 + $0x368] sm:$0xff]
    %v344 = vld [vmem:[%s2 + $0x370] sm:$0xff]
    %v345 = vld [vmem:[%s2 + $0x378] sm:$0xff]
    %v346 = vld [vmem:[%s2 + $0x380] sm:$0xff]
    %v347 = vld [vmem:[%s2 + $0x388] sm:$0xff]
    %v348 = vld [vmem:[%s2 + $0x390] sm:$0xff]
    %v349 = vld [vmem:[%s2 + $0x398] sm:$0xff]
    %v350 = vld [vmem:[%s2 + $0x3a0] sm:$0xff]
    %v351 = vld [vmem:[%s2 + $0x3a8] sm:$0xff]
    %v352 = vld [vmem:[%s2 + $0x3b0] sm:$0xff]
    %v353 = vld [vmem:[%s2 + $0x3b8] sm:$0xff]
    %v354 = vld [vmem:[%s2 + $0x3c0] sm:$0xff]
    %v355 = vld [vmem:[%s2 + $0x3c8] sm:$0xff]
    %v356 = vld [vmem:[%s2 + $0x3d0] sm:$0xff]
    %v357 = vld [vmem:[%s2 + $0x3d8] sm:$0xff]
    %v358 = vld [vmem:[%s2 + $0x3e0] sm:$0xff]
    %v359 = vld [vmem:[%s2 + $0x3e8] sm:$0xff]
    %v360 = vld [vmem:[%s2 + $0x3f0] sm:$0xff]
    %v361 = vld [vmem:[%s2 + $0x3f8] sm:$0xff]
    %v362 = vld [vmem:[%s2 + $0x400] sm:$0xff]
    %v363 = vld [vmem:[%s2 + $0x408] sm:$0xff]
    %v364 = vld [vmem:[%s2 + $0x410] sm:$0xff]
    %v365 = vld [vmem:[%s2 + $0x418] sm:$0xff]
    %v366 = vld [vmem:[%s2 + $0x420] sm:$0xff]
    %v367 = vld [vmem:[%s2 + $0x428] sm:$0xff]
    %v368 = vld [vmem:[%s2 + $0x430] sm:$0xff]
    %v369 = vld [vmem:[%s2 + $0x438] sm:$0xff]
    %v370 = vld [vmem:[%s2 + $0x440] sm:$0xff]
    %v371 = vld [vmem:[%s2 + $0x448] sm:$0xff]
    %v372 = vld [vmem:[%s2 + $0x450] sm:$0xff]
    %v373 = vld [vmem:[%s2 + $0x458] sm:$0xff]
    %v374 = vld [vmem:[%s2 + $0x460] sm:$0xff]
    %v375 = vld [vmem:[%s2 + $0x468] sm:$0xff]
    %v376 = vld [vmem:[%s2 + $0x470] sm:$0xff]
    %v377 = vld [vmem:[%s2 + $0x478] sm:$0xff]
    %v378 = vld [vmem:[%s2 + $0x480] sm:$0xff]
    %v379 = vld [vmem:[%s2 + $0x488] sm:$0xff]
    %v380 = vld [vmem:[%s2 + $0x490] sm:$0xff]
    %v381 = vld [vmem:[%s2 + $0x498] sm:$0xff]
    %v382 = vld [vmem:[%s2 + $0x4a0] sm:$0xff]
    %v383 = vld [vmem:[%s2 + $0x4a8] sm:$0xff]
    %v384 = vld [vmem:[%s2 + $0x4b0] sm:$0xff]
    %v385 = vld [vmem:[%s2 + $0x4b8] sm:$0xff]
    %v386 = vld [vmem:[%s2 + $0x4c0] sm:$0xff]
    %v387 = vld [vmem:[%s2 + $0x4c8] sm:$0xff]
    %v388 = vld [vmem:[%s2 + $0x4d0] sm:$0xff]
    %v389 = vld [vmem:[%s2 + $0x4d8] sm:$0xff]
    %v390 = vld [vmem:[%s2 + $0x4e0] sm:$0xff]
    %v391 = vld [vmem:[%s2 + $0x4e8] sm:$0xff]
    %v392 = vld [vmem:[%s2 + $0x4f0] sm:$0xff]
    %v393 = vld [vmem:[%s2 + $0x4f8] sm:$0xff]
    %v394 = vld [vmem:[%s2 + $0x500] sm:$0xff]
    %v395 = vld [vmem:[%s2 + $0x508] sm:$0xff]
    %v396 = vld [vmem:[%s2 + $0x510] sm:$0xff]
    %v397 = vld [vmem:[%s2 + $0x518] sm:$0xff]
    %v398 = vld [vmem:[%s2 + $0x520] sm:$0xff]
    %v399 = vld [vmem:[%s2 + $0x528] sm:$0xff]
    %v400 = vld [vmem:[%s2 + $0x530] sm:$0xff]
    %v401 = vld [vmem:[%s2 + $0x538] sm:$0xff]
    %v402 = vld [vmem:[%s2 + $0x540] sm:$0xff]
    %v403 = vld [vmem:[%s2 + $0x548] sm:$0xff]
    %v404 = vld [vmem:[%s2 + $0x550] sm:$0xff]
    %v405 = vld [vmem:[%s2 + $0x558] sm:$0xff]
    %v406 = vld [vmem:[%s2 + $0x560] sm:$0xff]
    %v407 = vld [vmem:[%s2 + $0x568] sm:$0xff]
    %v408 = vld [vmem:[%s2 + $0x570] sm:$0xff]
    %v409 = vld [vmem:[%s2 + $0x578] sm:$0xff]
    %v410 = vld [vmem:[%s2 + $0x580] sm:$0xff]
    %v411 = vld [vmem:[%s2 + $0x588] sm:$0xff]
    %v412 = vld [vmem:[%s2 + $0x590] sm:$0xff]
    %v413 = vld [vmem:[%s2 + $0x598] sm:$0xff]
    %v414 = vld [vmem:[%s2 + $0x5a0] sm:$0xff]
    %v415 = vld [vmem:[%s2 + $0x5a8] sm:$0xff]
    %v416 = vld [vmem:[%s2 + $0x5b0] sm:$0xff]
    %v417 = vld [vmem:[%s2 + $0x5b8] sm:$0xff]
    %v418 = vld [vmem:[%s2 + $0x5c0] sm:$0xff]
    %v419 = vld [vmem:[%s2 + $0x5c8] sm:$0xff]
    %v420 = vld [vmem:[%s2 + $0x5d0] sm:$0xff]
    %v421 = vld [vmem:[%s2 + $0x5d8] sm:$0xff]
    %v422 = vld [vmem:[%s2 + $0x5e0] sm:$0xff]
    %v423 = vld [vmem:[%s2 + $0x5e8] sm:$0xff]
    %v424 = vld [vmem:[%s2 + $0x5f0] sm:$0xff]
    %v425 = vld [vmem:[%s2 + $0x5f8] sm:$0xff]
    %v426 = vld [vmem:[%s2 + $0x600] sm:$0xff]
    %v427 = vld [vmem:[%s2 + $0x608] sm:$0xff]
    %v428 = vld [vmem:[%s2 + $0x610] sm:$0xff]
    %v429 = vld [vmem:[%s2 + $0x618] sm:$0xff]
    %v430 = vld [vmem:[%s3] sm:$0xf]
    %v432 = vlaneseq
    %v433 = vshrl.u32 %v432, 7
    %v434 = vsub.s32 0, %v433
    %v435 = vrot.slane %v430, %v434
    %v436 = vlaneseq
    %v437 = vshrl.u32 %v436, 7
    %v438 = vsub.s32 1, %v437
    %v439 = vrot.slane %v430, %v438
    %v440 = vlaneseq
    %v441 = vshrl.u32 %v440, 7
    %v442 = vsub.s32 2, %v441
    %v443 = vrot.slane %v430, %v442
    %v444 = vlaneseq
    %v445 = vshrl.u32 %v444, 7
    %v446 = vsub.s32 3, %v445
    %v447 = vrot.slane %v430, %v446
    %v648 = vunpack.c.l.b16 %v234
    %v649 = vunpack.c.h.b16 %v234
    %v650 = vunpack.c.l.b16 %v235
    %v651 = vunpack.c.h.b16 %v235
    %v652 = vunpack.c.l.b16 %v236
    %v653 = vunpack.c.h.b16 %v236
    %v654 = vunpack.c.l.b16 %v237
    %v655 = vunpack.c.h.b16 %v237
    %v656 = vunpack.c.l.b16 %v238
    %v657 = vunpack.c.h.b16 %v238
    %v658 = vunpack.c.l.b16 %v239
    %v659 = vunpack.c.h.b16 %v239
    %v660 = vunpack.c.l.b16 %v240
    %v661 = vunpack.c.h.b16 %v240
    %v662 = vunpack.c.l.b16 %v241
    %v663 = vunpack.c.h.b16 %v241
    %v664 = vunpack.c.l.b16 %v242
    %v665 = vunpack.c.h.b16 %v242
    %v666 = vunpack.c.l.b16 %v243
    %v667 = vunpack.c.h.b16 %v243
    %v668 = vunpack.c.l.b16 %v244
    %v669 = vunpack.c.h.b16 %v244
    %v670 = vunpack.c.l.b16 %v245
    %v671 = vunpack.c.h.b16 %v245
    %v672 = vunpack.c.l.b16 %v246
    %v673 = vunpack.c.h.b16 %v246
    %v674 = vunpack.c.l.b16 %v247
    %v675 = vunpack.c.h.b16 %v247
    %v676 = vunpack.c.l.b16 %v248
    %v677 = vunpack.c.h.b16 %v248
    %v678 = vunpack.c.l.b16 %v249
    %v679 = vunpack.c.h.b16 %v249
    %v680 = vunpack.c.l.b16 %v250
    %v681 = vunpack.c.h.b16 %v250
    %v682 = vunpack.c.l.b16 %v251
    %v683 = vunpack.c.h.b16 %v251
    %v684 = vunpack.c.l.b16 %v252
    %v685 = vunpack.c.h.b16 %v252
    %v686 = vunpack.c.l.b16 %v253
    %v687 = vunpack.c.h.b16 %v253
    %v688 = vunpack.c.l.b16 %v254
    %v689 = vunpack.c.h.b16 %v254
    %v690 = vunpack.c.l.b16 %v255
    %v691 = vunpack.c.h.b16 %v255
    %v692 = vunpack.c.l.b16 %v256
    %v693 = vunpack.c.h.b16 %v256
    %v694 = vunpack.c.l.b16 %v257
    %v695 = vunpack.c.h.b16 %v257
    %v696 = vunpack.c.l.b16 %v258
    %v697 = vunpack.c.h.b16 %v258
    %v698 = vunpack.c.l.b16 %v259
    %v699 = vunpack.c.h.b16 %v259
    %v700 = vunpack.c.l.b16 %v260
    %v701 = vunpack.c.h.b16 %v260
    %v702 = vunpack.c.l.b16 %v261
    %v703 = vunpack.c.h.b16 %v261
    %v704 = vunpack.c.l.b16 %v262
    %v705 = vunpack.c.h.b16 %v262
    %v706 = vunpack.c.l.b16 %v263
    %v707 = vunpack.c.h.b16 %v263
    %v708 = vunpack.c.l.b16 %v264
    %v709 = vunpack.c.h.b16 %v264
    %v710 = vunpack.c.l.b16 %v265
    %v711 = vunpack.c.h.b16 %v265
    %v712 = vunpack.c.l.b16 %v266
    %v713 = vunpack.c.h.b16 %v266
    %v714 = vunpack.c.l.b16 %v267
    %v715 = vunpack.c.h.b16 %v267
    %v716 = vunpack.c.l.b16 %v268
    %v717 = vunpack.c.h.b16 %v268
    %v718 = vunpack.c.l.b16 %v269
    %v719 = vunpack.c.h.b16 %v269
    %v720 = vunpack.c.l.b16 %v270
    %v721 = vunpack.c.h.b16 %v270
    %v722 = vunpack.c.l.b16 %v271
    %v723 = vunpack.c.h.b16 %v271
    %v724 = vunpack.c.l.b16 %v272
    %v725 = vunpack.c.h.b16 %v272
    %v726 = vunpack.c.l.b16 %v273
    %v727 = vunpack.c.h.b16 %v273
    %v728 = vunpack.c.l.b16 %v274
    %v729 = vunpack.c.h.b16 %v274
    %v730 = vunpack.c.l.b16 %v275
    %v731 = vunpack.c.h.b16 %v275
    %v732 = vunpack.c.l.b16 %v276
    %v733 = vunpack.c.h.b16 %v276
    %v734 = vunpack.c.l.b16 %v277
    %v735 = vunpack.c.h.b16 %v277
    %v736 = vunpack.c.l.b16 %v278
    %v737 = vunpack.c.h.b16 %v278
    %v738 = vunpack.c.l.b16 %v279
    %v739 = vunpack.c.h.b16 %v279
    %v740 = vunpack.c.l.b16 %v280
    %v741 = vunpack.c.h.b16 %v280
    %v742 = vunpack.c.l.b16 %v281
    %v743 = vunpack.c.h.b16 %v281
    %v744 = vunpack.c.l.b16 %v282
    %v745 = vunpack.c.h.b16 %v282
    %v746 = vunpack.c.l.b16 %v283
    %v747 = vunpack.c.h.b16 %v283
    %v748 = vunpack.c.l.b16 %v284
    %v749 = vunpack.c.h.b16 %v284
    %v750 = vunpack.c.l.b16 %v285
    %v751 = vunpack.c.h.b16 %v285
    %v752 = vunpack.c.l.b16 %v286
    %v753 = vunpack.c.h.b16 %v286
    %v754 = vunpack.c.l.b16 %v287
    %v755 = vunpack.c.h.b16 %v287
    %v756 = vunpack.c.l.b16 %v288
    %v757 = vunpack.c.h.b16 %v288
    %v758 = vunpack.c.l.b16 %v289
    %v759 = vunpack.c.h.b16 %v289
    %v760 = vunpack.c.l.b16 %v290
    %v761 = vunpack.c.h.b16 %v290
    %v762 = vunpack.c.l.b16 %v291
    %v763 = vunpack.c.h.b16 %v291
    %v764 = vunpack.c.l.b16 %v292
    %v765 = vunpack.c.h.b16 %v292
    %v766 = vunpack.c.l.b16 %v293
    %v767 = vunpack.c.h.b16 %v293
    %v768 = vunpack.c.l.b16 %v294
    %v769 = vunpack.c.h.b16 %v294
    %v770 = vunpack.c.l.b16 %v295
    %v771 = vunpack.c.h.b16 %v295
    %v772 = vunpack.c.l.b16 %v296
    %v773 = vunpack.c.h.b16 %v296
    %v774 = vunpack.c.l.b16 %v297
    %v775 = vunpack.c.h.b16 %v297
    %v776 = vunpack.c.l.b16 %v298
    %v777 = vunpack.c.h.b16 %v298
    %v778 = vunpack.c.l.b16 %v299
    %v779 = vunpack.c.h.b16 %v299
    %v780 = vunpack.c.l.b16 %v300
    %v781 = vunpack.c.h.b16 %v300
    %v782 = vunpack.c.l.b16 %v301
    %v783 = vunpack.c.h.b16 %v301
    %v784 = vunpack.c.l.b16 %v302
    %v785 = vunpack.c.h.b16 %v302
    %v786 = vunpack.c.l.b16 %v303
    %v787 = vunpack.c.h.b16 %v303
    %v788 = vunpack.c.l.b16 %v304
    %v789 = vunpack.c.h.b16 %v304
    %v790 = vunpack.c.l.b16 %v305
    %v791 = vunpack.c.h.b16 %v305
    %v792 = vunpack.c.l.b16 %v306
    %v793 = vunpack.c.h.b16 %v306
    %v794 = vunpack.c.l.b16 %v307
    %v795 = vunpack.c.h.b16 %v307
    %v796 = vunpack.c.l.b16 %v308
    %v797 = vunpack.c.h.b16 %v308
    %v798 = vunpack.c.l.b16 %v309
    %v799 = vunpack.c.h.b16 %v309
    %v800 = vunpack.c.l.b16 %v310
    %v801 = vunpack.c.h.b16 %v310
    %v802 = vunpack.c.l.b16 %v311
    %v803 = vunpack.c.h.b16 %v311
    %v804 = vunpack.c.l.b16 %v312
    %v805 = vunpack.c.h.b16 %v312
    %v806 = vunpack.c.l.b16 %v313
    %v807 = vunpack.c.h.b16 %v313
    %v808 = vunpack.c.l.b16 %v314
    %v809 = vunpack.c.h.b16 %v314
    %v810 = vunpack.c.l.b16 %v315
    %v811 = vunpack.c.h.b16 %v315
    %v812 = vunpack.c.l.b16 %v316
    %v813 = vunpack.c.h.b16 %v316
    %v814 = vunpack.c.l.b16 %v317
    %v815 = vunpack.c.h.b16 %v317
    %v816 = vunpack.c.l.b16 %v318
    %v817 = vunpack.c.h.b16 %v318
    %v818 = vunpack.c.l.b16 %v319
    %v819 = vunpack.c.h.b16 %v319
    %v820 = vunpack.c.l.b16 %v320
    %v821 = vunpack.c.h.b16 %v320
    %v822 = vunpack.c.l.b16 %v321
    %v823 = vunpack.c.h.b16 %v321
    %v824 = vunpack.c.l.b16 %v322
    %v825 = vunpack.c.h.b16 %v322
    %v826 = vunpack.c.l.b16 %v323
    %v827 = vunpack.c.h.b16 %v323
    %v828 = vunpack.c.l.b16 %v324
    %v829 = vunpack.c.h.b16 %v324
    %v830 = vunpack.c.l.b16 %v325
    %v831 = vunpack.c.h.b16 %v325
    %v832 = vunpack.c.l.b16 %v326
    %v833 = vunpack.c.h.b16 %v326
    %v834 = vunpack.c.l.b16 %v327
    %v835 = vunpack.c.h.b16 %v327
    %v836 = vunpack.c.l.b16 %v328
    %v837 = vunpack.c.h.b16 %v328
    %v838 = vunpack.c.l.b16 %v329
    %v839 = vunpack.c.h.b16 %v329
    %v840 = vunpack.c.l.b16 %v330
    %v841 = vunpack.c.h.b16 %v330
    %v842 = vunpack.c.l.b16 %v331
    %v843 = vunpack.c.h.b16 %v331
    %v844 = vunpack.c.l.b16 %v332
    %v845 = vunpack.c.h.b16 %v332
    %v846 = vunpack.c.l.b16 %v333
    %v847 = vunpack.c.h.b16 %v333
    %v848 = vunpack.c.l.b16 %v334
    %v849 = vunpack.c.h.b16 %v334
    %v850 = vunpack.c.l.b16 %v335
    %v851 = vunpack.c.h.b16 %v335
    %v852 = vunpack.c.l.b16 %v336
    %v853 = vunpack.c.h.b16 %v336
    %v854 = vunpack.c.l.b16 %v337
    %v855 = vunpack.c.h.b16 %v337
    %v856 = vunpack.c.l.b16 %v338
    %v857 = vunpack.c.h.b16 %v338
    %v858 = vunpack.c.l.b16 %v339
    %v859 = vunpack.c.h.b16 %v339
    %v860 = vunpack.c.l.b16 %v340
    %v861 = vunpack.c.h.b16 %v340
    %v862 = vunpack.c.l.b16 %v341
    %v863 = vunpack.c.h.b16 %v341
    %v864 = vunpack.c.l.b16 %v342
    %v865 = vunpack.c.h.b16 %v342
    %v866 = vunpack.c.l.b16 %v343
    %v867 = vunpack.c.h.b16 %v343
    %v868 = vunpack.c.l.b16 %v344
    %v869 = vunpack.c.h.b16 %v344
    %v870 = vunpack.c.l.b16 %v345
    %v871 = vunpack.c.h.b16 %v345
    %v872 = vunpack.c.l.b16 %v346
    %v873 = vunpack.c.h.b16 %v346
    %v874 = vunpack.c.l.b16 %v347
    %v875 = vunpack.c.h.b16 %v347
    %v876 = vunpack.c.l.b16 %v348
    %v877 = vunpack.c.h.b16 %v348
    %v878 = vunpack.c.l.b16 %v349
    %v879 = vunpack.c.h.b16 %v349
    %v880 = vunpack.c.l.b16 %v350
    %v881 = vunpack.c.h.b16 %v350
    %v882 = vunpack.c.l.b16 %v351
    %v883 = vunpack.c.h.b16 %v351
    %v884 = vunpack.c.l.b16 %v352
    %v885 = vunpack.c.h.b16 %v352
    %v886 = vunpack.c.l.b16 %v353
    %v887 = vunpack.c.h.b16 %v353
    %v888 = vunpack.c.l.b16 %v354
    %v889 = vunpack.c.h.b16 %v354
    %v890 = vunpack.c.l.b16 %v355
    %v891 = vunpack.c.h.b16 %v355
    %v892 = vunpack.c.l.b16 %v356
    %v893 = vunpack.c.h.b16 %v356
    %v894 = vunpack.c.l.b16 %v357
    %v895 = vunpack.c.h.b16 %v357
    %v896 = vunpack.c.l.b16 %v358
    %v897 = vunpack.c.h.b16 %v358
    %v898 = vunpack.c.l.b16 %v359
    %v899 = vunpack.c.h.b16 %v359
    %v900 = vunpack.c.l.b16 %v360
    %v901 = vunpack.c.h.b16 %v360
    %v902 = vunpack.c.l.b16 %v361
    %v903 = vunpack.c.h.b16 %v361
    %v904 = vunpack.c.l.b16 %v362
    %v905 = vunpack.c.h.b16 %v362
    %v906 = vunpack.c.l.b16 %v363
    %v907 = vunpack.c.h.b16 %v363
    %v908 = vunpack.c.l.b16 %v364
    %v909 = vunpack.c.h.b16 %v364
    %v910 = vunpack.c.l.b16 %v365
    %v911 = vunpack.c.h.b16 %v365
    %v912 = vunpack.c.l.b16 %v366
    %v913 = vunpack.c.h.b16 %v366
    %v914 = vunpack.c.l.b16 %v367
    %v915 = vunpack.c.h.b16 %v367
    %v916 = vunpack.c.l.b16 %v368
    %v917 = vunpack.c.h.b16 %v368
    %v918 = vunpack.c.l.b16 %v369
    %v919 = vunpack.c.h.b16 %v369
    %v920 = vunpack.c.l.b16 %v370
    %v921 = vunpack.c.h.b16 %v370
    %v922 = vunpack.c.l.b16 %v371
    %v923 = vunpack.c.h.b16 %v371
    %v924 = vunpack.c.l.b16 %v372
    %v925 = vunpack.c.h.b16 %v372
    %v926 = vunpack.c.l.b16 %v373
    %v927 = vunpack.c.h.b16 %v373
    %v928 = vunpack.c.l.b16 %v374
    %v929 = vunpack.c.h.b16 %v374
    %v930 = vunpack.c.l.b16 %v375
    %v931 = vunpack.c.h.b16 %v375
    %v932 = vunpack.c.l.b16 %v376
    %v933 = vunpack.c.h.b16 %v376
    %v934 = vunpack.c.l.b16 %v377
    %v935 = vunpack.c.h.b16 %v377
    %v936 = vunpack.c.l.b16 %v378
    %v937 = vunpack.c.h.b16 %v378
    %v938 = vunpack.c.l.b16 %v379
    %v939 = vunpack.c.h.b16 %v379
    %v940 = vunpack.c.l.b16 %v380
    %v941 = vunpack.c.h.b16 %v380
    %v942 = vunpack.c.l.b16 %v381
    %v943 = vunpack.c.h.b16 %v381
    %v944 = vunpack.c.l.b16 %v382
    %v945 = vunpack.c.h.b16 %v382
    %v946 = vunpack.c.l.b16 %v383
    %v947 = vunpack.c.h.b16 %v383
    %v948 = vunpack.c.l.b16 %v384
    %v949 = vunpack.c.h.b16 %v384
    %v950 = vunpack.c.l.b16 %v385
    %v951 = vunpack.c.h.b16 %v385
    %v952 = vunpack.c.l.b16 %v386
    %v953 = vunpack.c.h.b16 %v386
    %v954 = vunpack.c.l.b16 %v387
    %v955 = vunpack.c.h.b16 %v387
    %v956 = vunpack.c.l.b16 %v388
    %v957 = vunpack.c.h.b16 %v388
    %v958 = vunpack.c.l.b16 %v389
    %v959 = vunpack.c.h.b16 %v389
    %v960 = vunpack.c.l.b16 %v390
    %v961 = vunpack.c.h.b16 %v390
    %v962 = vunpack.c.l.b16 %v391
    %v963 = vunpack.c.h.b16 %v391
    %v964 = vunpack.c.l.b16 %v392
    %v965 = vunpack.c.h.b16 %v392
    %v966 = vunpack.c.l.b16 %v393
    %v967 = vunpack.c.h.b16 %v393
    %v968 = vunpack.c.l.b16 %v394
    %v969 = vunpack.c.h.b16 %v394
    %v970 = vunpack.c.l.b16 %v395
    %v971 = vunpack.c.h.b16 %v395
    %v972 = vunpack.c.l.b16 %v396
    %v973 = vunpack.c.h.b16 %v396
    %v974 = vunpack.c.l.b16 %v397
    %v975 = vunpack.c.h.b16 %v397
    %v976 = vunpack.c.l.b16 %v398
    %v977 = vunpack.c.h.b16 %v398
    %v978 = vunpack.c.l.b16 %v399
    %v979 = vunpack.c.h.b16 %v399
    %v980 = vunpack.c.l.b16 %v400
    %v981 = vunpack.c.h.b16 %v400
    %v982 = vunpack.c.l.b16 %v401
    %v983 = vunpack.c.h.b16 %v401
    %v984 = vunpack.c.l.b16 %v402
    %v985 = vunpack.c.h.b16 %v402
    %v986 = vunpack.c.l.b16 %v403
    %v987 = vunpack.c.h.b16 %v403
    %v988 = vunpack.c.l.b16 %v404
    %v989 = vunpack.c.h.b16 %v404
    %v990 = vunpack.c.l.b16 %v405
    %v991 = vunpack.c.h.b16 %v405
    %v992 = vunpack.c.l.b16 %v406
    %v993 = vunpack.c.h.b16 %v406
    %v994 = vunpack.c.l.b16 %v407
    %v995 = vunpack.c.h.b16 %v407
    %v996 = vunpack.c.l.b16 %v408
    %v997 = vunpack.c.h.b16 %v408
    %v998 = vunpack.c.l.b16 %v409
    %v999 = vunpack.c.h.b16 %v409
    %v1000 = vunpack.c.l.b16 %v410
    %v1001 = vunpack.c.h.b16 %v410
    %v1002 = vunpack.c.l.b16 %v411
    %v1003 = vunpack.c.h.b16 %v411
    %v1004 = vunpack.c.l.b16 %v412
    %v1005 = vunpack.c.h.b16 %v412
    %v1006 = vunpack.c.l.b16 %v413
    %v1007 = vunpack.c.h.b16 %v413
    %v1008 = vunpack.c.l.b16 %v414
    %v1009 = vunpack.c.h.b16 %v414
    %v1010 = vunpack.c.l.b16 %v415
    %v1011 = vunpack.c.h.b16 %v415
    %v1012 = vunpack.c.l.b16 %v416
    %v1013 = vunpack.c.h.b16 %v416
    %v1014 = vunpack.c.l.b16 %v417
    %v1015 = vunpack.c.h.b16 %v417
    %v1016 = vunpack.c.l.b16 %v418
    %v1017 = vunpack.c.h.b16 %v418
    %v1018 = vunpack.c.l.b16 %v419
    %v1019 = vunpack.c.h.b16 %v419
    %v1020 = vunpack.c.l.b16 %v420
    %v1021 = vunpack.c.h.b16 %v420
    %v1022 = vunpack.c.l.b16 %v421
    %v1023 = vunpack.c.h.b16 %v421
    %v1024 = vunpack.c.l.b16 %v422
    %v1025 = vunpack.c.h.b16 %v422
    %v1026 = vunpack.c.l.b16 %v423
    %v1027 = vunpack.c.h.b16 %v423
    %v1028 = vunpack.c.l.b16 %v424
    %v1029 = vunpack.c.h.b16 %v424
    %v1030 = vunpack.c.l.b16 %v425
    %v1031 = vunpack.c.h.b16 %v425
    %v1032 = vunpack.c.l.b16 %v426
    %v1033 = vunpack.c.h.b16 %v426
    %v1034 = vunpack.c.l.b16 %v427
    %v1035 = vunpack.c.h.b16 %v427
    %v1036 = vunpack.c.l.b16 %v428
    %v1037 = vunpack.c.h.b16 %v428
    %v1038 = vunpack.c.l.b16 %v429
    %v1039 = vunpack.c.h.b16 %v429
    %v1040 = vpack.c.b16 %v652, %v648
    %v1041 = vpack.c.b16 %v653, %v649
    %v1042 = vpack.c.b16 %v654, %v650
    %v1043 = vpack.c.b16 %v655, %v651
    %v1044 = vpack.c.b16 %v660, %v656
    %v1045 = vpack.c.b16 %v661, %v657
    %v1046 = vpack.c.b16 %v662, %v658
    %v1047 = vpack.c.b16 %v663, %v659
    %v1048 = vpack.c.b16 %v668, %v664
    %v1049 = vpack.c.b16 %v669, %v665
    %v1050 = vpack.c.b16 %v670, %v666
    %v1051 = vpack.c.b16 %v671, %v667
    %v1052 = vpack.c.b16 %v676, %v672
    %v1053 = vpack.c.b16 %v677, %v673
    %v1054 = vpack.c.b16 %v678, %v674
    %v1055 = vpack.c.b16 %v679, %v675
    %v1056 = vpack.c.b16 %v684, %v680
    %v1057 = vpack.c.b16 %v685, %v681
    %v1058 = vpack.c.b16 %v686, %v682
    %v1059 = vpack.c.b16 %v687, %v683
    %v1060 = vpack.c.b16 %v692, %v688
    %v1061 = vpack.c.b16 %v693, %v689
    %v1062 = vpack.c.b16 %v694, %v690
    %v1063 = vpack.c.b16 %v695, %v691
    %v1064 = vpack.c.b16 %v700, %v696
    %v1065 = vpack.c.b16 %v701, %v697
    %v1066 = vpack.c.b16 %v702, %v698
    %v1067 = vpack.c.b16 %v703, %v699
    %v1068 = vpack.c.b16 %v708, %v704
    %v1069 = vpack.c.b16 %v709, %v705
    %v1070 = vpack.c.b16 %v710, %v706
    %v1071 = vpack.c.b16 %v711, %v707
    %v1072 = vpack.c.b16 %v716, %v712
    %v1073 = vpack.c.b16 %v717, %v713
    %v1074 = vpack.c.b16 %v718, %v714
    %v1075 = vpack.c.b16 %v719, %v715
    %v1076 = vpack.c.b16 %v724, %v720
    %v1077 = vpack.c.b16 %v725, %v721
    %v1078 = vpack.c.b16 %v726, %v722
    %v1079 = vpack.c.b16 %v727, %v723
    %v1080 = vpack.c.b16 %v732, %v728
    %v1081 = vpack.c.b16 %v733, %v729
    %v1082 = vpack.c.b16 %v734, %v730
    %v1083 = vpack.c.b16 %v735, %v731
    %v1084 = vpack.c.b16 %v740, %v736
    %v1085 = vpack.c.b16 %v741, %v737
    %v1086 = vpack.c.b16 %v742, %v738
    %v1087 = vpack.c.b16 %v743, %v739
    %v1088 = vpack.c.b16 %v748, %v744
    %v1089 = vpack.c.b16 %v749, %v745
    %v1090 = vpack.c.b16 %v750, %v746
    %v1091 = vpack.c.b16 %v751, %v747
    %v1092 = vpack.c.b16 %v756, %v752
    %v1093 = vpack.c.b16 %v757, %v753
    %v1094 = vpack.c.b16 %v758, %v754
    %v1095 = vpack.c.b16 %v759, %v755
    %v1096 = vpack.c.b16 %v764, %v760
    %v1097 = vpack.c.b16 %v765, %v761
    %v1098 = vpack.c.b16 %v766, %v762
    %v1099 = vpack.c.b16 %v767, %v763
    %v1100 = vpack.c.b16 %v772, %v768
    %v1101 = vpack.c.b16 %v773, %v769
    %v1102 = vpack.c.b16 %v774, %v770
    %v1103 = vpack.c.b16 %v775, %v771
    %v1104 = vpack.c.b16 %v780, %v776
    %v1105 = vpack.c.b16 %v781, %v777
    %v1106 = vpack.c.b16 %v782, %v778
    %v1107 = vpack.c.b16 %v783, %v779
    %v1108 = vpack.c.b16 %v788, %v784
    %v1109 = vpack.c.b16 %v789, %v785
    %v1110 = vpack.c.b16 %v790, %v786
    %v1111 = vpack.c.b16 %v791, %v787
    %v1112 = vpack.c.b16 %v796, %v792
    %v1113 = vpack.c.b16 %v797, %v793
    %v1114 = vpack.c.b16 %v798, %v794
    %v1115 = vpack.c.b16 %v799, %v795
    %v1116 = vpack.c.b16 %v804, %v800
    %v1117 = vpack.c.b16 %v805, %v801
    %v1118 = vpack.c.b16 %v806, %v802
    %v1119 = vpack.c.b16 %v807, %v803
    %v1120 = vpack.c.b16 %v812, %v808
    %v1121 = vpack.c.b16 %v813, %v809
    %v1122 = vpack.c.b16 %v814, %v810
    %v1123 = vpack.c.b16 %v815, %v811
    %v1124 = vpack.c.b16 %v820, %v816
    %v1125 = vpack.c.b16 %v821, %v817
    %v1126 = vpack.c.b16 %v822, %v818
    %v1127 = vpack.c.b16 %v823, %v819
    %v1128 = vpack.c.b16 %v828, %v824
    %v1129 = vpack.c.b16 %v829, %v825
    %v1130 = vpack.c.b16 %v830, %v826
    %v1131 = vpack.c.b16 %v831, %v827
    %v1132 = vpack.c.b16 %v836, %v832
    %v1133 = vpack.c.b16 %v837, %v833
    %v1134 = vpack.c.b16 %v838, %v834
    %v1135 = vpack.c.b16 %v839, %v835
    %v1136 = vpack.c.b16 %v844, %v840
    %v1137 = vpack.c.b16 %v845, %v841
    %v1138 = vpack.c.b16 %v846, %v842
    %v1139 = vpack.c.b16 %v847, %v843
    %v1140 = vpack.c.b16 %v852, %v848
    %v1141 = vpack.c.b16 %v853, %v849
    %v1142 = vpack.c.b16 %v854, %v850
    %v1143 = vpack.c.b16 %v855, %v851
    %v1144 = vpack.c.b16 %v860, %v856
    %v1145 = vpack.c.b16 %v861, %v857
    %v1146 = vpack.c.b16 %v862, %v858
    %v1147 = vpack.c.b16 %v863, %v859
    %v1148 = vpack.c.b16 %v868, %v864
    %v1149 = vpack.c.b16 %v869, %v865
    %v1150 = vpack.c.b16 %v870, %v866
    %v1151 = vpack.c.b16 %v871, %v867
    %v1152 = vpack.c.b16 %v876, %v872
    %v1153 = vpack.c.b16 %v877, %v873
    %v1154 = vpack.c.b16 %v878, %v874
    %v1155 = vpack.c.b16 %v879, %v875
    %v1156 = vpack.c.b16 %v884, %v880
    %v1157 = vpack.c.b16 %v885, %v881
    %v1158 = vpack.c.b16 %v886, %v882
    %v1159 = vpack.c.b16 %v887, %v883
    %v1160 = vpack.c.b16 %v892, %v888
    %v1161 = vpack.c.b16 %v893, %v889
    %v1162 = vpack.c.b16 %v894, %v890
    %v1163 = vpack.c.b16 %v895, %v891
    %v1164 = vpack.c.b16 %v900, %v896
    %v1165 = vpack.c.b16 %v901, %v897
    %v1166 = vpack.c.b16 %v902, %v898
    %v1167 = vpack.c.b16 %v903, %v899
    %v1168 = vpack.c.b16 %v908, %v904
    %v1169 = vpack.c.b16 %v909, %v905
    %v1170 = vpack.c.b16 %v910, %v906
    %v1171 = vpack.c.b16 %v911, %v907
    %v1172 = vpack.c.b16 %v916, %v912
    %v1173 = vpack.c.b16 %v917, %v913
    %v1174 = vpack.c.b16 %v918, %v914
    %v1175 = vpack.c.b16 %v919, %v915
    %v1176 = vpack.c.b16 %v924, %v920
    %v1177 = vpack.c.b16 %v925, %v921
    %v1178 = vpack.c.b16 %v926, %v922
    %v1179 = vpack.c.b16 %v927, %v923
    %v1180 = vpack.c.b16 %v932, %v928
    %v1181 = vpack.c.b16 %v933, %v929
    %v1182 = vpack.c.b16 %v934, %v930
    %v1183 = vpack.c.b16 %v935, %v931
    %v1184 = vpack.c.b16 %v940, %v936
    %v1185 = vpack.c.b16 %v941, %v937
    %v1186 = vpack.c.b16 %v942, %v938
    %v1187 = vpack.c.b16 %v943, %v939
    %v1188 = vpack.c.b16 %v948, %v944
    %v1189 = vpack.c.b16 %v949, %v945
    %v1190 = vpack.c.b16 %v950, %v946
    %v1191 = vpack.c.b16 %v951, %v947
    %v1192 = vpack.c.b16 %v956, %v952
    %v1193 = vpack.c.b16 %v957, %v953
    %v1194 = vpack.c.b16 %v958, %v954
    %v1195 = vpack.c.b16 %v959, %v955
    %v1196 = vpack.c.b16 %v964, %v960
    %v1197 = vpack.c.b16 %v965, %v961
    %v1198 = vpack.c.b16 %v966, %v962
    %v1199 = vpack.c.b16 %v967, %v963
    %v1200 = vpack.c.b16 %v972, %v968
    %v1201 = vpack.c.b16 %v973, %v969
    %v1202 = vpack.c.b16 %v974, %v970
    %v1203 = vpack.c.b16 %v975, %v971
    %v1204 = vpack.c.b16 %v980, %v976
    %v1205 = vpack.c.b16 %v981, %v977
    %v1206 = vpack.c.b16 %v982, %v978
    %v1207 = vpack.c.b16 %v983, %v979
    %v1208 = vpack.c.b16 %v988, %v984
    %v1209 = vpack.c.b16 %v989, %v985
    %v1210 = vpack.c.b16 %v990, %v986
    %v1211 = vpack.c.b16 %v991, %v987
    %v1212 = vpack.c.b16 %v996, %v992
    %v1213 = vpack.c.b16 %v997, %v993
    %v1214 = vpack.c.b16 %v998, %v994
    %v1215 = vpack.c.b16 %v999, %v995
    %v1216 = vpack.c.b16 %v1004, %v1000
    %v1217 = vpack.c.b16 %v1005, %v1001
    %v1218 = vpack.c.b16 %v1006, %v1002
    %v1219 = vpack.c.b16 %v1007, %v1003
    %v1220 = vpack.c.b16 %v1012, %v1008
    %v1221 = vpack.c.b16 %v1013, %v1009
    %v1222 = vpack.c.b16 %v1014, %v1010
    %v1223 = vpack.c.b16 %v1015, %v1011
    %v1224 = vpack.c.b16 %v1020, %v1016
    %v1225 = vpack.c.b16 %v1021, %v1017
    %v1226 = vpack.c.b16 %v1022, %v1018
    %v1227 = vpack.c.b16 %v1023, %v1019
    %v1228 = vpack.c.b16 %v1028, %v1024
    %v1229 = vpack.c.b16 %v1029, %v1025
    %v1230 = vpack.c.b16 %v1030, %v1026
    %v1231 = vpack.c.b16 %v1031, %v1027
    %v1232 = vpack.c.b16 %v1036, %v1032
    %v1233 = vpack.c.b16 %v1037, %v1033
    %v1234 = vpack.c.b16 %v1038, %v1034
    %v1235 = vpack.c.b16 %v1039, %v1035
    %vm1432 = vcmask 130048
    %v1434 = vsel %vm1432, %v233, 0
    %1436 = vmatprep.subr.bf16.mxu0 %v1069
    %1437 = vmatpush1.bf16.msra.mxu0 %v1068
    %1438 = vmatprep.subr.bf16.mxu0 %v1065
    %1439 = vmatpush1.bf16.msra.mxu0 %v1064
    %1440 = vmatprep.subr.bf16.mxu0 %v1061
    %1441 = vmatpush1.bf16.msra.mxu0 %v1060
    %1442 = vmatprep.subr.bf16.mxu0 %v1057
    %1443 = vmatpush1.bf16.msra.mxu0 %v1056
    %1444 = vmatprep.subr.bf16.mxu0 %v1053
    %1445 = vmatpush1.bf16.msra.mxu0 %v1052
    %1446 = vmatprep.subr.bf16.mxu0 %v1049
    %1447 = vmatpush1.bf16.msra.mxu0 %v1048
    %1448 = vmatprep.subr.bf16.mxu0 %v1045
    %1449 = vmatpush1.bf16.msra.mxu0 %v1044
    %1450 = vmatprep.subr.bf16.mxu0 %v1041
    %1451 = vmatpush1.bf16.msra.mxu0 %v1040
    %1452 = vmatprep.subr.bf16.mxu0 %v1101
    %1453 = vmatpush2.bf16.msra.mxu0 %v1100
    %1454 = vmatprep.subr.bf16.mxu0 %v1097
    %1455 = vmatpush2.bf16.msra.mxu0 %v1096
    %1456 = vmatprep.subr.bf16.mxu0 %v1093
    %1457 = vmatpush2.bf16.msra.mxu0 %v1092
    %1458 = vmatprep.subr.bf16.mxu0 %v1089
    %1459 = vmatpush2.bf16.msra.mxu0 %v1088
    %1460 = vmatprep.subr.bf16.mxu0 %v1085
    %1461 = vmatpush2.bf16.msra.mxu0 %v1084
    %1462 = vmatprep.subr.bf16.mxu0 %v1081
    %1463 = vmatpush2.bf16.msra.mxu0 %v1080
    %1464 = vmatprep.subr.bf16.mxu0 %v1077
    %1465 = vmatpush2.bf16.msra.mxu0 %v1076
    %1466 = vmatprep.subr.bf16.mxu0 %v1073
    %1467 = vmatpush2.bf16.msra.mxu0 %v1072
    %1468 = vmatprep.mubr.bf16.mxu0 %v228
    %1469 = vmatmul.mubr.bf16.gmra.mxu0 %v227
    %v1470 = vpop.f32.mrf.mxu0
    %v1471 = vadd.f32 %v435, %v1470
    %v1472 = vpop.f32.mrf.mxu0
    %v1473 = vadd.f32 %v439, %v1472
    %v1474 = vpop.f32.mrf.mxu0
    %v1475 = vadd.f32 %v435, %v1474
    %v1476 = vpop.f32.mrf.mxu0
    %v1477 = vadd.f32 %v439, %v1476
    %1478 = vdwg.mxu0
    %1479 = vmatprep.subr.bf16.mxu0 %v1133
    %1480 = vmatpush1.bf16.msra.mxu0 %v1132
    %1481 = vmatprep.subr.bf16.mxu0 %v1129
    %1482 = vmatpush1.bf16.msra.mxu0 %v1128
    %1483 = vmatprep.subr.bf16.mxu0 %v1125
    %1484 = vmatpush1.bf16.msra.mxu0 %v1124
    %1485 = vmatprep.subr.bf16.mxu0 %v1121
    %1486 = vmatpush1.bf16.msra.mxu0 %v1120
    %1487 = vmatprep.subr.bf16.mxu0 %v1117
    %1488 = vmatpush1.bf16.msra.mxu0 %v1116
    %1489 = vmatprep.subr.bf16.mxu0 %v1113
    %1490 = vmatpush1.bf16.msra.mxu0 %v1112
    %1491 = vmatprep.subr.bf16.mxu0 %v1109
    %1492 = vmatpush1.bf16.msra.mxu0 %v1108
    %1493 = vmatprep.subr.bf16.mxu0 %v1105
    %1494 = vmatpush1.bf16.msra.mxu0 %v1104
    %1495 = vmatprep.subr.bf16.mxu0 %v1165
    %1496 = vmatpush2.bf16.msra.mxu0 %v1164
    %1497 = vmatprep.subr.bf16.mxu0 %v1161
    %1498 = vmatpush2.bf16.msra.mxu0 %v1160
    %1499 = vmatprep.subr.bf16.mxu0 %v1157
    %1500 = vmatpush2.bf16.msra.mxu0 %v1156
    %1501 = vmatprep.subr.bf16.mxu0 %v1153
    %1502 = vmatpush2.bf16.msra.mxu0 %v1152
    %1503 = vmatprep.subr.bf16.mxu0 %v1149
    %1504 = vmatpush2.bf16.msra.mxu0 %v1148
    %1505 = vmatprep.subr.bf16.mxu0 %v1145
    %1506 = vmatpush2.bf16.msra.mxu0 %v1144
    %1507 = vmatprep.subr.bf16.mxu0 %v1141
    %1508 = vmatpush2.bf16.msra.mxu0 %v1140
    %1509 = vmatprep.subr.bf16.mxu0 %v1137
    %1510 = vmatpush2.bf16.msra.mxu0 %v1136
    %1511 = vmatprep.mubr.bf16.mxu0 %v230
    %1512 = vmatmul.mubr.bf16.gmra.mxu0 %v229
    %v1513 = vpop.f32.mrf.mxu0
    %v1514 = vadd.f32 %v1471, %v1513
    %v1515 = vpop.f32.mrf.mxu0
    %v1516 = vadd.f32 %v1473, %v1515
    %v1517 = vpop.f32.mrf.mxu0
    %v1518 = vadd.f32 %v1475, %v1517
    %v1519 = vpop.f32.mrf.mxu0
    %v1520 = vadd.f32 %v1477, %v1519
    %1521 = vdwg.mxu0
    %1522 = vmatprep.subr.bf16.mxu0 %v1197
    %1523 = vmatpush1.bf16.msra.mxu0 %v1196
    %1524 = vmatprep.subr.bf16.mxu0 %v1193
    %1525 = vmatpush1.bf16.msra.mxu0 %v1192
    %1526 = vmatprep.subr.bf16.mxu0 %v1189
    %1527 = vmatpush1.bf16.msra.mxu0 %v1188
    %1528 = vmatprep.subr.bf16.mxu0 %v1185
    %1529 = vmatpush1.bf16.msra.mxu0 %v1184
    %1530 = vmatprep.subr.bf16.mxu0 %v1181
    %1531 = vmatpush1.bf16.msra.mxu0 %v1180
    %1532 = vmatprep.subr.bf16.mxu0 %v1177
    %1533 = vmatpush1.bf16.msra.mxu0 %v1176
    %1534 = vmatprep.subr.bf16.mxu0 %v1173
    %1535 = vmatpush1.bf16.msra.mxu0 %v1172
    %1536 = vmatprep.subr.bf16.mxu0 %v1169
    %1537 = vmatpush1.bf16.msra.mxu0 %v1168
    %1538 = vmatprep.subr.bf16.mxu0 %v1229
    %1539 = vmatpush2.bf16.msra.mxu0 %v1228
    %1540 = vmatprep.subr.bf16.mxu0 %v1225
    %1541 = vmatpush2.bf16.msra.mxu0 %v1224
    %1542 = vmatprep.subr.bf16.mxu0 %v1221
    %1543 = vmatpush2.bf16.msra.mxu0 %v1220
    %1544 = vmatprep.subr.bf16.mxu0 %v1217
    %1545 = vmatpush2.bf16.msra.mxu0 %v1216
    %1546 = vmatprep.subr.bf16.mxu0 %v1213
    %1547 = vmatpush2.bf16.msra.mxu0 %v1212
    %1548 = vmatprep.subr.bf16.mxu0 %v1209
    %1549 = vmatpush2.bf16.msra.mxu0 %v1208
    %1550 = vmatprep.subr.bf16.mxu0 %v1205
    %1551 = vmatpush2.bf16.msra.mxu0 %v1204
    %1552 = vmatprep.subr.bf16.mxu0 %v1201
    %1553 = vmatpush2.bf16.msra.mxu0 %v1200
    %1554 = vmatprep.mubr.bf16.mxu0 %v232
    %1555 = vmatmul.mubr.bf16.gmra.mxu0 %v231
    %v1556 = vpop.f32.mrf.mxu0
    %v1557 = vadd.f32 %v1514, %v1556
    %v1558 = vpop.f32.mrf.mxu0
    %v1559 = vadd.f32 %v1516, %v1558
    %v1560 = vpop.f32.mrf.mxu0
    %v1561 = vadd.f32 %v1518, %v1560
    %v1562 = vpop.f32.mrf.mxu0
    %v1563 = vadd.f32 %v1520, %v1562
    %1564 = vdwg.mxu0
    %1565 = vmatprep.subr.bf16.mxu0 0
    %1566 = vmatpush1.bf16.msra.mxu0 0
    %1567 = vmatprep.subr.bf16.mxu0 0
    %1568 = vmatpush1.bf16.msra.mxu0 0
    %1569 = vmatprep.subr.bf16.mxu0 0
    %1570 = vmatpush1.bf16.msra.mxu0 0
    %1571 = vmatprep.subr.bf16.mxu0 0
    %1572 = vmatpush1.bf16.msra.mxu0 0
    %1573 = vmatprep.subr.bf16.mxu0 0
    %1574 = vmatpush1.bf16.msra.mxu0 0
    %1575 = vmatprep.subr.bf16.mxu0 0
    %1576 = vmatpush1.bf16.msra.mxu0 0
    %1577 = vmatprep.subr.bf16.mxu0 0
    %1578 = vmatpush1.bf16.msra.mxu0 0
    %1579 = vmatprep.subr.bf16.mxu0 %v1233
    %1580 = vmatpush1.bf16.msra.mxu0 %v1232
    %1581 = vmatprep.subr.bf16.mxu0 0
    %1582 = vmatpush2.bf16.msra.mxu0 0
    %1583 = vmatprep.subr.bf16.mxu0 0
    %1584 = vmatpush2.bf16.msra.mxu0 0
    %1585 = vmatprep.subr.bf16.mxu0 0
    %1586 = vmatpush2.bf16.msra.mxu0 0
    %1587 = vmatprep.subr.bf16.mxu0 0
    %1588 = vmatpush2.bf16.msra.mxu0 0
    %1589 = vmatprep.subr.bf16.mxu0 0
    %1590 = vmatpush2.bf16.msra.mxu0 0
    %1591 = vmatprep.subr.bf16.mxu0 0
    %1592 = vmatpush2.bf16.msra.mxu0 0
    %1593 = vmatprep.subr.bf16.mxu0 0
    %1594 = vmatpush2.bf16.msra.mxu0 0
    %1595 = vmatprep.subr.bf16.mxu0 0
    %1596 = vmatpush2.bf16.msra.mxu0 0
    %1597 = vmatprep.mubr.bf16.mxu0 0
    %1598 = vmatmul.mubr.bf16.gmra.mxu0 %v1434
    %v1599 = vpop.f32.mrf.mxu0
    %v1600 = vadd.f32 %v1557, %v1599
    %v1601 = vpop.f32.mrf.mxu0
    %v1602 = vadd.f32 %v1559, %v1601
    %v1603 = vpop.f32.mrf.mxu0
    %v1604 = vadd.f32 %v1561, %v1603
    %v1605 = vpop.f32.mrf.mxu0
    %v1606 = vadd.f32 %v1563, %v1605
    %1607 = vdwg.mxu0
    %1608 = vmatprep.subr.bf16.mxu0 %v1071
    %1609 = vmatpush1.bf16.msra.mxu0 %v1070
    %1610 = vmatprep.subr.bf16.mxu0 %v1067
    %1611 = vmatpush1.bf16.msra.mxu0 %v1066
    %1612 = vmatprep.subr.bf16.mxu0 %v1063
    %1613 = vmatpush1.bf16.msra.mxu0 %v1062
    %1614 = vmatprep.subr.bf16.mxu0 %v1059
    %1615 = vmatpush1.bf16.msra.mxu0 %v1058
    %1616 = vmatprep.subr.bf16.mxu0 %v1055
    %1617 = vmatpush1.bf16.msra.mxu0 %v1054
    %1618 = vmatprep.subr.bf16.mxu0 %v1051
    %1619 = vmatpush1.bf16.msra.mxu0 %v1050
    %1620 = vmatprep.subr.bf16.mxu0 %v1047
    %1621 = vmatpush1.bf16.msra.mxu0 %v1046
    %1622 = vmatprep.subr.bf16.mxu0 %v1043
    %1623 = vmatpush1.bf16.msra.mxu0 %v1042
    %1624 = vmatprep.subr.bf16.mxu0 %v1103
    %1625 = vmatpush2.bf16.msra.mxu0 %v1102
    %1626 = vmatprep.subr.bf16.mxu0 %v1099
    %1627 = vmatpush2.bf16.msra.mxu0 %v1098
    %1628 = vmatprep.subr.bf16.mxu0 %v1095
    %1629 = vmatpush2.bf16.msra.mxu0 %v1094
    %1630 = vmatprep.subr.bf16.mxu0 %v1091
    %1631 = vmatpush2.bf16.msra.mxu0 %v1090
    %1632 = vmatprep.subr.bf16.mxu0 %v1087
    %1633 = vmatpush2.bf16.msra.mxu0 %v1086
    %1634 = vmatprep.subr.bf16.mxu0 %v1083
    %1635 = vmatpush2.bf16.msra.mxu0 %v1082
    %1636 = vmatprep.subr.bf16.mxu0 %v1079
    %1637 = vmatpush2.bf16.msra.mxu0 %v1078
    %1638 = vmatprep.subr.bf16.mxu0 %v1075
    %1639 = vmatpush2.bf16.msra.mxu0 %v1074
    %1640 = vmatprep.mubr.bf16.mxu0 %v228
    %1641 = vmatmul.mubr.bf16.gmra.mxu0 %v227
    %v1642 = vpop.f32.mrf.mxu0
    %v1643 = vadd.f32 %v443, %v1642
    %v1644 = vpop.f32.mrf.mxu0
    %v1645 = vadd.f32 %v447, %v1644
    %v1646 = vpop.f32.mrf.mxu0
    %v1647 = vadd.f32 %v443, %v1646
    %v1648 = vpop.f32.mrf.mxu0
    %v1649 = vadd.f32 %v447, %v1648
    %1650 = vdwg.mxu0
    %1651 = vmatprep.subr.bf16.mxu0 %v1135
    %1652 = vmatpush1.bf16.msra.mxu0 %v1134
    %1653 = vmatprep.subr.bf16.mxu0 %v1131
    %1654 = vmatpush1.bf16.msra.mxu0 %v1130
    %1655 = vmatprep.subr.bf16.mxu0 %v1127
    %1656 = vmatpush1.bf16.msra.mxu0 %v1126
    %1657 = vmatprep.subr.bf16.mxu0 %v1123
    %1658 = vmatpush1.bf16.msra.mxu0 %v1122
    %1659 = vmatprep.subr.bf16.mxu0 %v1119
    %1660 = vmatpush1.bf16.msra.mxu0 %v1118
    %1661 = vmatprep.subr.bf16.mxu0 %v1115
    %1662 = vmatpush1.bf16.msra.mxu0 %v1114
    %1663 = vmatprep.subr.bf16.mxu0 %v1111
    %1664 = vmatpush1.bf16.msra.mxu0 %v1110
    %1665 = vmatprep.subr.bf16.mxu0 %v1107
    %1666 = vmatpush1.bf16.msra.mxu0 %v1106
    %1667 = vmatprep.subr.bf16.mxu0 %v1167
    %1668 = vmatpush2.bf16.msra.mxu0 %v1166
    %1669 = vmatprep.subr.bf16.mxu0 %v1163
    %1670 = vmatpush2.bf16.msra.mxu0 %v1162
    %1671 = vmatprep.subr.bf16.mxu0 %v1159
    %1672 = vmatpush2.bf16.msra.mxu0 %v1158
    %1673 = vmatprep.subr.bf16.mxu0 %v1155
    %1674 = vmatpush2.bf16.msra.mxu0 %v1154
    %1675 = vmatprep.subr.bf16.mxu0 %v1151
    %1676 = vmatpush2.bf16.msra.mxu0 %v1150
    %1677 = vmatprep.subr.bf16.mxu0 %v1147
    %1678 = vmatpush2.bf16.msra.mxu0 %v1146
    %1679 = vmatprep.subr.bf16.mxu0 %v1143
    %1680 = vmatpush2.bf16.msra.mxu0 %v1142
    %1681 = vmatprep.subr.bf16.mxu0 %v1139
    %1682 = vmatpush2.bf16.msra.mxu0 %v1138
    %1683 = vmatprep.mubr.bf16.mxu0 %v230
    %1684 = vmatmul.mubr.bf16.gmra.mxu0 %v229
    %v1685 = vpop.f32.mrf.mxu0
    %v1686 = vadd.f32 %v1643, %v1685
    %v1687 = vpop.f32.mrf.mxu0
    %v1688 = vadd.f32 %v1645, %v1687
    %v1689 = vpop.f32.mrf.mxu0
    %v1690 = vadd.f32 %v1647, %v1689
    %v1691 = vpop.f32.mrf.mxu0
    %v1692 = vadd.f32 %v1649, %v1691
    %1693 = vdwg.mxu0
    %1694 = vmatprep.subr.bf16.mxu0 %v1199
    %1695 = vmatpush1.bf16.msra.mxu0 %v1198
    %1696 = vmatprep.subr.bf16.mxu0 %v1195
    %1697 = vmatpush1.bf16.msra.mxu0 %v1194
    %1698 = vmatprep.subr.bf16.mxu0 %v1191
    %1699 = vmatpush1.bf16.msra.mxu0 %v1190
    %1700 = vmatprep.subr.bf16.mxu0 %v1187
    %1701 = vmatpush1.bf16.msra.mxu0 %v1186
    %1702 = vmatprep.subr.bf16.mxu0 %v1183
    %1703 = vmatpush1.bf16.msra.mxu0 %v1182
    %1704 = vmatprep.subr.bf16.mxu0 %v1179
    %1705 = vmatpush1.bf16.msra.mxu0 %v1178
    %1706 = vmatprep.subr.bf16.mxu0 %v1175
    %1707 = vmatpush1.bf16.msra.mxu0 %v1174
    %1708 = vmatprep.subr.bf16.mxu0 %v1171
    %1709 = vmatpush1.bf16.msra.mxu0 %v1170
    %1710 = vmatprep.subr.bf16.mxu0 %v1231
    %1711 = vmatpush2.bf16.msra.mxu0 %v1230
    %1712 = vmatprep.subr.bf16.mxu0 %v1227
    %1713 = vmatpush2.bf16.msra.mxu0 %v1226
    %1714 = vmatprep.subr.bf16.mxu0 %v1223
    %1715 = vmatpush2.bf16.msra.mxu0 %v1222
    %1716 = vmatprep.subr.bf16.mxu0 %v1219
    %1717 = vmatpush2.bf16.msra.mxu0 %v1218
    %1718 = vmatprep.subr.bf16.mxu0 %v1215
    %1719 = vmatpush2.bf16.msra.mxu0 %v1214
    %1720 = vmatprep.subr.bf16.mxu0 %v1211
    %1721 = vmatpush2.bf16.msra.mxu0 %v1210
    %1722 = vmatprep.subr.bf16.mxu0 %v1207
    %1723 = vmatpush2.bf16.msra.mxu0 %v1206
    %1724 = vmatprep.subr.bf16.mxu0 %v1203
    %1725 = vmatpush2.bf16.msra.mxu0 %v1202
    %1726 = vmatprep.mubr.bf16.mxu0 %v232
    %1727 = vmatmul.mubr.bf16.gmra.mxu0 %v231
    %v1728 = vpop.f32.mrf.mxu0
    %v1729 = vadd.f32 %v1686, %v1728
    %v1730 = vpop.f32.mrf.mxu0
    %v1731 = vadd.f32 %v1688, %v1730
    %v1732 = vpop.f32.mrf.mxu0
    %v1733 = vadd.f32 %v1690, %v1732
    %v1734 = vpop.f32.mrf.mxu0
    %v1735 = vadd.f32 %v1692, %v1734
    %1736 = vdwg.mxu0
    %1737 = vmatprep.subr.bf16.mxu0 0
    %1738 = vmatpush1.bf16.msra.mxu0 0
    %1739 = vmatprep.subr.bf16.mxu0 0
    %1740 = vmatpush1.bf16.msra.mxu0 0
    %1741 = vmatprep.subr.bf16.mxu0 0
    %1742 = vmatpush1.bf16.msra.mxu0 0
    %1743 = vmatprep.subr.bf16.mxu0 0
    %1744 = vmatpush1.bf16.msra.mxu0 0
    %1745 = vmatprep.subr.bf16.mxu0 0
    %1746 = vmatpush1.bf16.msra.mxu0 0
    %1747 = vmatprep.subr.bf16.mxu0 0
    %1748 = vmatpush1.bf16.msra.mxu0 0
    %1749 = vmatprep.subr.bf16.mxu0 0
    %1750 = vmatpush1.bf16.msra.mxu0 0
    %1751 = vmatprep.subr.bf16.mxu0 %v1235
    %1752 = vmatpush1.bf16.msra.mxu0 %v1234
    %1753 = vmatprep.subr.bf16.mxu0 0
    %1754 = vmatpush2.bf16.msra.mxu0 0
    %1755 = vmatprep.subr.bf16.mxu0 0
    %1756 = vmatpush2.bf16.msra.mxu0 0
    %1757 = vmatprep.subr.bf16.mxu0 0
    %1758 = vmatpush2.bf16.msra.mxu0 0
    %1759 = vmatprep.subr.bf16.mxu0 0
    %1760 = vmatpush2.bf16.msra.mxu0 0
    %1761 = vmatprep.subr.bf16.mxu0 0
    %1762 = vmatpush2.bf16.msra.mxu0 0
    %1763 = vmatprep.subr.bf16.mxu0 0
    %1764 = vmatpush2.bf16.msra.mxu0 0
    %1765 = vmatprep.subr.bf16.mxu0 0
    %1766 = vmatpush2.bf16.msra.mxu0 0
    %1767 = vmatprep.subr.bf16.mxu0 0
    %1768 = vmatpush2.bf16.msra.mxu0 0
    %1769 = vmatprep.mubr.bf16.mxu0 0
    %1770 = vmatmul.mubr.bf16.gmra.mxu0 %v1434
    %v1771 = vpop.f32.mrf.mxu0
    %v1772 = vadd.f32 %v1729, %v1771
    %v1773 = vpop.f32.mrf.mxu0
    %v1774 = vadd.f32 %v1731, %v1773
    %v1775 = vpop.f32.mrf.mxu0
    %v1776 = vadd.f32 %v1733, %v1775
    %v1777 = vpop.f32.mrf.mxu0
    %v1778 = vadd.f32 %v1735, %v1777
    %1779 = vdwg.mxu0
    %v1780 = vmax.f32 %v1600, 0.0
    %v1781 = vmax.f32 %v1602, 0.0
    %v1782 = vmax.f32 %v1772, 0.0
    %v1783 = vmax.f32 %v1774, 0.0
    %v1784 = vmax.f32 %v1604, 0.0
    %v1785 = vmax.f32 %v1606, 0.0
    %v1786 = vmax.f32 %v1776, 0.0
    %v1787 = vmax.f32 %v1778, 0.0
    %v1788 = vpack.c.bf16 %v1784, %v1780
    %v1789 = vpack.c.bf16 %v1785, %v1781
    %v1790 = vpack.c.bf16 %v1786, %v1782
    %v1791 = vpack.c.bf16 %v1787, %v1783
    %v1792 = vld [vmem:[%s4] sm:$0xf]
    %v1793 = vld [vmem:[%s4 + $0x4] sm:$0xf]
    %v1794 = vld [vmem:[%s4 + $0x8] sm:$0xf]
    %v1795 = vld [vmem:[%s4 + $0xc] sm:$0xf]
    %v1796 = vld [vmem:[%s4 + $0x10] sm:$0xf]
    %v1797 = vld [vmem:[%s4 + $0x14] sm:$0xf]
    %v1798 = vld [vmem:[%s4 + $0x18] sm:$0xf]
    %v1799 = vld [vmem:[%s4 + $0x1c] sm:$0xf]
    %v1800 = vld [vmem:[%s4 + $0x20] sm:$0xf]
    %v1801 = vld [vmem:[%s4 + $0x24] sm:$0xf]
    %v1802 = vld [vmem:[%s4 + $0x28] sm:$0xf]
    %v1803 = vld [vmem:[%s4 + $0x2c] sm:$0xf]
    %v1804 = vld [vmem:[%s4 + $0x30] sm:$0xf]
    %v1805 = vld [vmem:[%s4 + $0x34] sm:$0xf]
    %v1806 = vld [vmem:[%s4 + $0x38] sm:$0xf]
    %v1807 = vld [vmem:[%s4 + $0x3c] sm:$0xf]
    %v1808 = vld [vmem:[%s4 + $0x40] sm:$0xf]
    %v1809 = vld [vmem:[%s4 + $0x44] sm:$0xf]
    %v1810 = vld [vmem:[%s4 + $0x48] sm:$0xf]
    %v1811 = vld [vmem:[%s4 + $0x4c] sm:$0xf]
    %v1812 = vld [vmem:[%s4 + $0x50] sm:$0xf]
    %v1813 = vld [vmem:[%s4 + $0x54] sm:$0xf]
    %v1814 = vld [vmem:[%s4 + $0x58] sm:$0xf]
    %v1815 = vld [vmem:[%s4 + $0x5c] sm:$0xf]
    %v1816 = vld [vmem:[%s4 + $0x60] sm:$0xf]
    %v1817 = vld [vmem:[%s4 + $0x64] sm:$0xf]
    %v1818 = vld [vmem:[%s4 + $0x68] sm:$0xf]
    %v1819 = vld [vmem:[%s4 + $0x6c] sm:$0xf]
    %v1820 = vld [vmem:[%s4 + $0x70] sm:$0xf]
    %v1821 = vld [vmem:[%s4 + $0x74] sm:$0xf]
    %v1822 = vld [vmem:[%s4 + $0x78] sm:$0xf]
    %v1823 = vld [vmem:[%s4 + $0x7c] sm:$0xf]
    %v1824 = vld [vmem:[%s4 + $0x80] sm:$0xf]
    %v1825 = vld [vmem:[%s4 + $0x84] sm:$0xf]
    %v1826 = vld [vmem:[%s4 + $0x88] sm:$0xf]
    %v1827 = vld [vmem:[%s4 + $0x8c] sm:$0xf]
    %v1828 = vld [vmem:[%s4 + $0x90] sm:$0xf]
    %v1829 = vld [vmem:[%s4 + $0x94] sm:$0xf]
    %v1830 = vld [vmem:[%s4 + $0x98] sm:$0xf]
    %v1831 = vld [vmem:[%s4 + $0x9c] sm:$0xf]
    %v1832 = vld [vmem:[%s4 + $0xa0] sm:$0xf]
    %v1833 = vld [vmem:[%s4 + $0xa4] sm:$0xf]
    %v1834 = vld [vmem:[%s4 + $0xa8] sm:$0xf]
    %v1835 = vld [vmem:[%s4 + $0xac] sm:$0xf]
    %v1836 = vld [vmem:[%s4 + $0xb0] sm:$0xf]
    %v1837 = vld [vmem:[%s4 + $0xb4] sm:$0xf]
    %v1838 = vld [vmem:[%s4 + $0xb8] sm:$0xf]
    %v1839 = vld [vmem:[%s4 + $0xbc] sm:$0xf]
    %v1840 = vld [vmem:[%s4 + $0xc0] sm:$0xf]
    %v1841 = vld [vmem:[%s4 + $0xc4] sm:$0xf]
    %v1842 = vld [vmem:[%s4 + $0xc8] sm:$0xf]
    %v1843 = vld [vmem:[%s4 + $0xcc] sm:$0xf]
    %v1844 = vld [vmem:[%s4 + $0xd0] sm:$0xf]
    %v1845 = vld [vmem:[%s4 + $0xd4] sm:$0xf]
    %v1846 = vld [vmem:[%s4 + $0xd8] sm:$0xf]
    %v1847 = vld [vmem:[%s4 + $0xdc] sm:$0xf]
    %v1848 = vld [vmem:[%s4 + $0xe0] sm:$0xf]
    %v1849 = vld [vmem:[%s4 + $0xe4] sm:$0xf]
    %v1850 = vld [vmem:[%s4 + $0xe8] sm:$0xf]
    %v1851 = vld [vmem:[%s4 + $0xec] sm:$0xf]
    %v1852 = vld [vmem:[%s4 + $0xf0] sm:$0xf]
    %v1853 = vld [vmem:[%s4 + $0xf4] sm:$0xf]
    %v1854 = vld [vmem:[%s4 + $0xf8] sm:$0xf]
    %v1855 = vld [vmem:[%s4 + $0xfc] sm:$0xf]
    %v1856 = vld [vmem:[%s5] sm:$0x1]
    %v1858 = vlaneseq
    %v1859 = vshrl.u32 %v1858, 7
    %v1860 = vsub.s32 0, %v1859
    %v1861 = vrot.slane %v1856, %v1860
    %v1927 = vunpack.c.l.b16 %v1792
    %v1928 = vunpack.c.l.b16 %v1793
    %v1929 = vunpack.c.l.b16 %v1794
    %v1930 = vunpack.c.l.b16 %v1795
    %v1931 = vunpack.c.l.b16 %v1796
    %v1932 = vunpack.c.l.b16 %v1797
    %v1933 = vunpack.c.l.b16 %v1798
    %v1934 = vunpack.c.l.b16 %v1799
    %v1935 = vunpack.c.l.b16 %v1800
    %v1936 = vunpack.c.l.b16 %v1801
    %v1937 = vunpack.c.l.b16 %v1802
    %v1938 = vunpack.c.l.b16 %v1803
    %v1939 = vunpack.c.l.b16 %v1804
    %v1940 = vunpack.c.l.b16 %v1805
    %v1941 = vunpack.c.l.b16 %v1806
    %v1942 = vunpack.c.l.b16 %v1807
    %v1943 = vunpack.c.l.b16 %v1808
    %v1944 = vunpack.c.l.b16 %v1809
    %v1945 = vunpack.c.l.b16 %v1810
    %v1946 = vunpack.c.l.b16 %v1811
    %v1947 = vunpack.c.l.b16 %v1812
    %v1948 = vunpack.c.l.b16 %v1813
    %v1949 = vunpack.c.l.b16 %v1814
    %v1950 = vunpack.c.l.b16 %v1815
    %v1951 = vunpack.c.l.b16 %v1816
    %v1952 = vunpack.c.l.b16 %v1817
    %v1953 = vunpack.c.l.b16 %v1818
    %v1954 = vunpack.c.l.b16 %v1819
    %v1955 = vunpack.c.l.b16 %v1820
    %v1956 = vunpack.c.l.b16 %v1821
    %v1957 = vunpack.c.l.b16 %v1822
    %v1958 = vunpack.c.l.b16 %v1823
    %v1959 = vunpack.c.l.b16 %v1824
    %v1960 = vunpack.c.l.b16 %v1825
    %v1961 = vunpack.c.l.b16 %v1826
    %v1962 = vunpack.c.l.b16 %v1827
    %v1963 = vunpack.c.l.b16 %v1828
    %v1964 = vunpack.c.l.b16 %v1829
    %v1965 = vunpack.c.l.b16 %v1830
    %v1966 = vunpack.c.l.b16 %v1831
    %v1967 = vunpack.c.l.b16 %v1832
    %v1968 = vunpack.c.l.b16 %v1833
    %v1969 = vunpack.c.l.b16 %v1834
    %v1970 = vunpack.c.l.b16 %v1835
    %v1971 = vunpack.c.l.b16 %v1836
    %v1972 = vunpack.c.l.b16 %v1837
    %v1973 = vunpack.c.l.b16 %v1838
    %v1974 = vunpack.c.l.b16 %v1839
    %v1975 = vunpack.c.l.b16 %v1840
    %v1976 = vunpack.c.l.b16 %v1841
    %v1977 = vunpack.c.l.b16 %v1842
    %v1978 = vunpack.c.l.b16 %v1843
    %v1979 = vunpack.c.l.b16 %v1844
    %v1980 = vunpack.c.l.b16 %v1845
    %v1981 = vunpack.c.l.b16 %v1846
    %v1982 = vunpack.c.l.b16 %v1847
    %v1983 = vunpack.c.l.b16 %v1848
    %v1984 = vunpack.c.l.b16 %v1849
    %v1985 = vunpack.c.l.b16 %v1850
    %v1986 = vunpack.c.l.b16 %v1851
    %v1987 = vunpack.c.l.b16 %v1852
    %v1988 = vunpack.c.l.b16 %v1853
    %v1989 = vunpack.c.l.b16 %v1854
    %v1990 = vunpack.c.l.b16 %v1855
    %v1991 = vpack.c.b16 %v1928, %v1927
    %v1992 = vpack.c.b16 %v1930, %v1929
    %v1993 = vpack.c.b16 %v1932, %v1931
    %v1994 = vpack.c.b16 %v1934, %v1933
    %v1995 = vpack.c.b16 %v1936, %v1935
    %v1996 = vpack.c.b16 %v1938, %v1937
    %v1997 = vpack.c.b16 %v1940, %v1939
    %v1998 = vpack.c.b16 %v1942, %v1941
    %v1999 = vpack.c.b16 %v1944, %v1943
    %v2000 = vpack.c.b16 %v1946, %v1945
    %v2001 = vpack.c.b16 %v1948, %v1947
    %v2002 = vpack.c.b16 %v1950, %v1949
    %v2003 = vpack.c.b16 %v1952, %v1951
    %v2004 = vpack.c.b16 %v1954, %v1953
    %v2005 = vpack.c.b16 %v1956, %v1955
    %v2006 = vpack.c.b16 %v1958, %v1957
    %v2007 = vpack.c.b16 %v1960, %v1959
    %v2008 = vpack.c.b16 %v1962, %v1961
    %v2009 = vpack.c.b16 %v1964, %v1963
    %v2010 = vpack.c.b16 %v1966, %v1965
    %v2011 = vpack.c.b16 %v1968, %v1967
    %v2012 = vpack.c.b16 %v1970, %v1969
    %v2013 = vpack.c.b16 %v1972, %v1971
    %v2014 = vpack.c.b16 %v1974, %v1973
    %v2015 = vpack.c.b16 %v1976, %v1975
    %v2016 = vpack.c.b16 %v1978, %v1977
    %v2017 = vpack.c.b16 %v1980, %v1979
    %v2018 = vpack.c.b16 %v1982, %v1981
    %v2019 = vpack.c.b16 %v1984, %v1983
    %v2020 = vpack.c.b16 %v1986, %v1985
    %v2021 = vpack.c.b16 %v1988, %v1987
    %v2022 = vpack.c.b16 %v1990, %v1989
    %2055 = vmatprep.subr.bf16.mxu0 0
    %2056 = vmatpush1.bf16.msra.mxu0 %v1998
    %2057 = vmatprep.subr.bf16.mxu0 0
    %2058 = vmatpush1.bf16.msra.mxu0 %v1997
    %2059 = vmatprep.subr.bf16.mxu0 0
    %2060 = vmatpush1.bf16.msra.mxu0 %v1996
    %2061 = vmatprep.subr.bf16.mxu0 0
    %2062 = vmatpush1.bf16.msra.mxu0 %v1995
    %2063 = vmatprep.subr.bf16.mxu0 0
    %2064 = vmatpush1.bf16.msra.mxu0 %v1994
    %2065 = vmatprep.subr.bf16.mxu0 0
    %2066 = vmatpush1.bf16.msra.mxu0 %v1993
    %2067 = vmatprep.subr.bf16.mxu0 0
    %2068 = vmatpush1.bf16.msra.mxu0 %v1992
    %2069 = vmatprep.subr.bf16.mxu0 0
    %2070 = vmatpush1.bf16.msra.mxu0 %v1991
    %2071 = vmatprep.subr.bf16.mxu0 0
    %2072 = vmatpush2.bf16.msra.mxu0 %v2006
    %2073 = vmatprep.subr.bf16.mxu0 0
    %2074 = vmatpush2.bf16.msra.mxu0 %v2005
    %2075 = vmatprep.subr.bf16.mxu0 0
    %2076 = vmatpush2.bf16.msra.mxu0 %v2004
    %2077 = vmatprep.subr.bf16.mxu0 0
    %2078 = vmatpush2.bf16.msra.mxu0 %v2003
    %2079 = vmatprep.subr.bf16.mxu0 0
    %2080 = vmatpush2.bf16.msra.mxu0 %v2002
    %2081 = vmatprep.subr.bf16.mxu0 0
    %2082 = vmatpush2.bf16.msra.mxu0 %v2001
    %2083 = vmatprep.subr.bf16.mxu0 0
    %2084 = vmatpush2.bf16.msra.mxu0 %v2000
    %2085 = vmatprep.subr.bf16.mxu0 0
    %2086 = vmatpush2.bf16.msra.mxu0 %v1999
    %2087 = vmatprep.mubr.bf16.mxu0 %v1789
    %2088 = vmatmul.mubr.bf16.gmra.mxu0 %v1788
    %v2089 = vpop.f32.mrf.mxu0
    %v2090 = vadd.f32 %v1861, %v2089
    %v2091 = vpop.f32.mrf.mxu0
    %v2092 = vpop.f32.mrf.mxu0
    %v2093 = vadd.f32 %v1861, %v2092
    %v2094 = vpop.f32.mrf.mxu0
    %2095 = vdwg.mxu0
    %2096 = vmatprep.subr.bf16.mxu0 0
    %2097 = vmatpush1.bf16.msra.mxu0 %v2014
    %2098 = vmatprep.subr.bf16.mxu0 0
    %2099 = vmatpush1.bf16.msra.mxu0 %v2013
    %2100 = vmatprep.subr.bf16.mxu0 0
    %2101 = vmatpush1.bf16.msra.mxu0 %v2012
    %2102 = vmatprep.subr.bf16.mxu0 0
    %2103 = vmatpush1.bf16.msra.mxu0 %v2011
    %2104 = vmatprep.subr.bf16.mxu0 0
    %2105 = vmatpush1.bf16.msra.mxu0 %v2010
    %2106 = vmatprep.subr.bf16.mxu0 0
    %2107 = vmatpush1.bf16.msra.mxu0 %v2009
    %2108 = vmatprep.subr.bf16.mxu0 0
    %2109 = vmatpush1.bf16.msra.mxu0 %v2008
    %2110 = vmatprep.subr.bf16.mxu0 0
    %2111 = vmatpush1.bf16.msra.mxu0 %v2007
    %2112 = vmatprep.subr.bf16.mxu0 0
    %2113 = vmatpush2.bf16.msra.mxu0 %v2022
    %2114 = vmatprep.subr.bf16.mxu0 0
    %2115 = vmatpush2.bf16.msra.mxu0 %v2021
    %2116 = vmatprep.subr.bf16.mxu0 0
    %2117 = vmatpush2.bf16.msra.mxu0 %v2020
    %2118 = vmatprep.subr.bf16.mxu0 0
    %2119 = vmatpush2.bf16.msra.mxu0 %v2019
    %2120 = vmatprep.subr.bf16.mxu0 0
    %2121 = vmatpush2.bf16.msra.mxu0 %v2018
    %2122 = vmatprep.subr.bf16.mxu0 0
    %2123 = vmatpush2.bf16.msra.mxu0 %v2017
    %2124 = vmatprep.subr.bf16.mxu0 0
    %2125 = vmatpush2.bf16.msra.mxu0 %v2016
    %2126 = vmatprep.subr.bf16.mxu0 0
    %2127 = vmatpush2.bf16.msra.mxu0 %v2015
    %2128 = vmatprep.mubr.bf16.mxu0 %v1791
    %2129 = vmatmul.mubr.bf16.gmra.mxu0 %v1790
    %v2130 = vpop.f32.mrf.mxu0
    %v2131 = vadd.f32 %v2090, %v2130
    %v2132 = vpop.f32.mrf.mxu0
    %v2133 = vpop.f32.mrf.mxu0
    %v2134 = vadd.f32 %v2093, %v2133
    %v2135 = vpop.f32.mrf.mxu0
    %2136 = vdwg.mxu0
    %vm2137 = vcmask 261120
    %2138 = vst.msk [vmem:[#allocation4] sm:$0xff] %vm2137, %v2131
    %2139 = vst.msk [vmem:[#allocation4 + $0x8] sm:$0xff] %vm2137, %v2134
    %v2140 = vld [vmem:[%s1] sm:$0xff]
    %v2141 = vld [vmem:[%s1 + $0x8] sm:$0xff]
    %v2142 = vmul.f32 %v2131, 0.5
    %v2143 = vmul.f32 %v2134, 0.5
    %v2144 = vmul.f32 %v2142, 1.442695
    %v2145 = vpow.pop %v2144
    %v2146 = vmul.f32 %v2143, 1.442695
    %v2147 = vpow.pop %v2146
    %2150 = vrot.lane.b32.xlu0 %v2145, 112
    %v2151 = vpop.permute.xlu0 %2150
    %2152 = vrot.lane.b32.xlu0 %v2147, 112
    %v2153 = vpop.permute.xlu0 %2152
    %v2156 = vmul.f32 %v2140, %v2151
    %v2157 = vmul.f32 %v2141, %v2153
    %v2158 = vadd.f32 %v2131, %v2156
    %v2159 = vadd.f32 %v2134, %v2157
    %v2160 = vpack.c.bf16 %v2159, %v2158
    %v2161 = vld [vmem:[%s6] sm:$0xff]
    %v2162 = vld [vmem:[%s6 + $0x8] sm:$0xff]
    %v2163 = vld [vmem:[%s6 + $0x10] sm:$0xff]
    %v2164 = vld [vmem:[%s6 + $0x18] sm:$0xff]
    %v2165 = vld [vmem:[%s7] sm:$0xf]
    %v2167 = vlaneseq
    %v2168 = vshrl.u32 %v2167, 7
    %v2169 = vsub.s32 0, %v2168
    %v2170 = vrot.slane %v2165, %v2169
    %v2171 = vlaneseq
    %v2172 = vshrl.u32 %v2171, 7
    %v2173 = vsub.s32 1, %v2172
    %v2174 = vrot.slane %v2165, %v2173
    %v2175 = vlaneseq
    %v2176 = vshrl.u32 %v2175, 7
    %v2177 = vsub.s32 2, %v2176
    %v2178 = vrot.slane %v2165, %v2177
    %v2179 = vlaneseq
    %v2180 = vshrl.u32 %v2179, 7
    %v2181 = vsub.s32 3, %v2180
    %v2182 = vrot.slane %v2165, %v2181
    %v2191 = vunpack.c.l.b16 %v2161
    %v2192 = vunpack.c.h.b16 %v2161
    %v2193 = vunpack.c.l.b16 %v2162
    %v2194 = vunpack.c.h.b16 %v2162
    %v2195 = vunpack.c.l.b16 %v2163
    %v2196 = vunpack.c.h.b16 %v2163
    %v2197 = vunpack.c.l.b16 %v2164
    %v2198 = vunpack.c.h.b16 %v2164
    %v2199 = vpack.c.b16 %v2195, %v2191
    %v2200 = vpack.c.b16 %v2196, %v2192
    %v2201 = vpack.c.b16 %v2197, %v2193
    %v2202 = vpack.c.b16 %v2198, %v2194
    %v2208 = vsel %vm1432, %v2160, 0
    %2210 = vmatprep.subr.bf16.mxu0 0
    %2211 = vmatpush1.bf16.msra.mxu0 0
    %2212 = vmatprep.subr.bf16.mxu0 0
    %2213 = vmatpush1.bf16.msra.mxu0 0
    %2214 = vmatprep.subr.bf16.mxu0 0
    %2215 = vmatpush1.bf16.msra.mxu0 0
    %2216 = vmatprep.subr.bf16.mxu0 0
    %2217 = vmatpush1.bf16.msra.mxu0 0
    %2218 = vmatprep.subr.bf16.mxu0 0
    %2219 = vmatpush1.bf16.msra.mxu0 0
    %2220 = vmatprep.subr.bf16.mxu0 0
    %2221 = vmatpush1.bf16.msra.mxu0 0
    %2222 = vmatprep.subr.bf16.mxu0 0
    %2223 = vmatpush1.bf16.msra.mxu0 0
    %2224 = vmatprep.subr.bf16.mxu0 %v2200
    %2225 = vmatpush1.bf16.msra.mxu0 %v2199
    %2226 = vmatprep.subr.bf16.mxu0 0
    %2227 = vmatpush2.bf16.msra.mxu0 0
    %2228 = vmatprep.subr.bf16.mxu0 0
    %2229 = vmatpush2.bf16.msra.mxu0 0
    %2230 = vmatprep.subr.bf16.mxu0 0
    %2231 = vmatpush2.bf16.msra.mxu0 0
    %2232 = vmatprep.subr.bf16.mxu0 0
    %2233 = vmatpush2.bf16.msra.mxu0 0
    %2234 = vmatprep.subr.bf16.mxu0 0
    %2235 = vmatpush2.bf16.msra.mxu0 0
    %2236 = vmatprep.subr.bf16.mxu0 0
    %2237 = vmatpush2.bf16.msra.mxu0 0
    %2238 = vmatprep.subr.bf16.mxu0 0
    %2239 = vmatpush2.bf16.msra.mxu0 0
    %2240 = vmatprep.subr.bf16.mxu0 0
    %2241 = vmatpush2.bf16.msra.mxu0 0
    %2242 = vmatprep.mubr.bf16.mxu0 0
    %2243 = vmatmul.mubr.bf16.gmra.mxu0 %v2208
    %v2244 = vpop.f32.mrf.mxu0
    %v2245 = vadd.f32 %v2170, %v2244
    %v2246 = vpop.f32.mrf.mxu0
    %v2247 = vadd.f32 %v2174, %v2246
    %v2248 = vpop.f32.mrf.mxu0
    %v2249 = vadd.f32 %v2170, %v2248
    %v2250 = vpop.f32.mrf.mxu0
    %v2251 = vadd.f32 %v2174, %v2250
    %2252 = vdwg.mxu0
    %2253 = vmatprep.subr.bf16.mxu0 0
    %2254 = vmatpush1.bf16.msra.mxu0 0
    %2255 = vmatprep.subr.bf16.mxu0 0
    %2256 = vmatpush1.bf16.msra.mxu0 0
    %2257 = vmatprep.subr.bf16.mxu0 0
    %2258 = vmatpush1.bf16.msra.mxu0 0
    %2259 = vmatprep.subr.bf16.mxu0 0
    %2260 = vmatpush1.bf16.msra.mxu0 0
    %2261 = vmatprep.subr.bf16.mxu0 0
    %2262 = vmatpush1.bf16.msra.mxu0 0
    %2263 = vmatprep.subr.bf16.mxu0 0
    %2264 = vmatpush1.bf16.msra.mxu0 0
    %2265 = vmatprep.subr.bf16.mxu0 0
    %2266 = vmatpush1.bf16.msra.mxu0 0
    %2267 = vmatprep.subr.bf16.mxu0 %v2202
    %2268 = vmatpush1.bf16.msra.mxu0 %v2201
    %2269 = vmatprep.subr.bf16.mxu0 0
    %2270 = vmatpush2.bf16.msra.mxu0 0
    %2271 = vmatprep.subr.bf16.mxu0 0
    %2272 = vmatpush2.bf16.msra.mxu0 0
    %2273 = vmatprep.subr.bf16.mxu0 0
    %2274 = vmatpush2.bf16.msra.mxu0 0
    %2275 = vmatprep.subr.bf16.mxu0 0
    %2276 = vmatpush2.bf16.msra.mxu0 0
    %2277 = vmatprep.subr.bf16.mxu0 0
    %2278 = vmatpush2.bf16.msra.mxu0 0
    %2279 = vmatprep.subr.bf16.mxu0 0
    %2280 = vmatpush2.bf16.msra.mxu0 0
    %2281 = vmatprep.subr.bf16.mxu0 0
    %2282 = vmatpush2.bf16.msra.mxu0 0
    %2283 = vmatprep.subr.bf16.mxu0 0
    %2284 = vmatpush2.bf16.msra.mxu0 0
    %2285 = vmatprep.mubr.bf16.mxu0 0
    %2286 = vmatmul.mubr.bf16.gmra.mxu0 %v2208
    %v2287 = vpop.f32.mrf.mxu0
    %v2288 = vadd.f32 %v2178, %v2287
    %v2289 = vpop.f32.mrf.mxu0
    %v2290 = vadd.f32 %v2182, %v2289
    %v2291 = vpop.f32.mrf.mxu0
    %v2292 = vadd.f32 %v2178, %v2291
    %v2293 = vpop.f32.mrf.mxu0
    %v2294 = vadd.f32 %v2182, %v2293
    %2295 = vdwg.mxu0
    %v2296 = vmax.f32 %v2245, 0.0
    %v2297 = vmax.f32 %v2247, 0.0
    %v2298 = vmax.f32 %v2288, 0.0
    %v2299 = vmax.f32 %v2290, 0.0
    %v2300 = vmax.f32 %v2249, 0.0
    %v2301 = vmax.f32 %v2251, 0.0
    %v2302 = vmax.f32 %v2292, 0.0
    %v2303 = vmax.f32 %v2294, 0.0
    %v2304 = vpack.c.bf16 %v2300, %v2296
    %v2305 = vpack.c.bf16 %v2301, %v2297
    %v2306 = vpack.c.bf16 %v2302, %v2298
    %v2307 = vpack.c.bf16 %v2303, %v2299
    %v2308 = vld [vmem:[%s8] sm:$0xff]
    %v2309 = vld [vmem:[%s8 + $0x8] sm:$0xff]
    %v2310 = vld [vmem:[%s8 + $0x10] sm:$0xff]
    %v2311 = vld [vmem:[%s8 + $0x18] sm:$0xf]
    %v2312 = vld [vmem:[%s8 + $0x1c] sm:$0xff]
    %v2313 = vld [vmem:[%s8 + $0x24] sm:$0xff]
    %v2314 = vld [vmem:[%s8 + $0x2c] sm:$0xff]
    %v2315 = vld [vmem:[%s8 + $0x34] sm:$0xf]
    %v2316 = vld [vmem:[%s8 + $0x38] sm:$0xff]
    %v2317 = vld [vmem:[%s8 + $0x40] sm:$0xff]
    %v2318 = vld [vmem:[%s8 + $0x48] sm:$0xff]
    %v2319 = vld [vmem:[%s8 + $0x50] sm:$0xf]
    %v2320 = vld [vmem:[%s8 + $0x54] sm:$0xff]
    %v2321 = vld [vmem:[%s8 + $0x5c] sm:$0xff]
    %v2322 = vld [vmem:[%s8 + $0x64] sm:$0xff]
    %v2323 = vld [vmem:[%s8 + $0x6c] sm:$0xf]
    %v2324 = vld [vmem:[%s8 + $0x70] sm:$0xff]
    %v2325 = vld [vmem:[%s8 + $0x78] sm:$0xff]
    %v2326 = vld [vmem:[%s8 + $0x80] sm:$0xff]
    %v2327 = vld [vmem:[%s8 + $0x88] sm:$0xf]
    %v2328 = vld [vmem:[%s8 + $0x8c] sm:$0xff]
    %v2329 = vld [vmem:[%s8 + $0x94] sm:$0xff]
    %v2330 = vld [vmem:[%s8 + $0x9c] sm:$0xff]
    %v2331 = vld [vmem:[%s8 + $0xa4] sm:$0xf]
    %v2332 = vld [vmem:[%s8 + $0xa8] sm:$0xff]
    %v2333 = vld [vmem:[%s8 + $0xb0] sm:$0xff]
    %v2334 = vld [vmem:[%s8 + $0xb8] sm:$0xff]
    %v2335 = vld [vmem:[%s8 + $0xc0] sm:$0xf]
    %v2336 = vld [vmem:[%s8 + $0xc4] sm:$0xff]
    %v2337 = vld [vmem:[%s8 + $0xcc] sm:$0xff]
    %v2338 = vld [vmem:[%s8 + $0xd4] sm:$0xff]
    %v2339 = vld [vmem:[%s8 + $0xdc] sm:$0xf]
    %v2340 = vld [vmem:[%s8 + $0xe0] sm:$0xff]
    %v2341 = vld [vmem:[%s8 + $0xe8] sm:$0xff]
    %v2342 = vld [vmem:[%s8 + $0xf0] sm:$0xff]
    %v2343 = vld [vmem:[%s8 + $0xf8] sm:$0xf]
    %v2344 = vld [vmem:[%s8 + $0xfc] sm:$0xff]
    %v2345 = vld [vmem:[%s8 + $0x104] sm:$0xff]
    %v2346 = vld [vmem:[%s8 + $0x10c] sm:$0xff]
    %v2347 = vld [vmem:[%s8 + $0x114] sm:$0xf]
    %v2348 = vld [vmem:[%s8 + $0x118] sm:$0xff]
    %v2349 = vld [vmem:[%s8 + $0x120] sm:$0xff]
    %v2350 = vld [vmem:[%s8 + $0x128] sm:$0xff]
    %v2351 = vld [vmem:[%s8 + $0x130] sm:$0xf]
    %v2352 = vld [vmem:[%s8 + $0x134] sm:$0xff]
    %v2353 = vld [vmem:[%s8 + $0x13c] sm:$0xff]
    %v2354 = vld [vmem:[%s8 + $0x144] sm:$0xff]
    %v2355 = vld [vmem:[%s8 + $0x14c] sm:$0xf]
    %v2356 = vld [vmem:[%s8 + $0x150] sm:$0xff]
    %v2357 = vld [vmem:[%s8 + $0x158] sm:$0xff]
    %v2358 = vld [vmem:[%s8 + $0x160] sm:$0xff]
    %v2359 = vld [vmem:[%s8 + $0x168] sm:$0xf]
    %v2360 = vld [vmem:[%s8 + $0x16c] sm:$0xff]
    %v2361 = vld [vmem:[%s8 + $0x174] sm:$0xff]
    %v2362 = vld [vmem:[%s8 + $0x17c] sm:$0xff]
    %v2363 = vld [vmem:[%s8 + $0x184] sm:$0xf]
    %v2364 = vld [vmem:[%s8 + $0x188] sm:$0xff]
    %v2365 = vld [vmem:[%s8 + $0x190] sm:$0xff]
    %v2366 = vld [vmem:[%s8 + $0x198] sm:$0xff]
    %v2367 = vld [vmem:[%s8 + $0x1a0] sm:$0xf]
    %v2368 = vld [vmem:[%s8 + $0x1a4] sm:$0xff]
    %v2369 = vld [vmem:[%s8 + $0x1ac] sm:$0xff]
    %v2370 = vld [vmem:[%s8 + $0x1b4] sm:$0xff]
    %v2371 = vld [vmem:[%s8 + $0x1bc] sm:$0xf]
    %v2372 = vld [vmem:[%s8 + $0x1c0] sm:$0xff]
    %v2373 = vld [vmem:[%s8 + $0x1c8] sm:$0xff]
    %v2374 = vld [vmem:[%s8 + $0x1d0] sm:$0xff]
    %v2375 = vld [vmem:[%s8 + $0x1d8] sm:$0xf]
    %v2376 = vld [vmem:[%s8 + $0x1dc] sm:$0xff]
    %v2377 = vld [vmem:[%s8 + $0x1e4] sm:$0xff]
    %v2378 = vld [vmem:[%s8 + $0x1ec] sm:$0xff]
    %v2379 = vld [vmem:[%s8 + $0x1f4] sm:$0xf]
    %v2380 = vld [vmem:[%s8 + $0x1f8] sm:$0xff]
    %v2381 = vld [vmem:[%s8 + $0x200] sm:$0xff]
    %v2382 = vld [vmem:[%s8 + $0x208] sm:$0xff]
    %v2383 = vld [vmem:[%s8 + $0x210] sm:$0xf]
    %v2384 = vld [vmem:[%s8 + $0x214] sm:$0xff]
    %v2385 = vld [vmem:[%s8 + $0x21c] sm:$0xff]
    %v2386 = vld [vmem:[%s8 + $0x224] sm:$0xff]
    %v2387 = vld [vmem:[%s8 + $0x22c] sm:$0xf]
    %v2388 = vld [vmem:[%s8 + $0x230] sm:$0xff]
    %v2389 = vld [vmem:[%s8 + $0x238] sm:$0xff]
    %v2390 = vld [vmem:[%s8 + $0x240] sm:$0xff]
    %v2391 = vld [vmem:[%s8 + $0x248] sm:$0xf]
    %v2392 = vld [vmem:[%s8 + $0x24c] sm:$0xff]
    %v2393 = vld [vmem:[%s8 + $0x254] sm:$0xff]
    %v2394 = vld [vmem:[%s8 + $0x25c] sm:$0xff]
    %v2395 = vld [vmem:[%s8 + $0x264] sm:$0xf]
    %v2396 = vld [vmem:[%s8 + $0x268] sm:$0xff]
    %v2397 = vld [vmem:[%s8 + $0x270] sm:$0xff]
    %v2398 = vld [vmem:[%s8 + $0x278] sm:$0xff]
    %v2399 = vld [vmem:[%s8 + $0x280] sm:$0xf]
    %v2400 = vld [vmem:[%s8 + $0x284] sm:$0xff]
    %v2401 = vld [vmem:[%s8 + $0x28c] sm:$0xff]
    %v2402 = vld [vmem:[%s8 + $0x294] sm:$0xff]
    %v2403 = vld [vmem:[%s8 + $0x29c] sm:$0xf]
    %v2404 = vld [vmem:[%s8 + $0x2a0] sm:$0xff]
    %v2405 = vld [vmem:[%s8 + $0x2a8] sm:$0xff]
    %v2406 = vld [vmem:[%s8 + $0x2b0] sm:$0xff]
    %v2407 = vld [vmem:[%s8 + $0x2b8] sm:$0xf]
    %v2408 = vld [vmem:[%s8 + $0x2bc] sm:$0xff]
    %v2409 = vld [vmem:[%s8 + $0x2c4] sm:$0xff]
    %v2410 = vld [vmem:[%s8 + $0x2cc] sm:$0xff]
    %v2411 = vld [vmem:[%s8 + $0x2d4] sm:$0xf]
    %v2412 = vld [vmem:[%s8 + $0x2d8] sm:$0xff]
    %v2413 = vld [vmem:[%s8 + $0x2e0] sm:$0xff]
    %v2414 = vld [vmem:[%s8 + $0x2e8] sm:$0xff]
    %v2415 = vld [vmem:[%s8 + $0x2f0] sm:$0xf]
    %v2416 = vld [vmem:[%s8 + $0x2f4] sm:$0xff]
    %v2417 = vld [vmem:[%s8 + $0x2fc] sm:$0xff]
    %v2418 = vld [vmem:[%s8 + $0x304] sm:$0xff]
    %v2419 = vld [vmem:[%s8 + $0x30c] sm:$0xf]
    %v2420 = vld [vmem:[%s8 + $0x310] sm:$0xff]
    %v2421 = vld [vmem:[%s8 + $0x318] sm:$0xff]
    %v2422 = vld [vmem:[%s8 + $0x320] sm:$0xff]
    %v2423 = vld [vmem:[%s8 + $0x328] sm:$0xf]
    %v2424 = vld [vmem:[%s8 + $0x32c] sm:$0xff]
    %v2425 = vld [vmem:[%s8 + $0x334] sm:$0xff]
    %v2426 = vld [vmem:[%s8 + $0x33c] sm:$0xff]
    %v2427 = vld [vmem:[%s8 + $0x344] sm:$0xf]
    %v2428 = vld [vmem:[%s8 + $0x348] sm:$0xff]
    %v2429 = vld [vmem:[%s8 + $0x350] sm:$0xff]
    %v2430 = vld [vmem:[%s8 + $0x358] sm:$0xff]
    %v2431 = vld [vmem:[%s8 + $0x360] sm:$0xf]
    %v2432 = vld [vmem:[%s8 + $0x364] sm:$0xff]
    %v2433 = vld [vmem:[%s8 + $0x36c] sm:$0xff]
    %v2434 = vld [vmem:[%s8 + $0x374] sm:$0xff]
    %v2435 = vld [vmem:[%s8 + $0x37c] sm:$0xf]
    %v2436 = vld [vmem:[%s8 + $0x380] sm:$0xff]
    %v2437 = vld [vmem:[%s8 + $0x388] sm:$0xff]
    %v2438 = vld [vmem:[%s8 + $0x390] sm:$0xff]
    %v2439 = vld [vmem:[%s8 + $0x398] sm:$0xf]
    %v2440 = vld [vmem:[%s8 + $0x39c] sm:$0xff]
    %v2441 = vld [vmem:[%s8 + $0x3a4] sm:$0xff]
    %v2442 = vld [vmem:[%s8 + $0x3ac] sm:$0xff]
    %v2443 = vld [vmem:[%s8 + $0x3b4] sm:$0xf]
    %v2444 = vld [vmem:[%s8 + $0x3b8] sm:$0xff]
    %v2445 = vld [vmem:[%s8 + $0x3c0] sm:$0xff]
    %v2446 = vld [vmem:[%s8 + $0x3c8] sm:$0xff]
    %v2447 = vld [vmem:[%s8 + $0x3d0] sm:$0xf]
    %v2448 = vld [vmem:[%s8 + $0x3d4] sm:$0xff]
    %v2449 = vld [vmem:[%s8 + $0x3dc] sm:$0xff]
    %v2450 = vld [vmem:[%s8 + $0x3e4] sm:$0xff]
    %v2451 = vld [vmem:[%s8 + $0x3ec] sm:$0xf]
    %v2452 = vld [vmem:[%s8 + $0x3f0] sm:$0xff]
    %v2453 = vld [vmem:[%s8 + $0x3f8] sm:$0xff]
    %v2454 = vld [vmem:[%s8 + $0x400] sm:$0xff]
    %v2455 = vld [vmem:[%s8 + $0x408] sm:$0xf]
    %v2456 = vld [vmem:[%s8 + $0x40c] sm:$0xff]
    %v2457 = vld [vmem:[%s8 + $0x414] sm:$0xff]
    %v2458 = vld [vmem:[%s8 + $0x41c] sm:$0xff]
    %v2459 = vld [vmem:[%s8 + $0x424] sm:$0xf]
    %v2460 = vld [vmem:[%s8 + $0x428] sm:$0xff]
    %v2461 = vld [vmem:[%s8 + $0x430] sm:$0xff]
    %v2462 = vld [vmem:[%s8 + $0x438] sm:$0xff]
    %v2463 = vld [vmem:[%s8 + $0x440] sm:$0xf]
    %v2464 = vld [vmem:[%s8 + $0x444] sm:$0xff]
    %v2465 = vld [vmem:[%s8 + $0x44c] sm:$0xff]
    %v2466 = vld [vmem:[%s8 + $0x454] sm:$0xff]
    %v2467 = vld [vmem:[%s8 + $0x45c] sm:$0xf]
    %v2468 = vld [vmem:[%s8 + $0x460] sm:$0xff]
    %v2469 = vld [vmem:[%s8 + $0x468] sm:$0xff]
    %v2470 = vld [vmem:[%s8 + $0x470] sm:$0xff]
    %v2471 = vld [vmem:[%s8 + $0x478] sm:$0xf]
    %v2472 = vld [vmem:[%s8 + $0x47c] sm:$0xff]
    %v2473 = vld [vmem:[%s8 + $0x484] sm:$0xff]
    %v2474 = vld [vmem:[%s8 + $0x48c] sm:$0xff]
    %v2475 = vld [vmem:[%s8 + $0x494] sm:$0xf]
    %v2476 = vld [vmem:[%s8 + $0x498] sm:$0xff]
    %v2477 = vld [vmem:[%s8 + $0x4a0] sm:$0xff]
    %v2478 = vld [vmem:[%s8 + $0x4a8] sm:$0xff]
    %v2479 = vld [vmem:[%s8 + $0x4b0] sm:$0xf]
    %v2480 = vld [vmem:[%s8 + $0x4b4] sm:$0xff]
    %v2481 = vld [vmem:[%s8 + $0x4bc] sm:$0xff]
    %v2482 = vld [vmem:[%s8 + $0x4c4] sm:$0xff]
    %v2483 = vld [vmem:[%s8 + $0x4cc] sm:$0xf]
    %v2484 = vld [vmem:[%s8 + $0x4d0] sm:$0xff]
    %v2485 = vld [vmem:[%s8 + $0x4d8] sm:$0xff]
    %v2486 = vld [vmem:[%s8 + $0x4e0] sm:$0xff]
    %v2487 = vld [vmem:[%s8 + $0x4e8] sm:$0xf]
    %v2488 = vld [vmem:[%s8 + $0x4ec] sm:$0xff]
    %v2489 = vld [vmem:[%s8 + $0x4f4] sm:$0xff]
    %v2490 = vld [vmem:[%s8 + $0x4fc] sm:$0xff]
    %v2491 = vld [vmem:[%s8 + $0x504] sm:$0xf]
    %v2492 = vld [vmem:[%s8 + $0x508] sm:$0xff]
    %v2493 = vld [vmem:[%s8 + $0x510] sm:$0xff]
    %v2494 = vld [vmem:[%s8 + $0x518] sm:$0xff]
    %v2495 = vld [vmem:[%s8 + $0x520] sm:$0xf]
    %v2496 = vld [vmem:[%s8 + $0x524] sm:$0xff]
    %v2497 = vld [vmem:[%s8 + $0x52c] sm:$0xff]
    %v2498 = vld [vmem:[%s8 + $0x534] sm:$0xff]
    %v2499 = vld [vmem:[%s8 + $0x53c] sm:$0xf]
    %v2500 = vld [vmem:[%s8 + $0x540] sm:$0xff]
    %v2501 = vld [vmem:[%s8 + $0x548] sm:$0xff]
    %v2502 = vld [vmem:[%s8 + $0x550] sm:$0xff]
    %v2503 = vld [vmem:[%s8 + $0x558] sm:$0xf]
    %v2504 = vld [vmem:[%s8 + $0x55c] sm:$0xff]
    %v2505 = vld [vmem:[%s8 + $0x564] sm:$0xff]
    %v2506 = vld [vmem:[%s8 + $0x56c] sm:$0xff]
    %v2507 = vld [vmem:[%s8 + $0x574] sm:$0xf]
    %v2508 = vld [vmem:[%s8 + $0x578] sm:$0xff]
    %v2509 = vld [vmem:[%s8 + $0x580] sm:$0xff]
    %v2510 = vld [vmem:[%s8 + $0x588] sm:$0xff]
    %v2511 = vld [vmem:[%s8 + $0x590] sm:$0xf]
    %v2512 = vld [vmem:[%s8 + $0x594] sm:$0xff]
    %v2513 = vld [vmem:[%s8 + $0x59c] sm:$0xff]
    %v2514 = vld [vmem:[%s8 + $0x5a4] sm:$0xff]
    %v2515 = vld [vmem:[%s8 + $0x5ac] sm:$0xf]
    %v2516 = vld [vmem:[%s8 + $0x5b0] sm:$0xff]
    %v2517 = vld [vmem:[%s8 + $0x5b8] sm:$0xff]
    %v2518 = vld [vmem:[%s8 + $0x5c0] sm:$0xff]
    %v2519 = vld [vmem:[%s8 + $0x5c8] sm:$0xf]
    %v2520 = vld [vmem:[%s8 + $0x5cc] sm:$0xff]
    %v2521 = vld [vmem:[%s8 + $0x5d4] sm:$0xff]
    %v2522 = vld [vmem:[%s8 + $0x5dc] sm:$0xff]
    %v2523 = vld [vmem:[%s8 + $0x5e4] sm:$0xf]
    %v2524 = vld [vmem:[%s8 + $0x5e8] sm:$0xff]
    %v2525 = vld [vmem:[%s8 + $0x5f0] sm:$0xff]
    %v2526 = vld [vmem:[%s8 + $0x5f8] sm:$0xff]
    %v2527 = vld [vmem:[%s8 + $0x600] sm:$0xf]
    %v2528 = vld [vmem:[%s8 + $0x604] sm:$0xff]
    %v2529 = vld [vmem:[%s8 + $0x60c] sm:$0xff]
    %v2530 = vld [vmem:[%s8 + $0x614] sm:$0xff]
    %v2531 = vld [vmem:[%s8 + $0x61c] sm:$0xf]
    %v2532 = vld [vmem:[%s8 + $0x620] sm:$0xff]
    %v2533 = vld [vmem:[%s8 + $0x628] sm:$0xff]
    %v2534 = vld [vmem:[%s8 + $0x630] sm:$0xff]
    %v2535 = vld [vmem:[%s8 + $0x638] sm:$0xf]
    %v2536 = vld [vmem:[%s8 + $0x63c] sm:$0xff]
    %v2537 = vld [vmem:[%s8 + $0x644] sm:$0xff]
    %v2538 = vld [vmem:[%s8 + $0x64c] sm:$0xff]
    %v2539 = vld [vmem:[%s8 + $0x654] sm:$0xf]
    %v2540 = vld [vmem:[%s8 + $0x658] sm:$0xff]
    %v2541 = vld [vmem:[%s8 + $0x660] sm:$0xff]
    %v2542 = vld [vmem:[%s8 + $0x668] sm:$0xff]
    %v2543 = vld [vmem:[%s8 + $0x670] sm:$0xf]
    %v2544 = vld [vmem:[%s8 + $0x674] sm:$0xff]
    %v2545 = vld [vmem:[%s8 + $0x67c] sm:$0xff]
    %v2546 = vld [vmem:[%s8 + $0x684] sm:$0xff]
    %v2547 = vld [vmem:[%s8 + $0x68c] sm:$0xf]
    %v2548 = vld [vmem:[%s8 + $0x690] sm:$0xff]
    %v2549 = vld [vmem:[%s8 + $0x698] sm:$0xff]
    %v2550 = vld [vmem:[%s8 + $0x6a0] sm:$0xff]
    %v2551 = vld [vmem:[%s8 + $0x6a8] sm:$0xf]
    %v2552 = vld [vmem:[%s8 + $0x6ac] sm:$0xff]
    %v2553 = vld [vmem:[%s8 + $0x6b4] sm:$0xff]
    %v2554 = vld [vmem:[%s8 + $0x6bc] sm:$0xff]
    %v2555 = vld [vmem:[%s8 + $0x6c4] sm:$0xf]
    %v2556 = vld [vmem:[%s8 + $0x6c8] sm:$0xff]
    %v2557 = vld [vmem:[%s8 + $0x6d0] sm:$0xff]
    %v2558 = vld [vmem:[%s8 + $0x6d8] sm:$0xff]
    %v2559 = vld [vmem:[%s8 + $0x6e0] sm:$0xf]
    %v2560 = vld [vmem:[%s8 + $0x6e4] sm:$0xff]
    %v2561 = vld [vmem:[%s8 + $0x6ec] sm:$0xff]
    %v2562 = vld [vmem:[%s8 + $0x6f4] sm:$0xff]
    %v2563 = vld [vmem:[%s8 + $0x6fc] sm:$0xf]
    %v2564 = vld [vmem:[%s9] sm:$0x7f]
    %v2566 = vlaneseq
    %v2567 = vshrl.u32 %v2566, 7
    %v2568 = vsub.s32 0, %v2567
    %v2569 = vrot.slane %v2564, %v2568
    %v2570 = vlaneseq
    %v2571 = vshrl.u32 %v2570, 7
    %v2572 = vsub.s32 1, %v2571
    %v2573 = vrot.slane %v2564, %v2572
    %v2574 = vlaneseq
    %v2575 = vshrl.u32 %v2574, 7
    %v2576 = vsub.s32 2, %v2575
    %v2577 = vrot.slane %v2564, %v2576
    %v2578 = vlaneseq
    %v2579 = vshrl.u32 %v2578, 7
    %v2580 = vsub.s32 3, %v2579
    %v2581 = vrot.slane %v2564, %v2580
    %v2582 = vlaneseq
    %v2583 = vshrl.u32 %v2582, 7
    %v2584 = vsub.s32 4, %v2583
    %v2585 = vrot.slane %v2564, %v2584
    %v2586 = vlaneseq
    %v2587 = vshrl.u32 %v2586, 7
    %v2588 = vsub.s32 5, %v2587
    %v2589 = vrot.slane %v2564, %v2588
    %v2590 = vlaneseq
    %v2591 = vshrl.u32 %v2590, 7
    %v2592 = vsub.s32 6, %v2591
    %v2593 = vrot.slane %v2564, %v2592
    %v2857 = vunpack.c.l.b16 %v2308
    %v2858 = vunpack.c.h.b16 %v2308
    %v2859 = vunpack.c.l.b16 %v2309
    %v2860 = vunpack.c.h.b16 %v2309
    %v2861 = vunpack.c.l.b16 %v2310
    %v2862 = vunpack.c.h.b16 %v2310
    %v2863 = vunpack.c.l.b16 %v2311
    %v2864 = vunpack.c.l.b16 %v2312
    %v2865 = vunpack.c.h.b16 %v2312
    %v2866 = vunpack.c.l.b16 %v2313
    %v2867 = vunpack.c.h.b16 %v2313
    %v2868 = vunpack.c.l.b16 %v2314
    %v2869 = vunpack.c.h.b16 %v2314
    %v2870 = vunpack.c.l.b16 %v2315
    %v2871 = vunpack.c.l.b16 %v2316
    %v2872 = vunpack.c.h.b16 %v2316
    %v2873 = vunpack.c.l.b16 %v2317
    %v2874 = vunpack.c.h.b16 %v2317
    %v2875 = vunpack.c.l.b16 %v2318
    %v2876 = vunpack.c.h.b16 %v2318
    %v2877 = vunpack.c.l.b16 %v2319
    %v2878 = vunpack.c.l.b16 %v2320
    %v2879 = vunpack.c.h.b16 %v2320
    %v2880 = vunpack.c.l.b16 %v2321
    %v2881 = vunpack.c.h.b16 %v2321
    %v2882 = vunpack.c.l.b16 %v2322
    %v2883 = vunpack.c.h.b16 %v2322
    %v2884 = vunpack.c.l.b16 %v2323
    %v2885 = vunpack.c.l.b16 %v2324
    %v2886 = vunpack.c.h.b16 %v2324
    %v2887 = vunpack.c.l.b16 %v2325
    %v2888 = vunpack.c.h.b16 %v2325
    %v2889 = vunpack.c.l.b16 %v2326
    %v2890 = vunpack.c.h.b16 %v2326
    %v2891 = vunpack.c.l.b16 %v2327
    %v2892 = vunpack.c.l.b16 %v2328
    %v2893 = vunpack.c.h.b16 %v2328
    %v2894 = vunpack.c.l.b16 %v2329
    %v2895 = vunpack.c.h.b16 %v2329
    %v2896 = vunpack.c.l.b16 %v2330
    %v2897 = vunpack.c.h.b16 %v2330
    %v2898 = vunpack.c.l.b16 %v2331
    %v2899 = vunpack.c.l.b16 %v2332
    %v2900 = vunpack.c.h.b16 %v2332
    %v2901 = vunpack.c.l.b16 %v2333
    %v2902 = vunpack.c.h.b16 %v2333
    %v2903 = vunpack.c.l.b16 %v2334
    %v2904 = vunpack.c.h.b16 %v2334
    %v2905 = vunpack.c.l.b16 %v2335
    %v2906 = vunpack.c.l.b16 %v2336
    %v2907 = vunpack.c.h.b16 %v2336
    %v2908 = vunpack.c.l.b16 %v2337
    %v2909 = vunpack.c.h.b16 %v2337
    %v2910 = vunpack.c.l.b16 %v2338
    %v2911 = vunpack.c.h.b16 %v2338
    %v2912 = vunpack.c.l.b16 %v2339
    %v2913 = vunpack.c.l.b16 %v2340
    %v2914 = vunpack.c.h.b16 %v2340
    %v2915 = vunpack.c.l.b16 %v2341
    %v2916 = vunpack.c.h.b16 %v2341
    %v2917 = vunpack.c.l.b16 %v2342
    %v2918 = vunpack.c.h.b16 %v2342
    %v2919 = vunpack.c.l.b16 %v2343
    %v2920 = vunpack.c.l.b16 %v2344
    %v2921 = vunpack.c.h.b16 %v2344
    %v2922 = vunpack.c.l.b16 %v2345
    %v2923 = vunpack.c.h.b16 %v2345
    %v2924 = vunpack.c.l.b16 %v2346
    %v2925 = vunpack.c.h.b16 %v2346
    %v2926 = vunpack.c.l.b16 %v2347
    %v2927 = vunpack.c.l.b16 %v2348
    %v2928 = vunpack.c.h.b16 %v2348
    %v2929 = vunpack.c.l.b16 %v2349
    %v2930 = vunpack.c.h.b16 %v2349
    %v2931 = vunpack.c.l.b16 %v2350
    %v2932 = vunpack.c.h.b16 %v2350
    %v2933 = vunpack.c.l.b16 %v2351
    %v2934 = vunpack.c.l.b16 %v2352
    %v2935 = vunpack.c.h.b16 %v2352
    %v2936 = vunpack.c.l.b16 %v2353
    %v2937 = vunpack.c.h.b16 %v2353
    %v2938 = vunpack.c.l.b16 %v2354
    %v2939 = vunpack.c.h.b16 %v2354
    %v2940 = vunpack.c.l.b16 %v2355
    %v2941 = vunpack.c.l.b16 %v2356
    %v2942 = vunpack.c.h.b16 %v2356
    %v2943 = vunpack.c.l.b16 %v2357
    %v2944 = vunpack.c.h.b16 %v2357
    %v2945 = vunpack.c.l.b16 %v2358
    %v2946 = vunpack.c.h.b16 %v2358
    %v2947 = vunpack.c.l.b16 %v2359
    %v2948 = vunpack.c.l.b16 %v2360
    %v2949 = vunpack.c.h.b16 %v2360
    %v2950 = vunpack.c.l.b16 %v2361
    %v2951 = vunpack.c.h.b16 %v2361
    %v2952 = vunpack.c.l.b16 %v2362
    %v2953 = vunpack.c.h.b16 %v2362
    %v2954 = vunpack.c.l.b16 %v2363
    %v2955 = vunpack.c.l.b16 %v2364
    %v2956 = vunpack.c.h.b16 %v2364
    %v2957 = vunpack.c.l.b16 %v2365
    %v2958 = vunpack.c.h.b16 %v2365
    %v2959 = vunpack.c.l.b16 %v2366
    %v2960 = vunpack.c.h.b16 %v2366
    %v2961 = vunpack.c.l.b16 %v2367
    %v2962 = vunpack.c.l.b16 %v2368
    %v2963 = vunpack.c.h.b16 %v2368
    %v2964 = vunpack.c.l.b16 %v2369
    %v2965 = vunpack.c.h.b16 %v2369
    %v2966 = vunpack.c.l.b16 %v2370
    %v2967 = vunpack.c.h.b16 %v2370
    %v2968 = vunpack.c.l.b16 %v2371
    %v2969 = vunpack.c.l.b16 %v2372
    %v2970 = vunpack.c.h.b16 %v2372
    %v2971 = vunpack.c.l.b16 %v2373
    %v2972 = vunpack.c.h.b16 %v2373
    %v2973 = vunpack.c.l.b16 %v2374
    %v2974 = vunpack.c.h.b16 %v2374
    %v2975 = vunpack.c.l.b16 %v2375
    %v2976 = vunpack.c.l.b16 %v2376
    %v2977 = vunpack.c.h.b16 %v2376
    %v2978 = vunpack.c.l.b16 %v2377
    %v2979 = vunpack.c.h.b16 %v2377
    %v2980 = vunpack.c.l.b16 %v2378
    %v2981 = vunpack.c.h.b16 %v2378
    %v2982 = vunpack.c.l.b16 %v2379
    %v2983 = vunpack.c.l.b16 %v2380
    %v2984 = vunpack.c.h.b16 %v2380
    %v2985 = vunpack.c.l.b16 %v2381
    %v2986 = vunpack.c.h.b16 %v2381
    %v2987 = vunpack.c.l.b16 %v2382
    %v2988 = vunpack.c.h.b16 %v2382
    %v2989 = vunpack.c.l.b16 %v2383
    %v2990 = vunpack.c.l.b16 %v2384
    %v2991 = vunpack.c.h.b16 %v2384
    %v2992 = vunpack.c.l.b16 %v2385
    %v2993 = vunpack.c.h.b16 %v2385
    %v2994 = vunpack.c.l.b16 %v2386
    %v2995 = vunpack.c.h.b16 %v2386
    %v2996 = vunpack.c.l.b16 %v2387
    %v2997 = vunpack.c.l.b16 %v2388
    %v2998 = vunpack.c.h.b16 %v2388
    %v2999 = vunpack.c.l.b16 %v2389
    %v3000 = vunpack.c.h.b16 %v2389
    %v3001 = vunpack.c.l.b16 %v2390
    %v3002 = vunpack.c.h.b16 %v2390
    %v3003 = vunpack.c.l.b16 %v2391
    %v3004 = vunpack.c.l.b16 %v2392
    %v3005 = vunpack.c.h.b16 %v2392
    %v3006 = vunpack.c.l.b16 %v2393
    %v3007 = vunpack.c.h.b16 %v2393
    %v3008 = vunpack.c.l.b16 %v2394
    %v3009 = vunpack.c.h.b16 %v2394
    %v3010 = vunpack.c.l.b16 %v2395
    %v3011 = vunpack.c.l.b16 %v2396
    %v3012 = vunpack.c.h.b16 %v2396
    %v3013 = vunpack.c.l.b16 %v2397
    %v3014 = vunpack.c.h.b16 %v2397
    %v3015 = vunpack.c.l.b16 %v2398
    %v3016 = vunpack.c.h.b16 %v2398
    %v3017 = vunpack.c.l.b16 %v2399
    %v3018 = vunpack.c.l.b16 %v2400
    %v3019 = vunpack.c.h.b16 %v2400
    %v3020 = vunpack.c.l.b16 %v2401
    %v3021 = vunpack.c.h.b16 %v2401
    %v3022 = vunpack.c.l.b16 %v2402
    %v3023 = vunpack.c.h.b16 %v2402
    %v3024 = vunpack.c.l.b16 %v2403
    %v3025 = vunpack.c.l.b16 %v2404
    %v3026 = vunpack.c.h.b16 %v2404
    %v3027 = vunpack.c.l.b16 %v2405
    %v3028 = vunpack.c.h.b16 %v2405
    %v3029 = vunpack.c.l.b16 %v2406
    %v3030 = vunpack.c.h.b16 %v2406
    %v3031 = vunpack.c.l.b16 %v2407
    %v3032 = vunpack.c.l.b16 %v2408
    %v3033 = vunpack.c.h.b16 %v2408
    %v3034 = vunpack.c.l.b16 %v2409
    %v3035 = vunpack.c.h.b16 %v2409
    %v3036 = vunpack.c.l.b16 %v2410
    %v3037 = vunpack.c.h.b16 %v2410
    %v3038 = vunpack.c.l.b16 %v2411
    %v3039 = vunpack.c.l.b16 %v2412
    %v3040 = vunpack.c.h.b16 %v2412
    %v3041 = vunpack.c.l.b16 %v2413
    %v3042 = vunpack.c.h.b16 %v2413
    %v3043 = vunpack.c.l.b16 %v2414
    %v3044 = vunpack.c.h.b16 %v2414
    %v3045 = vunpack.c.l.b16 %v2415
    %v3046 = vunpack.c.l.b16 %v2416
    %v3047 = vunpack.c.h.b16 %v2416
    %v3048 = vunpack.c.l.b16 %v2417
    %v3049 = vunpack.c.h.b16 %v2417
    %v3050 = vunpack.c.l.b16 %v2418
    %v3051 = vunpack.c.h.b16 %v2418
    %v3052 = vunpack.c.l.b16 %v2419
    %v3053 = vunpack.c.l.b16 %v2420
    %v3054 = vunpack.c.h.b16 %v2420
    %v3055 = vunpack.c.l.b16 %v2421
    %v3056 = vunpack.c.h.b16 %v2421
    %v3057 = vunpack.c.l.b16 %v2422
    %v3058 = vunpack.c.h.b16 %v2422
    %v3059 = vunpack.c.l.b16 %v2423
    %v3060 = vunpack.c.l.b16 %v2424
    %v3061 = vunpack.c.h.b16 %v2424
    %v3062 = vunpack.c.l.b16 %v2425
    %v3063 = vunpack.c.h.b16 %v2425
    %v3064 = vunpack.c.l.b16 %v2426
    %v3065 = vunpack.c.h.b16 %v2426
    %v3066 = vunpack.c.l.b16 %v2427
    %v3067 = vunpack.c.l.b16 %v2428
    %v3068 = vunpack.c.h.b16 %v2428
    %v3069 = vunpack.c.l.b16 %v2429
    %v3070 = vunpack.c.h.b16 %v2429
    %v3071 = vunpack.c.l.b16 %v2430
    %v3072 = vunpack.c.h.b16 %v2430
    %v3073 = vunpack.c.l.b16 %v2431
    %v3074 = vunpack.c.l.b16 %v2432
    %v3075 = vunpack.c.h.b16 %v2432
    %v3076 = vunpack.c.l.b16 %v2433
    %v3077 = vunpack.c.h.b16 %v2433
    %v3078 = vunpack.c.l.b16 %v2434
    %v3079 = vunpack.c.h.b16 %v2434
    %v3080 = vunpack.c.l.b16 %v2435
    %v3081 = vunpack.c.l.b16 %v2436
    %v3082 = vunpack.c.h.b16 %v2436
    %v3083 = vunpack.c.l.b16 %v2437
    %v3084 = vunpack.c.h.b16 %v2437
    %v3085 = vunpack.c.l.b16 %v2438
    %v3086 = vunpack.c.h.b16 %v2438
    %v3087 = vunpack.c.l.b16 %v2439
    %v3088 = vunpack.c.l.b16 %v2440
    %v3089 = vunpack.c.h.b16 %v2440
    %v3090 = vunpack.c.l.b16 %v2441
    %v3091 = vunpack.c.h.b16 %v2441
    %v3092 = vunpack.c.l.b16 %v2442
    %v3093 = vunpack.c.h.b16 %v2442
    %v3094 = vunpack.c.l.b16 %v2443
    %v3095 = vunpack.c.l.b16 %v2444
    %v3096 = vunpack.c.h.b16 %v2444
    %v3097 = vunpack.c.l.b16 %v2445
    %v3098 = vunpack.c.h.b16 %v2445
    %v3099 = vunpack.c.l.b16 %v2446
    %v3100 = vunpack.c.h.b16 %v2446
    %v3101 = vunpack.c.l.b16 %v2447
    %v3102 = vunpack.c.l.b16 %v2448
    %v3103 = vunpack.c.h.b16 %v2448
    %v3104 = vunpack.c.l.b16 %v2449
    %v3105 = vunpack.c.h.b16 %v2449
    %v3106 = vunpack.c.l.b16 %v2450
    %v3107 = vunpack.c.h.b16 %v2450
    %v3108 = vunpack.c.l.b16 %v2451
    %v3109 = vunpack.c.l.b16 %v2452
    %v3110 = vunpack.c.h.b16 %v2452
    %v3111 = vunpack.c.l.b16 %v2453
    %v3112 = vunpack.c.h.b16 %v2453
    %v3113 = vunpack.c.l.b16 %v2454
    %v3114 = vunpack.c.h.b16 %v2454
    %v3115 = vunpack.c.l.b16 %v2455
    %v3116 = vunpack.c.l.b16 %v2456
    %v3117 = vunpack.c.h.b16 %v2456
    %v3118 = vunpack.c.l.b16 %v2457
    %v3119 = vunpack.c.h.b16 %v2457
    %v3120 = vunpack.c.l.b16 %v2458
    %v3121 = vunpack.c.h.b16 %v2458
    %v3122 = vunpack.c.l.b16 %v2459
    %v3123 = vunpack.c.l.b16 %v2460
    %v3124 = vunpack.c.h.b16 %v2460
    %v3125 = vunpack.c.l.b16 %v2461
    %v3126 = vunpack.c.h.b16 %v2461
    %v3127 = vunpack.c.l.b16 %v2462
    %v3128 = vunpack.c.h.b16 %v2462
    %v3129 = vunpack.c.l.b16 %v2463
    %v3130 = vunpack.c.l.b16 %v2464
    %v3131 = vunpack.c.h.b16 %v2464
    %v3132 = vunpack.c.l.b16 %v2465
    %v3133 = vunpack.c.h.b16 %v2465
    %v3134 = vunpack.c.l.b16 %v2466
    %v3135 = vunpack.c.h.b16 %v2466
    %v3136 = vunpack.c.l.b16 %v2467
    %v3137 = vunpack.c.l.b16 %v2468
    %v3138 = vunpack.c.h.b16 %v2468
    %v3139 = vunpack.c.l.b16 %v2469
    %v3140 = vunpack.c.h.b16 %v2469
    %v3141 = vunpack.c.l.b16 %v2470
    %v3142 = vunpack.c.h.b16 %v2470
    %v3143 = vunpack.c.l.b16 %v2471
    %v3144 = vunpack.c.l.b16 %v2472
    %v3145 = vunpack.c.h.b16 %v2472
    %v3146 = vunpack.c.l.b16 %v2473
    %v3147 = vunpack.c.h.b16 %v2473
    %v3148 = vunpack.c.l.b16 %v2474
    %v3149 = vunpack.c.h.b16 %v2474
    %v3150 = vunpack.c.l.b16 %v2475
    %v3151 = vunpack.c.l.b16 %v2476
    %v3152 = vunpack.c.h.b16 %v2476
    %v3153 = vunpack.c.l.b16 %v2477
    %v3154 = vunpack.c.h.b16 %v2477
    %v3155 = vunpack.c.l.b16 %v2478
    %v3156 = vunpack.c.h.b16 %v2478
    %v3157 = vunpack.c.l.b16 %v2479
    %v3158 = vunpack.c.l.b16 %v2480
    %v3159 = vunpack.c.h.b16 %v2480
    %v3160 = vunpack.c.l.b16 %v2481
    %v3161 = vunpack.c.h.b16 %v2481
    %v3162 = vunpack.c.l.b16 %v2482
    %v3163 = vunpack.c.h.b16 %v2482
    %v3164 = vunpack.c.l.b16 %v2483
    %v3165 = vunpack.c.l.b16 %v2484
    %v3166 = vunpack.c.h.b16 %v2484
    %v3167 = vunpack.c.l.b16 %v2485
    %v3168 = vunpack.c.h.b16 %v2485
    %v3169 = vunpack.c.l.b16 %v2486
    %v3170 = vunpack.c.h.b16 %v2486
    %v3171 = vunpack.c.l.b16 %v2487
    %v3172 = vunpack.c.l.b16 %v2488
    %v3173 = vunpack.c.h.b16 %v2488
    %v3174 = vunpack.c.l.b16 %v2489
    %v3175 = vunpack.c.h.b16 %v2489
    %v3176 = vunpack.c.l.b16 %v2490
    %v3177 = vunpack.c.h.b16 %v2490
    %v3178 = vunpack.c.l.b16 %v2491
    %v3179 = vunpack.c.l.b16 %v2492
    %v3180 = vunpack.c.h.b16 %v2492
    %v3181 = vunpack.c.l.b16 %v2493
    %v3182 = vunpack.c.h.b16 %v2493
    %v3183 = vunpack.c.l.b16 %v2494
    %v3184 = vunpack.c.h.b16 %v2494
    %v3185 = vunpack.c.l.b16 %v2495
    %v3186 = vunpack.c.l.b16 %v2496
    %v3187 = vunpack.c.h.b16 %v2496
    %v3188 = vunpack.c.l.b16 %v2497
    %v3189 = vunpack.c.h.b16 %v2497
    %v3190 = vunpack.c.l.b16 %v2498
    %v3191 = vunpack.c.h.b16 %v2498
    %v3192 = vunpack.c.l.b16 %v2499
    %v3193 = vunpack.c.l.b16 %v2500
    %v3194 = vunpack.c.h.b16 %v2500
    %v3195 = vunpack.c.l.b16 %v2501
    %v3196 = vunpack.c.h.b16 %v2501
    %v3197 = vunpack.c.l.b16 %v2502
    %v3198 = vunpack.c.h.b16 %v2502
    %v3199 = vunpack.c.l.b16 %v2503
    %v3200 = vunpack.c.l.b16 %v2504
    %v3201 = vunpack.c.h.b16 %v2504
    %v3202 = vunpack.c.l.b16 %v2505
    %v3203 = vunpack.c.h.b16 %v2505
    %v3204 = vunpack.c.l.b16 %v2506
    %v3205 = vunpack.c.h.b16 %v2506
    %v3206 = vunpack.c.l.b16 %v2507
    %v3207 = vunpack.c.l.b16 %v2508
    %v3208 = vunpack.c.h.b16 %v2508
    %v3209 = vunpack.c.l.b16 %v2509
    %v3210 = vunpack.c.h.b16 %v2509
    %v3211 = vunpack.c.l.b16 %v2510
    %v3212 = vunpack.c.h.b16 %v2510
    %v3213 = vunpack.c.l.b16 %v2511
    %v3214 = vunpack.c.l.b16 %v2512
    %v3215 = vunpack.c.h.b16 %v2512
    %v3216 = vunpack.c.l.b16 %v2513
    %v3217 = vunpack.c.h.b16 %v2513
    %v3218 = vunpack.c.l.b16 %v2514
    %v3219 = vunpack.c.h.b16 %v2514
    %v3220 = vunpack.c.l.b16 %v2515
    %v3221 = vunpack.c.l.b16 %v2516
    %v3222 = vunpack.c.h.b16 %v2516
    %v3223 = vunpack.c.l.b16 %v2517
    %v3224 = vunpack.c.h.b16 %v2517
    %v3225 = vunpack.c.l.b16 %v2518
    %v3226 = vunpack.c.h.b16 %v2518
    %v3227 = vunpack.c.l.b16 %v2519
    %v3228 = vunpack.c.l.b16 %v2520
    %v3229 = vunpack.c.h.b16 %v2520
    %v3230 = vunpack.c.l.b16 %v2521
    %v3231 = vunpack.c.h.b16 %v2521
    %v3232 = vunpack.c.l.b16 %v2522
    %v3233 = vunpack.c.h.b16 %v2522
    %v3234 = vunpack.c.l.b16 %v2523
    %v3235 = vunpack.c.l.b16 %v2524
    %v3236 = vunpack.c.h.b16 %v2524
    %v3237 = vunpack.c.l.b16 %v2525
    %v3238 = vunpack.c.h.b16 %v2525
    %v3239 = vunpack.c.l.b16 %v2526
    %v3240 = vunpack.c.h.b16 %v2526
    %v3241 = vunpack.c.l.b16 %v2527
    %v3242 = vunpack.c.l.b16 %v2528
    %v3243 = vunpack.c.h.b16 %v2528
    %v3244 = vunpack.c.l.b16 %v2529
    %v3245 = vunpack.c.h.b16 %v2529
    %v3246 = vunpack.c.l.b16 %v2530
    %v3247 = vunpack.c.h.b16 %v2530
    %v3248 = vunpack.c.l.b16 %v2531
    %v3249 = vunpack.c.l.b16 %v2532
    %v3250 = vunpack.c.h.b16 %v2532
    %v3251 = vunpack.c.l.b16 %v2533
    %v3252 = vunpack.c.h.b16 %v2533
    %v3253 = vunpack.c.l.b16 %v2534
    %v3254 = vunpack.c.h.b16 %v2534
    %v3255 = vunpack.c.l.b16 %v2535
    %v3256 = vunpack.c.l.b16 %v2536
    %v3257 = vunpack.c.h.b16 %v2536
    %v3258 = vunpack.c.l.b16 %v2537
    %v3259 = vunpack.c.h.b16 %v2537
    %v3260 = vunpack.c.l.b16 %v2538
    %v3261 = vunpack.c.h.b16 %v2538
    %v3262 = vunpack.c.l.b16 %v2539
    %v3263 = vunpack.c.l.b16 %v2540
    %v3264 = vunpack.c.h.b16 %v2540
    %v3265 = vunpack.c.l.b16 %v2541
    %v3266 = vunpack.c.h.b16 %v2541
    %v3267 = vunpack.c.l.b16 %v2542
    %v3268 = vunpack.c.h.b16 %v2542
    %v3269 = vunpack.c.l.b16 %v2543
    %v3270 = vunpack.c.l.b16 %v2544
    %v3271 = vunpack.c.h.b16 %v2544
    %v3272 = vunpack.c.l.b16 %v2545
    %v3273 = vunpack.c.h.b16 %v2545
    %v3274 = vunpack.c.l.b16 %v2546
    %v3275 = vunpack.c.h.b16 %v2546
    %v3276 = vunpack.c.l.b16 %v2547
    %v3277 = vunpack.c.l.b16 %v2548
    %v3278 = vunpack.c.h.b16 %v2548
    %v3279 = vunpack.c.l.b16 %v2549
    %v3280 = vunpack.c.h.b16 %v2549
    %v3281 = vunpack.c.l.b16 %v2550
    %v3282 = vunpack.c.h.b16 %v2550
    %v3283 = vunpack.c.l.b16 %v2551
    %v3284 = vunpack.c.l.b16 %v2552
    %v3285 = vunpack.c.h.b16 %v2552
    %v3286 = vunpack.c.l.b16 %v2553
    %v3287 = vunpack.c.h.b16 %v2553
    %v3288 = vunpack.c.l.b16 %v2554
    %v3289 = vunpack.c.h.b16 %v2554
    %v3290 = vunpack.c.l.b16 %v2555
    %v3291 = vunpack.c.l.b16 %v2556
    %v3292 = vunpack.c.h.b16 %v2556
    %v3293 = vunpack.c.l.b16 %v2557
    %v3294 = vunpack.c.h.b16 %v2557
    %v3295 = vunpack.c.l.b16 %v2558
    %v3296 = vunpack.c.h.b16 %v2558
    %v3297 = vunpack.c.l.b16 %v2559
    %v3298 = vunpack.c.l.b16 %v2560
    %v3299 = vunpack.c.h.b16 %v2560
    %v3300 = vunpack.c.l.b16 %v2561
    %v3301 = vunpack.c.h.b16 %v2561
    %v3302 = vunpack.c.l.b16 %v2562
    %v3303 = vunpack.c.h.b16 %v2562
    %v3304 = vunpack.c.l.b16 %v2563
    %v3305 = vpack.c.b16 %v2864, %v2857
    %v3306 = vpack.c.b16 %v2865, %v2858
    %v3307 = vpack.c.b16 %v2866, %v2859
    %v3308 = vpack.c.b16 %v2867, %v2860
    %v3309 = vpack.c.b16 %v2868, %v2861
    %v3310 = vpack.c.b16 %v2869, %v2862
    %v3311 = vpack.c.b16 %v2870, %v2863
    %v3312 = vpack.c.b16 %v2878, %v2871
    %v3313 = vpack.c.b16 %v2879, %v2872
    %v3314 = vpack.c.b16 %v2880, %v2873
    %v3315 = vpack.c.b16 %v2881, %v2874
    %v3316 = vpack.c.b16 %v2882, %v2875
    %v3317 = vpack.c.b16 %v2883, %v2876
    %v3318 = vpack.c.b16 %v2884, %v2877
    %v3319 = vpack.c.b16 %v2892, %v2885
    %v3320 = vpack.c.b16 %v2893, %v2886
    %v3321 = vpack.c.b16 %v2894, %v2887
    %v3322 = vpack.c.b16 %v2895, %v2888
    %v3323 = vpack.c.b16 %v2896, %v2889
    %v3324 = vpack.c.b16 %v2897, %v2890
    %v3325 = vpack.c.b16 %v2898, %v2891
    %v3326 = vpack.c.b16 %v2906, %v2899
    %v3327 = vpack.c.b16 %v2907, %v2900
    %v3328 = vpack.c.b16 %v2908, %v2901
    %v3329 = vpack.c.b16 %v2909, %v2902
    %v3330 = vpack.c.b16 %v2910, %v2903
    %v3331 = vpack.c.b16 %v2911, %v2904
    %v3332 = vpack.c.b16 %v2912, %v2905
    %v3333 = vpack.c.b16 %v2920, %v2913
    %v3334 = vpack.c.b16 %v2921, %v2914
    %v3335 = vpack.c.b16 %v2922, %v2915
    %v3336 = vpack.c.b16 %v2923, %v2916
    %v3337 = vpack.c.b16 %v2924, %v2917
    %v3338 = vpack.c.b16 %v2925, %v2918
    %v3339 = vpack.c.b16 %v2926, %v2919
    %v3340 = vpack.c.b16 %v2934, %v2927
    %v3341 = vpack.c.b16 %v2935, %v2928
    %v3342 = vpack.c.b16 %v2936, %v2929
    %v3343 = vpack.c.b16 %v2937, %v2930
    %v3344 = vpack.c.b16 %v2938, %v2931
    %v3345 = vpack.c.b16 %v2939, %v2932
    %v3346 = vpack.c.b16 %v2940, %v2933
    %v3347 = vpack.c.b16 %v2948, %v2941
    %v3348 = vpack.c.b16 %v2949, %v2942
    %v3349 = vpack.c.b16 %v2950, %v2943
    %v3350 = vpack.c.b16 %v2951, %v2944
    %v3351 = vpack.c.b16 %v2952, %v2945
    %v3352 = vpack.c.b16 %v2953, %v2946
    %v3353 = vpack.c.b16 %v2954, %v2947
    %v3354 = vpack.c.b16 %v2962, %v2955
    %v3355 = vpack.c.b16 %v2963, %v2956
    %v3356 = vpack.c.b16 %v2964, %v2957
    %v3357 = vpack.c.b16 %v2965, %v2958
    %v3358 = vpack.c.b16 %v2966, %v2959
    %v3359 = vpack.c.b16 %v2967, %v2960
    %v3360 = vpack.c.b16 %v2968, %v2961
    %v3361 = vpack.c.b16 %v2976, %v2969
    %v3362 = vpack.c.b16 %v2977, %v2970
    %v3363 = vpack.c.b16 %v2978, %v2971
    %v3364 = vpack.c.b16 %v2979, %v2972
    %v3365 = vpack.c.b16 %v2980, %v2973
    %v3366 = vpack.c.b16 %v2981, %v2974
    %v3367 = vpack.c.b16 %v2982, %v2975
    %v3368 = vpack.c.b16 %v2990, %v2983
    %v3369 = vpack.c.b16 %v2991, %v2984
    %v3370 = vpack.c.b16 %v2992, %v2985
    %v3371 = vpack.c.b16 %v2993, %v2986
    %v3372 = vpack.c.b16 %v2994, %v2987
    %v3373 = vpack.c.b16 %v2995, %v2988
    %v3374 = vpack.c.b16 %v2996, %v2989
    %v3375 = vpack.c.b16 %v3004, %v2997
    %v3376 = vpack.c.b16 %v3005, %v2998
    %v3377 = vpack.c.b16 %v3006, %v2999
    %v3378 = vpack.c.b16 %v3007, %v3000
    %v3379 = vpack.c.b16 %v3008, %v3001
    %v3380 = vpack.c.b16 %v3009, %v3002
    %v3381 = vpack.c.b16 %v3010, %v3003
    %v3382 = vpack.c.b16 %v3018, %v3011
    %v3383 = vpack.c.b16 %v3019, %v3012
    %v3384 = vpack.c.b16 %v3020, %v3013
    %v3385 = vpack.c.b16 %v3021, %v3014
    %v3386 = vpack.c.b16 %v3022, %v3015
    %v3387 = vpack.c.b16 %v3023, %v3016
    %v3388 = vpack.c.b16 %v3024, %v3017
    %v3389 = vpack.c.b16 %v3032, %v3025
    %v3390 = vpack.c.b16 %v3033, %v3026
    %v3391 = vpack.c.b16 %v3034, %v3027
    %v3392 = vpack.c.b16 %v3035, %v3028
    %v3393 = vpack.c.b16 %v3036, %v3029
    %v3394 = vpack.c.b16 %v3037, %v3030
    %v3395 = vpack.c.b16 %v3038, %v3031
    %v3396 = vpack.c.b16 %v3046, %v3039
    %v3397 = vpack.c.b16 %v3047, %v3040
    %v3398 = vpack.c.b16 %v3048, %v3041
    %v3399 = vpack.c.b16 %v3049, %v3042
    %v3400 = vpack.c.b16 %v3050, %v3043
    %v3401 = vpack.c.b16 %v3051, %v3044
    %v3402 = vpack.c.b16 %v3052, %v3045
    %v3403 = vpack.c.b16 %v3060, %v3053
    %v3404 = vpack.c.b16 %v3061, %v3054
    %v3405 = vpack.c.b16 %v3062, %v3055
    %v3406 = vpack.c.b16 %v3063, %v3056
    %v3407 = vpack.c.b16 %v3064, %v3057
    %v3408 = vpack.c.b16 %v3065, %v3058
    %v3409 = vpack.c.b16 %v3066, %v3059
    %v3410 = vpack.c.b16 %v3074, %v3067
    %v3411 = vpack.c.b16 %v3075, %v3068
    %v3412 = vpack.c.b16 %v3076, %v3069
    %v3413 = vpack.c.b16 %v3077, %v3070
    %v3414 = vpack.c.b16 %v3078, %v3071
    %v3415 = vpack.c.b16 %v3079, %v3072
    %v3416 = vpack.c.b16 %v3080, %v3073
    %v3417 = vpack.c.b16 %v3088, %v3081
    %v3418 = vpack.c.b16 %v3089, %v3082
    %v3419 = vpack.c.b16 %v3090, %v3083
    %v3420 = vpack.c.b16 %v3091, %v3084
    %v3421 = vpack.c.b16 %v3092, %v3085
    %v3422 = vpack.c.b16 %v3093, %v3086
    %v3423 = vpack.c.b16 %v3094, %v3087
    %v3424 = vpack.c.b16 %v3102, %v3095
    %v3425 = vpack.c.b16 %v3103, %v3096
    %v3426 = vpack.c.b16 %v3104, %v3097
    %v3427 = vpack.c.b16 %v3105, %v3098
    %v3428 = vpack.c.b16 %v3106, %v3099
    %v3429 = vpack.c.b16 %v3107, %v3100
    %v3430 = vpack.c.b16 %v3108, %v3101
    %v3431 = vpack.c.b16 %v3116, %v3109
    %v3432 = vpack.c.b16 %v3117, %v3110
    %v3433 = vpack.c.b16 %v3118, %v3111
    %v3434 = vpack.c.b16 %v3119, %v3112
    %v3435 = vpack.c.b16 %v3120, %v3113
    %v3436 = vpack.c.b16 %v3121, %v3114
    %v3437 = vpack.c.b16 %v3122, %v3115
    %v3438 = vpack.c.b16 %v3130, %v3123
    %v3439 = vpack.c.b16 %v3131, %v3124
    %v3440 = vpack.c.b16 %v3132, %v3125
    %v3441 = vpack.c.b16 %v3133, %v3126
    %v3442 = vpack.c.b16 %v3134, %v3127
    %v3443 = vpack.c.b16 %v3135, %v3128
    %v3444 = vpack.c.b16 %v3136, %v3129
    %v3445 = vpack.c.b16 %v3144, %v3137
    %v3446 = vpack.c.b16 %v3145, %v3138
    %v3447 = vpack.c.b16 %v3146, %v3139
    %v3448 = vpack.c.b16 %v3147, %v3140
    %v3449 = vpack.c.b16 %v3148, %v3141
    %v3450 = vpack.c.b16 %v3149, %v3142
    %v3451 = vpack.c.b16 %v3150, %v3143
    %v3452 = vpack.c.b16 %v3158, %v3151
    %v3453 = vpack.c.b16 %v3159, %v3152
    %v3454 = vpack.c.b16 %v3160, %v3153
    %v3455 = vpack.c.b16 %v3161, %v3154
    %v3456 = vpack.c.b16 %v3162, %v3155
    %v3457 = vpack.c.b16 %v3163, %v3156
    %v3458 = vpack.c.b16 %v3164, %v3157
    %v3459 = vpack.c.b16 %v3172, %v3165
    %v3460 = vpack.c.b16 %v3173, %v3166
    %v3461 = vpack.c.b16 %v3174, %v3167
    %v3462 = vpack.c.b16 %v3175, %v3168
    %v3463 = vpack.c.b16 %v3176, %v3169
    %v3464 = vpack.c.b16 %v3177, %v3170
    %v3465 = vpack.c.b16 %v3178, %v3171
    %v3466 = vpack.c.b16 %v3186, %v3179
    %v3467 = vpack.c.b16 %v3187, %v3180
    %v3468 = vpack.c.b16 %v3188, %v3181
    %v3469 = vpack.c.b16 %v3189, %v3182
    %v3470 = vpack.c.b16 %v3190, %v3183
    %v3471 = vpack.c.b16 %v3191, %v3184
    %v3472 = vpack.c.b16 %v3192, %v3185
    %v3473 = vpack.c.b16 %v3200, %v3193
    %v3474 = vpack.c.b16 %v3201, %v3194
    %v3475 = vpack.c.b16 %v3202, %v3195
    %v3476 = vpack.c.b16 %v3203, %v3196
    %v3477 = vpack.c.b16 %v3204, %v3197
    %v3478 = vpack.c.b16 %v3205, %v3198
    %v3479 = vpack.c.b16 %v3206, %v3199
    %v3480 = vpack.c.b16 %v3214, %v3207
    %v3481 = vpack.c.b16 %v3215, %v3208
    %v3482 = vpack.c.b16 %v3216, %v3209
    %v3483 = vpack.c.b16 %v3217, %v3210
    %v3484 = vpack.c.b16 %v3218, %v3211
    %v3485 = vpack.c.b16 %v3219, %v3212
    %v3486 = vpack.c.b16 %v3220, %v3213
    %v3487 = vpack.c.b16 %v3228, %v3221
    %v3488 = vpack.c.b16 %v3229, %v3222
    %v3489 = vpack.c.b16 %v3230, %v3223
    %v3490 = vpack.c.b16 %v3231, %v3224
    %v3491 = vpack.c.b16 %v3232, %v3225
    %v3492 = vpack.c.b16 %v3233, %v3226
    %v3493 = vpack.c.b16 %v3234, %v3227
    %v3494 = vpack.c.b16 %v3242, %v3235
    %v3495 = vpack.c.b16 %v3243, %v3236
    %v3496 = vpack.c.b16 %v3244, %v3237
    %v3497 = vpack.c.b16 %v3245, %v3238
    %v3498 = vpack.c.b16 %v3246, %v3239
    %v3499 = vpack.c.b16 %v3247, %v3240
    %v3500 = vpack.c.b16 %v3248, %v3241
    %v3501 = vpack.c.b16 %v3256, %v3249
    %v3502 = vpack.c.b16 %v3257, %v3250
    %v3503 = vpack.c.b16 %v3258, %v3251
    %v3504 = vpack.c.b16 %v3259, %v3252
    %v3505 = vpack.c.b16 %v3260, %v3253
    %v3506 = vpack.c.b16 %v3261, %v3254
    %v3507 = vpack.c.b16 %v3262, %v3255
    %v3508 = vpack.c.b16 %v3270, %v3263
    %v3509 = vpack.c.b16 %v3271, %v3264
    %v3510 = vpack.c.b16 %v3272, %v3265
    %v3511 = vpack.c.b16 %v3273, %v3266
    %v3512 = vpack.c.b16 %v3274, %v3267
    %v3513 = vpack.c.b16 %v3275, %v3268
    %v3514 = vpack.c.b16 %v3276, %v3269
    %v3515 = vpack.c.b16 %v3284, %v3277
    %v3516 = vpack.c.b16 %v3285, %v3278
    %v3517 = vpack.c.b16 %v3286, %v3279
    %v3518 = vpack.c.b16 %v3287, %v3280
    %v3519 = vpack.c.b16 %v3288, %v3281
    %v3520 = vpack.c.b16 %v3289, %v3282
    %v3521 = vpack.c.b16 %v3290, %v3283
    %v3522 = vpack.c.b16 %v3298, %v3291
    %v3523 = vpack.c.b16 %v3299, %v3292
    %v3524 = vpack.c.b16 %v3300, %v3293
    %v3525 = vpack.c.b16 %v3301, %v3294
    %v3526 = vpack.c.b16 %v3302, %v3295
    %v3527 = vpack.c.b16 %v3303, %v3296
    %v3528 = vpack.c.b16 %v3304, %v3297
    %3753 = vmatprep.subr.bf16.mxu0 %v3355
    %3754 = vmatpush1.bf16.msra.mxu0 %v3354
    %3755 = vmatprep.subr.bf16.mxu0 %v3348
    %3756 = vmatpush1.bf16.msra.mxu0 %v3347
    %3757 = vmatprep.subr.bf16.mxu0 %v3341
    %3758 = vmatpush1.bf16.msra.mxu0 %v3340
    %3759 = vmatprep.subr.bf16.mxu0 %v3334
    %3760 = vmatpush1.bf16.msra.mxu0 %v3333
    %3761 = vmatprep.subr.bf16.mxu0 %v3327
    %3762 = vmatpush1.bf16.msra.mxu0 %v3326
    %3763 = vmatprep.subr.bf16.mxu0 %v3320
    %3764 = vmatpush1.bf16.msra.mxu0 %v3319
    %3765 = vmatprep.subr.bf16.mxu0 %v3313
    %3766 = vmatpush1.bf16.msra.mxu0 %v3312
    %3767 = vmatprep.subr.bf16.mxu0 %v3306
    %3768 = vmatpush1.bf16.msra.mxu0 %v3305
    %3769 = vmatprep.subr.bf16.mxu0 %v3411
    %3770 = vmatpush2.bf16.msra.mxu0 %v3410
    %3771 = vmatprep.subr.bf16.mxu0 %v3404
    %3772 = vmatpush2.bf16.msra.mxu0 %v3403
    %3773 = vmatprep.subr.bf16.mxu0 %v3397
    %3774 = vmatpush2.bf16.msra.mxu0 %v3396
    %3775 = vmatprep.subr.bf16.mxu0 %v3390
    %3776 = vmatpush2.bf16.msra.mxu0 %v3389
    %3777 = vmatprep.subr.bf16.mxu0 %v3383
    %3778 = vmatpush2.bf16.msra.mxu0 %v3382
    %3779 = vmatprep.subr.bf16.mxu0 %v3376
    %3780 = vmatpush2.bf16.msra.mxu0 %v3375
    %3781 = vmatprep.subr.bf16.mxu0 %v3369
    %3782 = vmatpush2.bf16.msra.mxu0 %v3368
    %3783 = vmatprep.subr.bf16.mxu0 %v3362
    %3784 = vmatpush2.bf16.msra.mxu0 %v3361
    %3785 = vmatprep.mubr.bf16.mxu0 %v2305
    %3786 = vmatmul.mubr.bf16.gmra.mxu0 %v2304
    %v3787 = vpop.f32.mrf.mxu0
    %v3788 = vadd.f32 %v2569, %v3787
    %v3789 = vpop.f32.mrf.mxu0
    %v3790 = vadd.f32 %v2573, %v3789
    %v3791 = vpop.f32.mrf.mxu0
    %v3792 = vadd.f32 %v2569, %v3791
    %v3793 = vpop.f32.mrf.mxu0
    %v3794 = vadd.f32 %v2573, %v3793
    %3795 = vdwg.mxu0
    %3796 = vmatprep.subr.bf16.mxu0 %v3467
    %3797 = vmatpush1.bf16.msra.mxu0 %v3466
    %3798 = vmatprep.subr.bf16.mxu0 %v3460
    %3799 = vmatpush1.bf16.msra.mxu0 %v3459
    %3800 = vmatprep.subr.bf16.mxu0 %v3453
    %3801 = vmatpush1.bf16.msra.mxu0 %v3452
    %3802 = vmatprep.subr.bf16.mxu0 %v3446
    %3803 = vmatpush1.bf16.msra.mxu0 %v3445
    %3804 = vmatprep.subr.bf16.mxu0 %v3439
    %3805 = vmatpush1.bf16.msra.mxu0 %v3438
    %3806 = vmatprep.subr.bf16.mxu0 %v3432
    %3807 = vmatpush1.bf16.msra.mxu0 %v3431
    %3808 = vmatprep.subr.bf16.mxu0 %v3425
    %3809 = vmatpush1.bf16.msra.mxu0 %v3424
    %3810 = vmatprep.subr.bf16.mxu0 %v3418
    %3811 = vmatpush1.bf16.msra.mxu0 %v3417
    %3812 = vmatprep.subr.bf16.mxu0 %v3523
    %3813 = vmatpush2.bf16.msra.mxu0 %v3522
    %3814 = vmatprep.subr.bf16.mxu0 %v3516
    %3815 = vmatpush2.bf16.msra.mxu0 %v3515
    %3816 = vmatprep.subr.bf16.mxu0 %v3509
    %3817 = vmatpush2.bf16.msra.mxu0 %v3508
    %3818 = vmatprep.subr.bf16.mxu0 %v3502
    %3819 = vmatpush2.bf16.msra.mxu0 %v3501
    %3820 = vmatprep.subr.bf16.mxu0 %v3495
    %3821 = vmatpush2.bf16.msra.mxu0 %v3494
    %3822 = vmatprep.subr.bf16.mxu0 %v3488
    %3823 = vmatpush2.bf16.msra.mxu0 %v3487
    %3824 = vmatprep.subr.bf16.mxu0 %v3481
    %3825 = vmatpush2.bf16.msra.mxu0 %v3480
    %3826 = vmatprep.subr.bf16.mxu0 %v3474
    %3827 = vmatpush2.bf16.msra.mxu0 %v3473
    %3828 = vmatprep.mubr.bf16.mxu0 %v2307
    %3829 = vmatmul.mubr.bf16.gmra.mxu0 %v2306
    %v3830 = vpop.f32.mrf.mxu0
    %v3831 = vadd.f32 %v3788, %v3830
    %v3832 = vpop.f32.mrf.mxu0
    %v3833 = vadd.f32 %v3790, %v3832
    %v3834 = vpop.f32.mrf.mxu0
    %v3835 = vadd.f32 %v3792, %v3834
    %v3836 = vpop.f32.mrf.mxu0
    %v3837 = vadd.f32 %v3794, %v3836
    %3838 = vdwg.mxu0
    %3839 = vmatprep.subr.bf16.mxu0 %v3357
    %3840 = vmatpush1.bf16.msra.mxu0 %v3356
    %3841 = vmatprep.subr.bf16.mxu0 %v3350
    %3842 = vmatpush1.bf16.msra.mxu0 %v3349
    %3843 = vmatprep.subr.bf16.mxu0 %v3343
    %3844 = vmatpush1.bf16.msra.mxu0 %v3342
    %3845 = vmatprep.subr.bf16.mxu0 %v3336
    %3846 = vmatpush1.bf16.msra.mxu0 %v3335
    %3847 = vmatprep.subr.bf16.mxu0 %v3329
    %3848 = vmatpush1.bf16.msra.mxu0 %v3328
    %3849 = vmatprep.subr.bf16.mxu0 %v3322
    %3850 = vmatpush1.bf16.msra.mxu0 %v3321
    %3851 = vmatprep.subr.bf16.mxu0 %v3315
    %3852 = vmatpush1.bf16.msra.mxu0 %v3314
    %3853 = vmatprep.subr.bf16.mxu0 %v3308
    %3854 = vmatpush1.bf16.msra.mxu0 %v3307
    %3855 = vmatprep.subr.bf16.mxu0 %v3413
    %3856 = vmatpush2.bf16.msra.mxu0 %v3412
    %3857 = vmatprep.subr.bf16.mxu0 %v3406
    %3858 = vmatpush2.bf16.msra.mxu0 %v3405
    %3859 = vmatprep.subr.bf16.mxu0 %v3399
    %3860 = vmatpush2.bf16.msra.mxu0 %v3398
    %3861 = vmatprep.subr.bf16.mxu0 %v3392
    %3862 = vmatpush2.bf16.msra.mxu0 %v3391
    %3863 = vmatprep.subr.bf16.mxu0 %v3385
    %3864 = vmatpush2.bf16.msra.mxu0 %v3384
    %3865 = vmatprep.subr.bf16.mxu0 %v3378
    %3866 = vmatpush2.bf16.msra.mxu0 %v3377
    %3867 = vmatprep.subr.bf16.mxu0 %v3371
    %3868 = vmatpush2.bf16.msra.mxu0 %v3370
    %3869 = vmatprep.subr.bf16.mxu0 %v3364
    %3870 = vmatpush2.bf16.msra.mxu0 %v3363
    %3871 = vmatprep.mubr.bf16.mxu0 %v2305
    %3872 = vmatmul.mubr.bf16.gmra.mxu0 %v2304
    %v3873 = vpop.f32.mrf.mxu0
    %v3874 = vadd.f32 %v2577, %v3873
    %v3875 = vpop.f32.mrf.mxu0
    %v3876 = vadd.f32 %v2581, %v3875
    %v3877 = vpop.f32.mrf.mxu0
    %v3878 = vadd.f32 %v2577, %v3877
    %v3879 = vpop.f32.mrf.mxu0
    %v3880 = vadd.f32 %v2581, %v3879
    %3881 = vdwg.mxu0
    %3882 = vmatprep.subr.bf16.mxu0 %v3469
    %3883 = vmatpush1.bf16.msra.mxu0 %v3468
    %3884 = vmatprep.subr.bf16.mxu0 %v3462
    %3885 = vmatpush1.bf16.msra.mxu0 %v3461
    %3886 = vmatprep.subr.bf16.mxu0 %v3455
    %3887 = vmatpush1.bf16.msra.mxu0 %v3454
    %3888 = vmatprep.subr.bf16.mxu0 %v3448
    %3889 = vmatpush1.bf16.msra.mxu0 %v3447
    %3890 = vmatprep.subr.bf16.mxu0 %v3441
    %3891 = vmatpush1.bf16.msra.mxu0 %v3440
    %3892 = vmatprep.subr.bf16.mxu0 %v3434
    %3893 = vmatpush1.bf16.msra.mxu0 %v3433
    %3894 = vmatprep.subr.bf16.mxu0 %v3427
    %3895 = vmatpush1.bf16.msra.mxu0 %v3426
    %3896 = vmatprep.subr.bf16.mxu0 %v3420
    %3897 = vmatpush1.bf16.msra.mxu0 %v3419
    %3898 = vmatprep.subr.bf16.mxu0 %v3525
    %3899 = vmatpush2.bf16.msra.mxu0 %v3524
    %3900 = vmatprep.subr.bf16.mxu0 %v3518
    %3901 = vmatpush2.bf16.msra.mxu0 %v3517
    %3902 = vmatprep.subr.bf16.mxu0 %v3511
    %3903 = vmatpush2.bf16.msra.mxu0 %v3510
    %3904 = vmatprep.subr.bf16.mxu0 %v3504
    %3905 = vmatpush2.bf16.msra.mxu0 %v3503
    %3906 = vmatprep.subr.bf16.mxu0 %v3497
    %3907 = vmatpush2.bf16.msra.mxu0 %v3496
    %3908 = vmatprep.subr.bf16.mxu0 %v3490
    %3909 = vmatpush2.bf16.msra.mxu0 %v3489
    %3910 = vmatprep.subr.bf16.mxu0 %v3483
    %3911 = vmatpush2.bf16.msra.mxu0 %v3482
    %3912 = vmatprep.subr.bf16.mxu0 %v3476
    %3913 = vmatpush2.bf16.msra.mxu0 %v3475
    %3914 = vmatprep.mubr.bf16.mxu0 %v2307
    %3915 = vmatmul.mubr.bf16.gmra.mxu0 %v2306
    %v3916 = vpop.f32.mrf.mxu0
    %v3917 = vadd.f32 %v3874, %v3916
    %v3918 = vpop.f32.mrf.mxu0
    %v3919 = vadd.f32 %v3876, %v3918
    %v3920 = vpop.f32.mrf.mxu0
    %v3921 = vadd.f32 %v3878, %v3920
    %v3922 = vpop.f32.mrf.mxu0
    %v3923 = vadd.f32 %v3880, %v3922
    %3924 = vdwg.mxu0
    %3925 = vmatprep.subr.bf16.mxu0 %v3359
    %3926 = vmatpush1.bf16.msra.mxu0 %v3358
    %3927 = vmatprep.subr.bf16.mxu0 %v3352
    %3928 = vmatpush1.bf16.msra.mxu0 %v3351
    %3929 = vmatprep.subr.bf16.mxu0 %v3345
    %3930 = vmatpush1.bf16.msra.mxu0 %v3344
    %3931 = vmatprep.subr.bf16.mxu0 %v3338
    %3932 = vmatpush1.bf16.msra.mxu0 %v3337
    %3933 = vmatprep.subr.bf16.mxu0 %v3331
    %3934 = vmatpush1.bf16.msra.mxu0 %v3330
    %3935 = vmatprep.subr.bf16.mxu0 %v3324
    %3936 = vmatpush1.bf16.msra.mxu0 %v3323
    %3937 = vmatprep.subr.bf16.mxu0 %v3317
    %3938 = vmatpush1.bf16.msra.mxu0 %v3316
    %3939 = vmatprep.subr.bf16.mxu0 %v3310
    %3940 = vmatpush1.bf16.msra.mxu0 %v3309
    %3941 = vmatprep.subr.bf16.mxu0 %v3415
    %3942 = vmatpush2.bf16.msra.mxu0 %v3414
    %3943 = vmatprep.subr.bf16.mxu0 %v3408
    %3944 = vmatpush2.bf16.msra.mxu0 %v3407
    %3945 = vmatprep.subr.bf16.mxu0 %v3401
    %3946 = vmatpush2.bf16.msra.mxu0 %v3400
    %3947 = vmatprep.subr.bf16.mxu0 %v3394
    %3948 = vmatpush2.bf16.msra.mxu0 %v3393
    %3949 = vmatprep.subr.bf16.mxu0 %v3387
    %3950 = vmatpush2.bf16.msra.mxu0 %v3386
    %3951 = vmatprep.subr.bf16.mxu0 %v3380
    %3952 = vmatpush2.bf16.msra.mxu0 %v3379
    %3953 = vmatprep.subr.bf16.mxu0 %v3373
    %3954 = vmatpush2.bf16.msra.mxu0 %v3372
    %3955 = vmatprep.subr.bf16.mxu0 %v3366
    %3956 = vmatpush2.bf16.msra.mxu0 %v3365
    %3957 = vmatprep.mubr.bf16.mxu0 %v2305
    %3958 = vmatmul.mubr.bf16.gmra.mxu0 %v2304
    %v3959 = vpop.f32.mrf.mxu0
    %v3960 = vadd.f32 %v2585, %v3959
    %v3961 = vpop.f32.mrf.mxu0
    %v3962 = vadd.f32 %v2589, %v3961
    %v3963 = vpop.f32.mrf.mxu0
    %v3964 = vadd.f32 %v2585, %v3963
    %v3965 = vpop.f32.mrf.mxu0
    %v3966 = vadd.f32 %v2589, %v3965
    %3967 = vdwg.mxu0
    %3968 = vmatprep.subr.bf16.mxu0 %v3471
    %3969 = vmatpush1.bf16.msra.mxu0 %v3470
    %3970 = vmatprep.subr.bf16.mxu0 %v3464
    %3971 = vmatpush1.bf16.msra.mxu0 %v3463
    %3972 = vmatprep.subr.bf16.mxu0 %v3457
    %3973 = vmatpush1.bf16.msra.mxu0 %v3456
    %3974 = vmatprep.subr.bf16.mxu0 %v3450
    %3975 = vmatpush1.bf16.msra.mxu0 %v3449
    %3976 = vmatprep.subr.bf16.mxu0 %v3443
    %3977 = vmatpush1.bf16.msra.mxu0 %v3442
    %3978 = vmatprep.subr.bf16.mxu0 %v3436
    %3979 = vmatpush1.bf16.msra.mxu0 %v3435
    %3980 = vmatprep.subr.bf16.mxu0 %v3429
    %3981 = vmatpush1.bf16.msra.mxu0 %v3428
    %3982 = vmatprep.subr.bf16.mxu0 %v3422
    %3983 = vmatpush1.bf16.msra.mxu0 %v3421
    %3984 = vmatprep.subr.bf16.mxu0 %v3527
    %3985 = vmatpush2.bf16.msra.mxu0 %v3526
    %3986 = vmatprep.subr.bf16.mxu0 %v3520
    %3987 = vmatpush2.bf16.msra.mxu0 %v3519
    %3988 = vmatprep.subr.bf16.mxu0 %v3513
    %3989 = vmatpush2.bf16.msra.mxu0 %v3512
    %3990 = vmatprep.subr.bf16.mxu0 %v3506
    %3991 = vmatpush2.bf16.msra.mxu0 %v3505
    %3992 = vmatprep.subr.bf16.mxu0 %v3499
    %3993 = vmatpush2.bf16.msra.mxu0 %v3498
    %3994 = vmatprep.subr.bf16.mxu0 %v3492
    %3995 = vmatpush2.bf16.msra.mxu0 %v3491
    %3996 = vmatprep.subr.bf16.mxu0 %v3485
    %3997 = vmatpush2.bf16.msra.mxu0 %v3484
    %3998 = vmatprep.subr.bf16.mxu0 %v3478
    %3999 = vmatpush2.bf16.msra.mxu0 %v3477
    %4000 = vmatprep.mubr.bf16.mxu0 %v2307
    %4001 = vmatmul.mubr.bf16.gmra.mxu0 %v2306
    %v4002 = vpop.f32.mrf.mxu0
    %v4003 = vadd.f32 %v3960, %v4002
    %v4004 = vpop.f32.mrf.mxu0
    %v4005 = vadd.f32 %v3962, %v4004
    %v4006 = vpop.f32.mrf.mxu0
    %v4007 = vadd.f32 %v3964, %v4006
    %v4008 = vpop.f32.mrf.mxu0
    %v4009 = vadd.f32 %v3966, %v4008
    %4010 = vdwg.mxu0
    %4011 = vmatprep.subr.bf16.mxu0 0
    %4012 = vmatpush1.bf16.msra.mxu0 %v3360
    %4013 = vmatprep.subr.bf16.mxu0 0
    %4014 = vmatpush1.bf16.msra.mxu0 %v3353
    %4015 = vmatprep.subr.bf16.mxu0 0
    %4016 = vmatpush1.bf16.msra.mxu0 %v3346
    %4017 = vmatprep.subr.bf16.mxu0 0
    %4018 = vmatpush1.bf16.msra.mxu0 %v3339
    %4019 = vmatprep.subr.bf16.mxu0 0
    %4020 = vmatpush1.bf16.msra.mxu0 %v3332
    %4021 = vmatprep.subr.bf16.mxu0 0
    %4022 = vmatpush1.bf16.msra.mxu0 %v3325
    %4023 = vmatprep.subr.bf16.mxu0 0
    %4024 = vmatpush1.bf16.msra.mxu0 %v3318
    %4025 = vmatprep.subr.bf16.mxu0 0
    %4026 = vmatpush1.bf16.msra.mxu0 %v3311
    %4027 = vmatprep.subr.bf16.mxu0 0
    %4028 = vmatpush2.bf16.msra.mxu0 %v3416
    %4029 = vmatprep.subr.bf16.mxu0 0
    %4030 = vmatpush2.bf16.msra.mxu0 %v3409
    %4031 = vmatprep.subr.bf16.mxu0 0
    %4032 = vmatpush2.bf16.msra.mxu0 %v3402
    %4033 = vmatprep.subr.bf16.mxu0 0
    %4034 = vmatpush2.bf16.msra.mxu0 %v3395
    %4035 = vmatprep.subr.bf16.mxu0 0
    %4036 = vmatpush2.bf16.msra.mxu0 %v3388
    %4037 = vmatprep.subr.bf16.mxu0 0
    %4038 = vmatpush2.bf16.msra.mxu0 %v3381
    %4039 = vmatprep.subr.bf16.mxu0 0
    %4040 = vmatpush2.bf16.msra.mxu0 %v3374
    %4041 = vmatprep.subr.bf16.mxu0 0
    %4042 = vmatpush2.bf16.msra.mxu0 %v3367
    %4043 = vmatprep.mubr.bf16.mxu0 %v2305
    %4044 = vmatmul.mubr.bf16.gmra.mxu0 %v2304
    %v4045 = vpop.f32.mrf.mxu0
    %v4046 = vadd.f32 %v2593, %v4045
    %v4047 = vpop.f32.mrf.mxu0
    %v4048 = vpop.f32.mrf.mxu0
    %v4049 = vadd.f32 %v2593, %v4048
    %v4050 = vpop.f32.mrf.mxu0
    %4051 = vdwg.mxu0
    %4052 = vmatprep.subr.bf16.mxu0 0
    %4053 = vmatpush1.bf16.msra.mxu0 %v3472
    %4054 = vmatprep.subr.bf16.mxu0 0
    %4055 = vmatpush1.bf16.msra.mxu0 %v3465
    %4056 = vmatprep.subr.bf16.mxu0 0
    %4057 = vmatpush1.bf16.msra.mxu0 %v3458
    %4058 = vmatprep.subr.bf16.mxu0 0
    %4059 = vmatpush1.bf16.msra.mxu0 %v3451
    %4060 = vmatprep.subr.bf16.mxu0 0
    %4061 = vmatpush1.bf16.msra.mxu0 %v3444
    %4062 = vmatprep.subr.bf16.mxu0 0
    %4063 = vmatpush1.bf16.msra.mxu0 %v3437
    %4064 = vmatprep.subr.bf16.mxu0 0
    %4065 = vmatpush1.bf16.msra.mxu0 %v3430
    %4066 = vmatprep.subr.bf16.mxu0 0
    %4067 = vmatpush1.bf16.msra.mxu0 %v3423
    %4068 = vmatprep.subr.bf16.mxu0 0
    %4069 = vmatpush2.bf16.msra.mxu0 %v3528
    %4070 = vmatprep.subr.bf16.mxu0 0
    %4071 = vmatpush2.bf16.msra.mxu0 %v3521
    %4072 = vmatprep.subr.bf16.mxu0 0
    %4073 = vmatpush2.bf16.msra.mxu0 %v3514
    %4074 = vmatprep.subr.bf16.mxu0 0
    %4075 = vmatpush2.bf16.msra.mxu0 %v3507
    %4076 = vmatprep.subr.bf16.mxu0 0
    %4077 = vmatpush2.bf16.msra.mxu0 %v3500
    %4078 = vmatprep.subr.bf16.mxu0 0
    %4079 = vmatpush2.bf16.msra.mxu0 %v3493
    %4080 = vmatprep.subr.bf16.mxu0 0
    %4081 = vmatpush2.bf16.msra.mxu0 %v3486
    %4082 = vmatprep.subr.bf16.mxu0 0
    %4083 = vmatpush2.bf16.msra.mxu0 %v3479
    %4084 = vmatprep.mubr.bf16.mxu0 %v2307
    %4085 = vmatmul.mubr.bf16.gmra.mxu0 %v2306
    %v4086 = vpop.f32.mrf.mxu0
    %v4087 = vadd.f32 %v4046, %v4086
    %v4088 = vpop.f32.mrf.mxu0
    %v4089 = vpop.f32.mrf.mxu0
    %v4090 = vadd.f32 %v4049, %v4089
    %v4091 = vpop.f32.mrf.mxu0
    %4092 = vdwg.mxu0
    %v4093 = vxor.u32 %v3831, 2147483648
    %v4094 = vxor.u32 %v3833, 2147483648
    %v4095 = vxor.u32 %v3917, 2147483648
    %v4096 = vxor.u32 %v3919, 2147483648
    %v4097 = vxor.u32 %v4003, 2147483648
    %v4098 = vxor.u32 %v4005, 2147483648
    %v4099 = vxor.u32 %v4087, 2147483648
    %v4100 = vxor.u32 %v3835, 2147483648
    %v4101 = vxor.u32 %v3837, 2147483648
    %v4102 = vxor.u32 %v3921, 2147483648
    %v4103 = vxor.u32 %v3923, 2147483648
    %v4104 = vxor.u32 %v4007, 2147483648
    %v4105 = vxor.u32 %v4009, 2147483648
    %v4106 = vxor.u32 %v4090, 2147483648
    %v4107 = vmul.f32 %v4093, 1.442695
    %v4108 = vpow.pop %v4107
    %v4109 = vmul.f32 %v4094, 1.442695
    %v4110 = vpow.pop %v4109
    %v4111 = vmul.f32 %v4095, 1.442695
    %v4112 = vpow.pop %v4111
    %v4113 = vmul.f32 %v4096, 1.442695
    %v4114 = vpow.pop %v4113
    %v4115 = vmul.f32 %v4097, 1.442695
    %v4116 = vpow.pop %v4115
    %v4117 = vmul.f32 %v4098, 1.442695
    %v4118 = vpow.pop %v4117
    %v4119 = vmul.f32 %v4099, 1.442695
    %v4120 = vpow.pop %v4119
    %v4121 = vmul.f32 %v4100, 1.442695
    %v4122 = vpow.pop %v4121
    %v4123 = vmul.f32 %v4101, 1.442695
    %v4124 = vpow.pop %v4123
    %v4125 = vmul.f32 %v4102, 1.442695
    %v4126 = vpow.pop %v4125
    %v4127 = vmul.f32 %v4103, 1.442695
    %v4128 = vpow.pop %v4127
    %v4129 = vmul.f32 %v4104, 1.442695
    %v4130 = vpow.pop %v4129
    %v4131 = vmul.f32 %v4105, 1.442695
    %v4132 = vpow.pop %v4131
    %v4133 = vmul.f32 %v4106, 1.442695
    %v4134 = vpow.pop %v4133
    %v4135 = vadd.f32 %v4108, 1.0
    %v4136 = vadd.f32 %v4110, 1.0
    %v4137 = vadd.f32 %v4112, 1.0
    %v4138 = vadd.f32 %v4114, 1.0
    %v4139 = vadd.f32 %v4116, 1.0
    %v4140 = vadd.f32 %v4118, 1.0
    %v4141 = vadd.f32 %v4120, 1.0
    %v4142 = vadd.f32 %v4122, 1.0
    %v4143 = vadd.f32 %v4124, 1.0
    %v4144 = vadd.f32 %v4126, 1.0
    %v4145 = vadd.f32 %v4128, 1.0
    %v4146 = vadd.f32 %v4130, 1.0
    %v4147 = vadd.f32 %v4132, 1.0
    %v4148 = vadd.f32 %v4134, 1.0
    %v4149 = vrcp.pop %v4135
    %v4150 = vmul.f32 1.0, %v4149
    %v4151 = vrcp.pop %v4136
    %v4152 = vmul.f32 1.0, %v4151
    %v4153 = vrcp.pop %v4137
    %v4154 = vmul.f32 1.0, %v4153
    %v4155 = vrcp.pop %v4138
    %v4156 = vmul.f32 1.0, %v4155
    %v4157 = vrcp.pop %v4139
    %v4158 = vmul.f32 1.0, %v4157
    %v4159 = vrcp.pop %v4140
    %v4160 = vmul.f32 1.0, %v4159
    %v4161 = vrcp.pop %v4141
    %v4162 = vmul.f32 1.0, %v4161
    %v4163 = vrcp.pop %v4142
    %v4164 = vmul.f32 1.0, %v4163
    %v4165 = vrcp.pop %v4143
    %v4166 = vmul.f32 1.0, %v4165
    %v4167 = vrcp.pop %v4144
    %v4168 = vmul.f32 1.0, %v4167
    %v4169 = vrcp.pop %v4145
    %v4170 = vmul.f32 1.0, %v4169
    %v4171 = vrcp.pop %v4146
    %v4172 = vmul.f32 1.0, %v4171
    %v4173 = vrcp.pop %v4147
    %v4174 = vmul.f32 1.0, %v4173
    %v4175 = vrcp.pop %v4148
    %v4176 = vmul.f32 1.0, %v4175
    %v4177 = vpack.c.bf16 %v4164, %v4150
    %v4178 = vpack.c.bf16 %v4166, %v4152
    %v4179 = vpack.c.bf16 %v4168, %v4154
    %v4180 = vpack.c.bf16 %v4170, %v4156
    %v4181 = vpack.c.bf16 %v4172, %v4158
    %v4182 = vpack.c.bf16 %v4174, %v4160
    %v4183 = vpack.c.bf16 %v4176, %v4162
    %v4191 = vcombine.low %v4177, %v4178
    %v4192 = vcombine.high %v4177, %v4178
    %v4193 = vcombine.low %v4179, %v4180
    %v4194 = vcombine.high %v4179, %v4180
    %v4195 = vcombine.low %v4181, %v4182
    %v4196 = vcombine.high %v4181, %v4182
    %v4197 = vcombine.high %v4183, %v4183
    %v4199 = vunpack.c.l.s4 1966171168
    %v4200 = vunpack.c.0.s8 %v4199
    %v4201 = vlaneseq
    %v4202 = vshrl.u32 %v4201, 7
    %v4203 = vsub.s32 %v4200, %v4202
    %v4204 = vrot.slane %v4191, %v4203
    %v4206 = vunpack.c.l.s4 1966171168
    %v4207 = vunpack.c.0.s8 %v4206
    %v4208 = vlaneseq
    %v4209 = vshrl.u32 %v4208, 7
    %v4210 = vsub.s32 %v4207, %v4209
    %v4211 = vrot.slane %v4192, %v4210
    %v4213 = vunpack.c.l.s4 1966171168
    %v4214 = vunpack.c.0.s8 %v4213
    %v4215 = vlaneseq
    %v4216 = vshrl.u32 %v4215, 7
    %v4217 = vsub.s32 %v4214, %v4216
    %v4218 = vrot.slane %v4193, %v4217
    %v4220 = vunpack.c.l.s4 1966171168
    %v4221 = vunpack.c.0.s8 %v4220
    %v4222 = vlaneseq
    %v4223 = vshrl.u32 %v4222, 7
    %v4224 = vsub.s32 %v4221, %v4223
    %v4225 = vrot.slane %v4194, %v4224
    %v4227 = vunpack.c.l.s4 1966171168
    %v4228 = vunpack.c.0.s8 %v4227
    %v4229 = vlaneseq
    %v4230 = vshrl.u32 %v4229, 7
    %v4231 = vsub.s32 %v4228, %v4230
    %v4232 = vrot.slane %v4195, %v4231
    %v4234 = vunpack.c.l.s4 1966171168
    %v4235 = vunpack.c.0.s8 %v4234
    %v4236 = vlaneseq
    %v4237 = vshrl.u32 %v4236, 7
    %v4238 = vsub.s32 %v4235, %v4237
    %v4239 = vrot.slane %v4196, %v4238
    %v4241 = vunpack.c.l.s4 1966171168
    %v4242 = vunpack.c.0.s8 %v4241
    %v4243 = vlaneseq
    %v4244 = vshrl.u32 %v4243, 7
    %v4245 = vsub.s32 %v4242, %v4244
    %v4246 = vrot.slane %v4183, %v4245
    %v4248 = vunpack.c.l.s4 1966171168
    %v4249 = vunpack.c.0.s8 %v4248
    %v4250 = vlaneseq
    %v4251 = vshrl.u32 %v4250, 7
    %v4252 = vsub.s32 %v4249, %v4251
    %v4253 = vrot.slane %v4197, %v4252
    %v4254 = vcombine.low %v4204, %v4218
    %v4255 = vcombine.high %v4204, %v4218
    %v4256 = vcombine.low %v4211, %v4225
    %v4257 = vcombine.high %v4211, %v4225
    %v4258 = vcombine.low %v4232, %v4246
    %v4259 = vcombine.high %v4232, %v4246
    %v4260 = vcombine.low %v4239, %v4253
    %v4261 = vcombine.high %v4239, %v4253
    %v4263 = vunpack.c.l.s4 1966171168
    %v4264 = vunpack.c.0.s8 %v4263
    %v4265 = vlaneseq
    %v4266 = vshrl.u32 %v4265, 7
    %v4267 = vsub.s32 %v4264, %v4266
    %v4268 = vrot.slane %v4254, %v4267
    %v4270 = vunpack.c.l.s4 1966171168
    %v4271 = vunpack.c.0.s8 %v4270
    %v4272 = vlaneseq
    %v4273 = vshrl.u32 %v4272, 7
    %v4274 = vsub.s32 %v4271, %v4273
    %v4275 = vrot.slane %v4256, %v4274
    %v4277 = vunpack.c.l.s4 1966171168
    %v4278 = vunpack.c.0.s8 %v4277
    %v4279 = vlaneseq
    %v4280 = vshrl.u32 %v4279, 7
    %v4281 = vsub.s32 %v4278, %v4280
    %v4282 = vrot.slane %v4255, %v4281
    %v4284 = vunpack.c.l.s4 1966171168
    %v4285 = vunpack.c.0.s8 %v4284
    %v4286 = vlaneseq
    %v4287 = vshrl.u32 %v4286, 7
    %v4288 = vsub.s32 %v4285, %v4287
    %v4289 = vrot.slane %v4257, %v4288
    %v4291 = vunpack.c.l.s4 1966171168
    %v4292 = vunpack.c.0.s8 %v4291
    %v4293 = vlaneseq
    %v4294 = vshrl.u32 %v4293, 7
    %v4295 = vsub.s32 %v4292, %v4294
    %v4296 = vrot.slane %v4258, %v4295
    %v4298 = vunpack.c.l.s4 1966171168
    %v4299 = vunpack.c.0.s8 %v4298
    %v4300 = vlaneseq
    %v4301 = vshrl.u32 %v4300, 7
    %v4302 = vsub.s32 %v4299, %v4301
    %v4303 = vrot.slane %v4260, %v4302
    %v4305 = vunpack.c.l.s4 1966171168
    %v4306 = vunpack.c.0.s8 %v4305
    %v4307 = vlaneseq
    %v4308 = vshrl.u32 %v4307, 7
    %v4309 = vsub.s32 %v4306, %v4308
    %v4310 = vrot.slane %v4259, %v4309
    %v4312 = vunpack.c.l.s4 1966171168
    %v4313 = vunpack.c.0.s8 %v4312
    %v4314 = vlaneseq
    %v4315 = vshrl.u32 %v4314, 7
    %v4316 = vsub.s32 %v4313, %v4315
    %v4317 = vrot.slane %v4261, %v4316
    %v4318 = vcombine.low %v4268, %v4296
    %v4319 = vcombine.high %v4268, %v4296
    %v4320 = vcombine.low %v4275, %v4303
    %v4321 = vcombine.high %v4275, %v4303
    %v4322 = vcombine.low %v4282, %v4310
    %v4323 = vcombine.high %v4282, %v4310
    %v4324 = vcombine.low %v4289, %v4317
    %v4325 = vcombine.high %v4289, %v4317
    %vm4334 = vcmask 1040384
    %vm4335 = vcmask 1041409
    %vm4336 = vmor %vm4335, %vm4334
    %vm4337 = vcmask 1042434
    %vm4338 = vmor %vm4337, %vm4336
    %vm4339 = vcmask 1043459
    %vm4340 = vmor %vm4339, %vm4338
    %vm4341 = vcmask 1044484
    %vm4342 = vmor %vm4341, %vm4340
    %vm4343 = vcmask 1045509
    %vm4344 = vmor %vm4343, %vm4342
    %vm4345 = vcmask 129030
    %vm4346 = vmor %vm4345, %vm4344
    %4347 = vst.msk [vmem:[#allocation2] sm:$0x7f] %vm4346, %v4318
    %4348 = vst.msk [vmem:[#allocation2 + $0x7] sm:$0x7f] %vm4346, %v4322
    %4349 = vst.msk [vmem:[#allocation2 + $0xe] sm:$0x7f] %vm4346, %v4319
    %4350 = vst.msk [vmem:[#allocation2 + $0x15] sm:$0x7f] %vm4346, %v4323
    %4351 = vst.msk [vmem:[#allocation2 + $0x1c] sm:$0x7f] %vm4346, %v4320
    %4352 = vst.msk [vmem:[#allocation2 + $0x23] sm:$0x7f] %vm4346, %v4324
    %4353 = vst.msk [vmem:[#allocation2 + $0x2a] sm:$0x7f] %vm4346, %v4321
    %4354 = vst.msk [vmem:[#allocation2 + $0x31] sm:$0x7f] %vm4346, %v4325
    // Predicated region
    $region42: #{vae_forward.1} parent=1 // pred_check
      _
    $region43: #{vae_forward.1} parent=1 // pred_check_branch
      %4356 = sbr.rel (0) target = $region45
    $region44: #{vae_forward.1} parent=1 // pred_region
      %s4358 = ssub.s32 896, 112
      %4359 = vsyncadd [#allocation3], %s4358
      %s4360 = sshll.u32 [#allocation2], 4
      %s4361 = int_to_ptr.vmem [resolvable:$true] %s4360
      %4366 = dma.vmem_to_hbm [thread:$0]  %s4361, 112, %s10, [#allocation3], 112, 112, 7
    $region45: #{vae_forward.1} parent=1 // pred_fallthru
      _
    // Predicated region
    $region46: #{vae_forward.1} parent=1 // pred_check
      _
    $region47: #{vae_forward.1} parent=1 // pred_check_branch
      %4368 = sbr.rel (0) target = $region49
    $region48: #{vae_forward.1} parent=1 // pred_region
      // Predicated region
      $region50: #{vae_forward.1} parent=48 // pred_check
        _
      $region51: #{vae_forward.1} parent=48 // pred_check_branch
        %4370 = sbr.rel (0) target = $region53
      $region52: #{vae_forward.1} parent=48 // pred_region
        // Predicated region
        $region54: #{vae_forward.1} parent=52 // pred_check
          _
        $region55: #{vae_forward.1} parent=52 // pred_check_branch
          %4372 = sbr.rel target = $region57
        $region56: #{vae_forward.1} parent=52 // pred_region
          // Predicated region
          $region69: #{vae_forward.1} parent=56 // pred_check
            _
          $region70: #{vae_forward.1} parent=56 // pred_check_branch
            %4388 = sbr.rel (0) target = $region72
          $region71: #{vae_forward.1} parent=56 // pred_region
            %s4390 = ssub.s32 4, 1
            loop: start=0, step=1, limit=1
            $region73: #{vae_forward.1} parent=71 // loop_pre_header
              _
            $region74: #{vae_forward.1} parent=71 // loop_header
              %s4392 = sphi 0, %s4396
              %p4393 = scmp.ge.s32.totalorder %s4392, 1
              %s4397 = sphi [#allocation4], [#allocation4]
              %s4398 = sphi %s11, %s11
            $region75: #{vae_forward.1} parent=71 // loop_header_branch
              %4395 = sbr.rel (%p4393) target = $region79
            $region76: #{vae_forward.1} parent=71 // loop_body
              %v4399 = vld [vmem:[%s4397] sm:%s4390]
              %4400 = vst [vmem:[%s4398] sm:%s4390] %v4399
            $region77: #{vae_forward.1} parent=71 // loop_footer
              %s4396 = sadd.s32 1, %s4392
            $region78: #{vae_forward.1} parent=71 // loop_footer_branch
              %4391 = sbr.rel target = $region74
            $region79: #{vae_forward.1} parent=71 // loop_exit
              _
          $region72: #{vae_forward.1} parent=56 // pred_fallthru
            _
        $region57: #{vae_forward.1} parent=52 // pred_fallthru
          _
        // Predicated region
        $region58: #{vae_forward.1} parent=52 // pred_check
          _
        $region59: #{vae_forward.1} parent=52 // pred_check_branch
          %4374 = sbr.rel (0) target = $region61
        $region60: #{vae_forward.1} parent=52 // pred_region
          %s4376 = ssub.s32 4, 1
          loop: start=0, step=1, limit=1
          $region62: #{vae_forward.1} parent=60 // loop_pre_header
            _
          $region63: #{vae_forward.1} parent=60 // loop_header
            %s4378 = sphi 0, %s4382
            %p4379 = scmp.ge.s32.totalorder %s4378, 1
            %s4383 = sphi [#allocation4], [#allocation4]
            %s4384 = sphi %s11, %s11
          $region64: #{vae_forward.1} parent=60 // loop_header_branch
            %4381 = sbr.rel (%p4379) target = $region68
          $region65: #{vae_forward.1} parent=60 // loop_body
            %v4385 = vld [vmem:[%s4383] sm:%s4376]
            %4386 = vst [vmem:[%s4384] sm:%s4376] %v4385
          $region66: #{vae_forward.1} parent=60 // loop_footer
            %s4382 = sadd.s32 1, %s4378
          $region67: #{vae_forward.1} parent=60 // loop_footer_branch
            %4377 = sbr.rel target = $region63
          $region68: #{vae_forward.1} parent=60 // loop_exit
            _
        $region61: #{vae_forward.1} parent=52 // pred_fallthru
          _
      $region53: #{vae_forward.1} parent=48 // pred_fallthru
        _
      %4401 = vnop
    $region49: #{vae_forward.1} parent=1 // pred_fallthru
      _
    // Predicated region
    $region80: #{vae_forward.1} parent=1 // pred_check
      _
    $region81: #{vae_forward.1} parent=1 // pred_check_branch
      %4403 = sbr.rel (0) target = $region83
    $region82: #{vae_forward.1} parent=1 // pred_region
      %4404 = dma.done [#allocation3], 896
    $region83: #{vae_forward.1} parent=1 // pred_fallthru
      _
    // Predicated region
    $region84: #{vae_forward.1} parent=1 // pred_check
      _
    $region85: #{vae_forward.1} parent=1 // pred_check_branch
      %4406 = sbr.rel (0) target = $region87
    $region86: #{vae_forward.1} parent=1 // pred_region
      _
    $region87: #{vae_forward.1} parent=1 // pred_fallthru
      _
    %4407 = vsyncpa [#allocation3], 1

</llo_original>
